<compile_context>
chip_gen: v5e
topology: v5e:2x2
jax: 0.10.0
libtpu: 0.0.40
codegen_flags: <defaults>
</compile_context>

<pallas_src>
import jax
import jax.numpy as jnp
from jax import lax
from jax.experimental import pallas as pl
from jax.experimental.pallas import tpu as pltpu


def _round_up(x, m):
    return (x + m - 1) // m * m


# Below this sequence length the recurrence is fully unrolled with static
# indices and no scratch; above it, a scratch slab + bounded-unroll fori_loop
# is used to avoid code-size / vreg-spill blowup.
_STATIC_T_LIMIT = 64


def birnn_kernel(tok_ref, mask_ref,
                 embp_ref, bx_ref,
                 whf_ref, whb_ref,
                 bhnf_ref, bhnb_ref,
                 woutf_ref, woutb_ref, bout_ref,
                 out_ref,
                 *scratch):
    TB = tok_ref.shape[0]                    # T * Bp rows, time-major
    Vp = embp_ref.shape[0]                   # padded vocab (K of the big GEMM)
    Hp = whf_ref.shape[0]                    # padded hidden (multiple of 128)
    H3 = 3 * Hp
    Bp = out_ref.shape[0]
    T = TB // Bp

    # ---- In-kernel embedding "gather" + input projection as ONE MXU GEMM -----
    # one_hot(tokens) @ (emb_table @ Wi_all)  ==  emb_table[tokens] @ Wi_all.
    # Lane layout of xp: [fwd_r | fwd_z | fwd_n | bwd_r | bwd_z | bwd_n],
    # each band Hp lanes wide.  r/z bands already include (b_i + b_h);
    # n bands include only b_i (b_hn must stay inside the r * (...) term).
    onehot = (lax.broadcasted_iota(jnp.int32, (TB, Vp), 1)
              == tok_ref[...]).astype(jnp.bfloat16)                  # (TB, Vp)
    xp = jnp.dot(onehot, embp_ref[...],
                 preferred_element_type=jnp.float32) + bx_ref[...]   # (TB, 6Hp) f32

    wh_f = whf_ref[...]                      # (Hp, 3Hp) bf16
    wh_b = whb_ref[...]                      # (Hp, 3Hp) bf16
    # Hoisted broadcasts (JAX does not CSE broadcast_in_dim inside loops).
    bhn_f = jnp.broadcast_to(bhnf_ref[...], (Bp, Hp))
    bhn_b = jnp.broadcast_to(bhnb_ref[...], (Bp, Hp))

    def gru_step(xg, h, wh, bhn):
        # xg: (Bp, 3Hp) precomputed input projection (+ folded biases); h f32.
        # bf16 operands -> MXU bf16 path; f32 accumulate; f32 gate math.
        hp_ = jnp.dot(h.astype(jnp.bfloat16), wh,
                      preferred_element_type=jnp.float32)            # (Bp, 3Hp)
        r = jax.nn.sigmoid(xg[:, 0:Hp] + hp_[:, 0:Hp])
        z = jax.nn.sigmoid(xg[:, Hp:2 * Hp] + hp_[:, Hp:2 * Hp])
        n = jnp.tanh(xg[:, 2 * Hp:H3] + r * (hp_[:, 2 * Hp:H3] + bhn))
        return (1.0 - z) * n + z * h

    h0 = jnp.zeros((Bp, Hp), jnp.float32)

    if not scratch:
        # ---- Resident path: fully unrolled, static-index recurrence ----------
        # No scratch round-trip: slice the xp value directly (static, lane- and
        # sublane-aligned slices).  Masks pre-broadcast ONCE before the loop.
        mask_full = jnp.broadcast_to(mask_ref[...], (TB, Hp))        # (TB, Hp) f32
        h_f = h0
        h_b = h0
        for t in range(T):                       # python loop, static indices
            tb = T - 1 - t
            x_f = xp[t * Bp:(t + 1) * Bp, 0:H3]
            x_b = xp[tb * Bp:(tb + 1) * Bp, H3:2 * H3]
            hf_new = gru_step(x_f, h_f, wh_f, bhn_f)
            hb_new = gru_step(x_b, h_b, wh_b, bhn_b)
            m_f = mask_full[t * Bp:(t + 1) * Bp]
            m_b = mask_full[tb * Bp:(tb + 1) * Bp]
            h_f = h_f + m_f * (hf_new - h_f)     # pack_padded masking (blend)
            h_b = h_b + m_b * (hb_new - h_b)
    else:
        # ---- Large-T fallback: scratch slab + bounded-unroll fori_loop -------
        xp_ref = scratch[0]
        xp_ref[...] = xp.reshape(T, Bp, 2 * H3)

        def body(t, carry):
            h_f, h_b = carry
            tb = T - 1 - t
            xg = xp_ref[t]                                    # (Bp, 6Hp)
            xgb = xp_ref[tb]
            sf = pl.multiple_of(t * Bp, 8)
            sb = pl.multiple_of(tb * Bp, 8)
            m_f = mask_ref[pl.ds(sf, Bp), :]                  # (Bp, 1)
            m_b = mask_ref[pl.ds(sb, Bp), :]
            hf_new = gru_step(xg[:, 0:H3], h_f, wh_f, bhn_f)
            hb_new = gru_step(xgb[:, H3:2 * H3], h_b, wh_b, bhn_b)
            h_f = h_f + m_f * (hf_new - h_f)
            h_b = h_b + m_b * (hb_new - h_b)
            return (h_f, h_b)

        h_f, h_b = lax.fori_loop(0, T, body, (h0, h0), unroll=min(T, 8))

    # Final linear on the statically split W_out halves (no lane-axis concat),
    # then a numerically stable log-softmax along dim=1.
    logits = (jnp.dot(h_f, woutf_ref[...], preferred_element_type=jnp.float32)
              + jnp.dot(h_b, woutb_ref[...], preferred_element_type=jnp.float32)
              + bout_ref[...])
    m = jnp.max(logits, axis=1, keepdims=True)
    lse = m + jnp.log(jnp.sum(jnp.exp(logits - m), axis=1, keepdims=True))
    out_ref[...] = logits - lse


def init_params(key, voc_size, edim, hdim, nclasses, padding_idx):
    H = hdim // 2
    ks = jax.random.split(key, 12)
    s = 0.1

    def nrm(k, shape):
        return (s * jax.random.normal(k, shape)).astype(jnp.float32)

    emb = nrm(ks[0], (voc_size, edim))
    emb = emb.at[padding_idx].set(0.0)        # nn.Embedding(padding_idx=...) zero row
    params = dict(
        embedding=emb,
        Wi_f=nrm(ks[1], (3, edim, H)), Wh_f=nrm(ks[2], (3, H, H)),
        bi_f=nrm(ks[3], (3, 1, H)),    bh_f=nrm(ks[4], (3, 1, H)),
        Wi_b=nrm(ks[5], (3, edim, H)), Wh_b=nrm(ks[6], (3, H, H)),
        bi_b=nrm(ks[7], (3, 1, H)),    bh_b=nrm(ks[8], (3, 1, H)),
        W_out=nrm(ks[9], (hdim, nclasses)),
        b_out=nrm(ks[10], (1, nclasses)),
    )
    return params


def pack_params(params):
    """Fuse gate weights into lane-aligned (128-padded) matrices, fold biases,
    fold the embedding table into the input projection, and cast big operands
    to bf16 (f32 accumulation happens inside the kernel)."""
    V, E = params["embedding"].shape
    H = params["Wh_f"].shape[-1]
    Hp = _round_up(H, 128)
    Vp = _round_up(V, 128)

    def pad_lanes(w):                        # (X, H) -> (X, Hp), zero columns
        return jnp.pad(w, ((0, 0), (0, Hp - H)))

    def pad_rows(w, rows):                   # (X, N) -> (rows, N), zero rows
        return jnp.pad(w, ((0, rows - w.shape[0]), (0, 0)))

    def cat_gates(w3):                       # (3, X, H) -> (X, 3*Hp), order [r,z,n]
        return jnp.concatenate([pad_lanes(w3[g]) for g in range(3)], axis=-1)

    Wi_all = jnp.concatenate([cat_gates(params["Wi_f"]),
                              cat_gates(params["Wi_b"])], axis=-1)   # (E, 6Hp) f32

    # Fold the embedding gather into the projection: emb_proj = emb @ Wi_all.
    emb_proj = jnp.dot(params["embedding"].astype(jnp.float32), Wi_all)   # (V, 6Hp)
    emb_proj = jnp.pad(emb_proj, ((0, Vp - V), (0, 0))).astype(jnp.bfloat16)

    Wh_f = pad_rows(cat_gates(params["Wh_f"]), Hp).astype(jnp.bfloat16)   # (Hp, 3Hp)
    Wh_b = pad_rows(cat_gates(params["Wh_b"]), Hp).astype(jnp.bfloat16)

    def bias_x(bi, bh):
        # r, z: fold b_i + b_h; n: only b_i (b_hn stays inside r*(...)).
        return jnp.concatenate([pad_lanes(bi[0] + bh[0]),
                                pad_lanes(bi[1] + bh[1]),
                                pad_lanes(bi[2])], axis=-1)          # (1, 3Hp)

    bx_all = jnp.concatenate([bias_x(params["bi_f"], params["bh_f"]),
                              bias_x(params["bi_b"], params["bh_b"])],
                             axis=-1).astype(jnp.float32)            # (1, 6Hp)

    return dict(
        emb_proj=emb_proj, bx_all=bx_all,
        Wh_f=Wh_f, Wh_b=Wh_b,
        bhn_f=pad_lanes(params["bh_f"][2]).astype(jnp.float32),      # (1, Hp)
        bhn_b=pad_lanes(params["bh_b"][2]).astype(jnp.float32),
        W_out_f=pad_rows(params["W_out"][:H], Hp).astype(jnp.float32),   # (Hp, C)
        W_out_b=pad_rows(params["W_out"][H:], Hp).astype(jnp.float32),
        b_out=params["b_out"].astype(jnp.float32),
    )


def birnn_forward(inputs, params, padding_idx):
    # inputs: (T, B) int32 tokens, time-major.
    T, B = inputs.shape
    packed = pack_params(params)
    C = packed["b_out"].shape[-1]
    Hp = packed["Wh_f"].shape[0]
    Vp = packed["emb_proj"].shape[0]

    # Pad batch to a multiple of 8 (f32 sublanes); padded rows get mask=0 so
    # they stay at the zero initial state and are sliced away at the end.
    Bp = _round_up(max(B, 1), 8)
    toks = inputs.astype(jnp.int32)
    lens = (T - jnp.sum(toks == padding_idx, axis=0)).astype(jnp.int32)   # (B,)
    if Bp != B:
        toks = jnp.pad(toks, ((0, 0), (0, Bp - B)), constant_values=padding_idx)
        lens = jnp.pad(lens, (0, Bp - B))

    # Precomputed per-(t, b) validity mask (hoists the compare out of the loop).
    t_idx = jnp.arange(T, dtype=jnp.int32)[:, None]                   # (T, 1)
    mask_col = (t_idx < lens[None, :]).astype(jnp.float32).reshape(T * Bp, 1)
    tok_col = toks.reshape(T * Bp, 1)                                 # (T*Bp, 1)

    vmem = pl.BlockSpec(memory_space=pltpu.MemorySpace.VMEM)
    args = (tok_col, mask_col,
            packed["emb_proj"], packed["bx_all"],
            packed["Wh_f"], packed["Wh_b"],
            packed["bhn_f"], packed["bhn_b"],
            packed["W_out_f"], packed["W_out_b"], packed["b_out"])

    static_path = T <= _STATIC_T_LIMIT
    scratch_shapes = [] if static_path else [pltpu.VMEM((T, Bp, 6 * Hp), jnp.float32)]

    # ---- Generation-aware VMEM budget (no grid => no double-buffered inputs) --
    def _nbytes(a):
        return int(a.size) * int(jnp.dtype(a.dtype).itemsize)

    resident = sum(_nbytes(a) for a in args) + Bp * C * 4
    temps = (4 * T * Bp * 6 * Hp          # xp projection result (f32)
             + 2 * T * Bp * Vp            # one-hot (bf16)
             + 4 * T * Bp * Hp)           # pre-broadcast mask (f32)
    if not static_path:
        temps += 4 * T * Bp * 6 * Hp      # xp scratch slab (fallback path)
    bytes_needed = resident + temps

    try:
        vmem_cap = int(pltpu.get_tpu_info().vmem_capacity_bytes)
    except Exception:
        vmem_cap = 128 * 1024 * 1024
    hard_cap = min(100 * 1024 * 1024, (vmem_cap * 7) // 8)   # ~56 MiB on 64 MiB v7x
    vmem_limit = int(min(hard_cap,
                         max(8 * 1024 * 1024, bytes_needed + (4 << 20))))

    out = pl.pallas_call(
        birnn_kernel,
        out_shape=jax.ShapeDtypeStruct((Bp, C), jnp.float32),
        in_specs=[vmem] * len(args),
        out_specs=vmem,
        scratch_shapes=scratch_shapes,
        compiler_params=pltpu.CompilerParams(vmem_limit_bytes=vmem_limit),
    )(*args)
    return out[:B]


if __name__ == "__main__":
    voc_size, edim, hdim, nclasses, padding_idx = 50, 16, 32, 5, 0
    T, B = 8, 4

    key = jax.random.PRNGKey(0)
    kp, kt = jax.random.split(key)
    params = init_params(kp, voc_size, edim, hdim, nclasses, padding_idx)

    # Padded token sequences with descending lengths (pack_padded_sequence with
    # enforce_sorted=True requires lengths sorted in decreasing order).
    lengths = jnp.array([8, 6, 5, 3], dtype=jnp.int32)                 # (B,)
    tokens = jax.random.randint(kt, (T, B), 1, voc_size, dtype=jnp.int32)
    t_idx = jnp.arange(T, dtype=jnp.int32)[:, None]                    # (T, 1)
    inputs = jnp.where(t_idx < lengths[None, :], tokens, padding_idx)  # (T, B)

    out = birnn_forward(inputs, params, padding_idx)
    jax.block_until_ready(out)
    assert out.shape == (B, nclasses)
    # log-softmax rows must exp-sum to 1
    assert bool(jnp.allclose(jnp.sum(jnp.exp(out), axis=1), 1.0, atol=1e-3))
    print("KERNEL_OK")
</pallas_src>

<mosaic_0001>
module attributes {stable_mosaic.version = 11 : i64} {
  func.func @birnn_kernel(%arg0: memref<64x1xi32, #tpu.memory_space<vmem>>, %arg1: memref<64x1xf32, #tpu.memory_space<vmem>>, %arg2: memref<128x768xbf16, #tpu.memory_space<vmem>>, %arg3: memref<1x768xf32, #tpu.memory_space<vmem>>, %arg4: memref<128x384xbf16, #tpu.memory_space<vmem>>, %arg5: memref<128x384xbf16, #tpu.memory_space<vmem>>, %arg6: memref<1x128xf32, #tpu.memory_space<vmem>>, %arg7: memref<1x128xf32, #tpu.memory_space<vmem>>, %arg8: memref<128x5xf32, #tpu.memory_space<vmem>>, %arg9: memref<128x5xf32, #tpu.memory_space<vmem>>, %arg10: memref<1x5xf32, #tpu.memory_space<vmem>>, %arg11: memref<8x5xf32, #tpu.memory_space<vmem>>) attributes {dimension_semantics = [], scalar_prefetch = 0 : i64, scratch_operands = 0 : i64, tpu.core_type = #tpu.core_type<tc>} {
    %0 = tpu.iota {dimensions = array<i32: 1>} : vector<64x128xi32>
    %c0 = arith.constant 0 : index
    %c0_0 = arith.constant 0 : index
    %1 = vector.load %arg0[%c0, %c0_0] : memref<64x1xi32, #tpu.memory_space<vmem>>, vector<64x1xi32>
    %2 = vector.broadcast %1 : vector<64x1xi32> to vector<64x128xi32>
    %3 = arith.cmpi eq, %0, %2 : vector<64x128xi32>
    %4 = arith.extui %3 : vector<64x128xi1> to vector<64x128xi32>
    %5 = arith.sitofp %4 : vector<64x128xi32> to vector<64x128xf32>
    %6 = arith.truncf %5 : vector<64x128xf32> to vector<64x128xbf16>
    %c0_1 = arith.constant 0 : index
    %c0_2 = arith.constant 0 : index
    %7 = vector.load %arg2[%c0_1, %c0_2] : memref<128x768xbf16, #tpu.memory_space<vmem>>, vector<128x768xbf16>
    %cst = arith.constant dense<0.000000e+00> : vector<64x768xf32>
    %8 = tpu.matmul %6, %7, %cst {dimension_numbers = #tpu.dot_dimension_numbers<[1], [0], [0], [1], [0, 0, 1, 1], [], []>} : vector<64x128xbf16>, vector<128x768xbf16>, vector<64x768xf32> -> vector<64x768xf32>
    %c0_3 = arith.constant 0 : index
    %c0_4 = arith.constant 0 : index
    %9 = vector.load %arg3[%c0_3, %c0_4] : memref<1x768xf32, #tpu.memory_space<vmem>>, vector<1x768xf32>
    %10 = vector.broadcast %9 : vector<1x768xf32> to vector<64x768xf32>
    %11 = arith.addf %8, %10 : vector<64x768xf32>
    %c0_5 = arith.constant 0 : index
    %c0_6 = arith.constant 0 : index
    %12 = vector.load %arg4[%c0_5, %c0_6] : memref<128x384xbf16, #tpu.memory_space<vmem>>, vector<128x384xbf16>
    %c0_7 = arith.constant 0 : index
    %c0_8 = arith.constant 0 : index
    %13 = vector.load %arg5[%c0_7, %c0_8] : memref<128x384xbf16, #tpu.memory_space<vmem>>, vector<128x384xbf16>
    %c0_9 = arith.constant 0 : index
    %c0_10 = arith.constant 0 : index
    %14 = vector.load %arg6[%c0_9, %c0_10] : memref<1x128xf32, #tpu.memory_space<vmem>>, vector<1x128xf32>
    %15 = vector.shape_cast %14 : vector<1x128xf32> to vector<1x128xf32>
    %16 = vector.broadcast %15 : vector<1x128xf32> to vector<8x128xf32>
    %c0_11 = arith.constant 0 : index
    %c0_12 = arith.constant 0 : index
    %17 = vector.load %arg7[%c0_11, %c0_12] : memref<1x128xf32, #tpu.memory_space<vmem>>, vector<1x128xf32>
    %18 = vector.shape_cast %17 : vector<1x128xf32> to vector<1x128xf32>
    %19 = vector.broadcast %18 : vector<1x128xf32> to vector<8x128xf32>
    %cst_13 = arith.constant 0.000000e+00 : f32
    %20 = vector.broadcast %cst_13 : f32 to vector<8x128xf32>
    %c0_14 = arith.constant 0 : index
    %c0_15 = arith.constant 0 : index
    %21 = vector.load %arg1[%c0_14, %c0_15] : memref<64x1xf32, #tpu.memory_space<vmem>>, vector<64x1xf32>
    %22 = vector.shape_cast %21 : vector<64x1xf32> to vector<64x1xf32>
    %23 = vector.broadcast %22 : vector<64x1xf32> to vector<64x128xf32>
    %24 = vector.extract_strided_slice %11 {offsets = [0, 0], sizes = [8, 384], strides = [1, 1]} : vector<64x768xf32> to vector<8x384xf32>
    %25 = vector.extract_strided_slice %11 {offsets = [56, 384], sizes = [8, 384], strides = [1, 1]} : vector<64x768xf32> to vector<8x384xf32>
    %26 = arith.truncf %20 : vector<8x128xf32> to vector<8x128xbf16>
    %cst_16 = arith.constant dense<0.000000e+00> : vector<8x384xf32>
    %27 = tpu.matmul %26, %12, %cst_16 {dimension_numbers = #tpu.dot_dimension_numbers<[1], [0], [0], [1], [0, 0, 1, 1], [], []>} : vector<8x128xbf16>, vector<128x384xbf16>, vector<8x384xf32> -> vector<8x384xf32>
    %28 = vector.extract_strided_slice %24 {offsets = [0, 0], sizes = [8, 128], strides = [1, 1]} : vector<8x384xf32> to vector<8x128xf32>
    %29 = vector.extract_strided_slice %27 {offsets = [0, 0], sizes = [8, 128], strides = [1, 1]} : vector<8x384xf32> to vector<8x128xf32>
    %30 = arith.addf %28, %29 : vector<8x128xf32>
    %31 = arith.negf %30 : vector<8x128xf32>
    %32 = math.exp %31 : vector<8x128xf32>
    %cst_17 = arith.constant 1.000000e+00 : f32
    %33 = vector.broadcast %cst_17 : f32 to vector<8x128xf32>
    %34 = arith.addf %33, %32 : vector<8x128xf32>
    %35 = arith.divf %33, %34 : vector<8x128xf32>
    %36 = vector.extract_strided_slice %24 {offsets = [0, 128], sizes = [8, 128], strides = [1, 1]} : vector<8x384xf32> to vector<8x128xf32>
    %37 = vector.extract_strided_slice %27 {offsets = [0, 128], sizes = [8, 128], strides = [1, 1]} : vector<8x384xf32> to vector<8x128xf32>
    %38 = arith.addf %36, %37 : vector<8x128xf32>
    %39 = arith.negf %38 : vector<8x128xf32>
    %40 = math.exp %39 : vector<8x128xf32>
    %cst_18 = arith.constant 1.000000e+00 : f32
    %41 = vector.broadcast %cst_18 : f32 to vector<8x128xf32>
    %42 = arith.addf %41, %40 : vector<8x128xf32>
    %43 = arith.divf %41, %42 : vector<8x128xf32>
    %44 = vector.extract_strided_slice %24 {offsets = [0, 256], sizes = [8, 128], strides = [1, 1]} : vector<8x384xf32> to vector<8x128xf32>
    %45 = vector.extract_strided_slice %27 {offsets = [0, 256], sizes = [8, 128], strides = [1, 1]} : vector<8x384xf32> to vector<8x128xf32>
    %46 = arith.addf %45, %16 : vector<8x128xf32>
    %47 = arith.mulf %35, %46 : vector<8x128xf32>
    %48 = arith.addf %44, %47 : vector<8x128xf32>
    %49 = math.tanh %48 : vector<8x128xf32>
    %cst_19 = arith.constant 1.000000e+00 : f32
    %50 = vector.broadcast %cst_19 : f32 to vector<8x128xf32>
    %51 = arith.subf %50, %43 : vector<8x128xf32>
    %52 = arith.mulf %51, %49 : vector<8x128xf32>
    %53 = arith.mulf %43, %20 : vector<8x128xf32>
    %54 = arith.addf %52, %53 : vector<8x128xf32>
    %55 = arith.truncf %20 : vector<8x128xf32> to vector<8x128xbf16>
    %cst_20 = arith.constant dense<0.000000e+00> : vector<8x384xf32>
    %56 = tpu.matmul %55, %13, %cst_20 {dimension_numbers = #tpu.dot_dimension_numbers<[1], [0], [0], [1], [0, 0, 1, 1], [], []>} : vector<8x128xbf16>, vector<128x384xbf16>, vector<8x384xf32> -> vector<8x384xf32>
    %57 = vector.extract_strided_slice %25 {offsets = [0, 0], sizes = [8, 128], strides = [1, 1]} : vector<8x384xf32> to vector<8x128xf32>
    %58 = vector.extract_strided_slice %56 {offsets = [0, 0], sizes = [8, 128], strides = [1, 1]} : vector<8x384xf32> to vector<8x128xf32>
    %59 = arith.addf %57, %58 : vector<8x128xf32>
    %60 = arith.negf %59 : vector<8x128xf32>
    %61 = math.exp %60 : vector<8x128xf32>
    %cst_21 = arith.constant 1.000000e+00 : f32
    %62 = vector.broadcast %cst_21 : f32 to vector<8x128xf32>
    %63 = arith.addf %62, %61 : vector<8x128xf32>
    %64 = arith.divf %62, %63 : vector<8x128xf32>
    %65 = vector.extract_strided_slice %25 {offsets = [0, 128], sizes = [8, 128], strides = [1, 1]} : vector<8x384xf32> to vector<8x128xf32>
    %66 = vector.extract_strided_slice %56 {offsets = [0, 128], sizes = [8, 128], strides = [1, 1]} : vector<8x384xf32> to vector<8x128xf32>
    %67 = arith.addf %65, %66 : vector<8x128xf32>
    %68 = arith.negf %67 : vector<8x128xf32>
    %69 = math.exp %68 : vector<8x128xf32>
    %cst_22 = arith.constant 1.000000e+00 : f32
    %70 = vector.broadcast %cst_22 : f32 to vector<8x128xf32>
    %71 = arith.addf %70, %69 : vector<8x128xf32>
    %72 = arith.divf %70, %71 : vector<8x128xf32>
    %73 = vector.extract_strided_slice %25 {offsets = [0, 256], sizes = [8, 128], strides = [1, 1]} : vector<8x384xf32> to vector<8x128xf32>
    %74 = vector.extract_strided_slice %56 {offsets = [0, 256], sizes = [8, 128], strides = [1, 1]} : vector<8x384xf32> to vector<8x128xf32>
    %75 = arith.addf %74, %19 : vector<8x128xf32>
    %76 = arith.mulf %64, %75 : vector<8x128xf32>
    %77 = arith.addf %73, %76 : vector<8x128xf32>
    %78 = math.tanh %77 : vector<8x128xf32>
    %cst_23 = arith.constant 1.000000e+00 : f32
    %79 = vector.broadcast %cst_23 : f32 to vector<8x128xf32>
    %80 = arith.subf %79, %72 : vector<8x128xf32>
    %81 = arith.mulf %80, %78 : vector<8x128xf32>
    %82 = arith.mulf %72, %20 : vector<8x128xf32>
    %83 = arith.addf %81, %82 : vector<8x128xf32>
    %84 = vector.extract_strided_slice %23 {offsets = [0, 0], sizes = [8, 128], strides = [1, 1]} : vector<64x128xf32> to vector<8x128xf32>
    %85 = vector.extract_strided_slice %23 {offsets = [56, 0], sizes = [8, 128], strides = [1, 1]} : vector<64x128xf32> to vector<8x128xf32>
    %86 = arith.subf %54, %20 : vector<8x128xf32>
    %87 = arith.mulf %84, %86 : vector<8x128xf32>
    %88 = arith.addf %20, %87 : vector<8x128xf32>
    %89 = arith.subf %83, %20 : vector<8x128xf32>
    %90 = arith.mulf %85, %89 : vector<8x128xf32>
    %91 = arith.addf %20, %90 : vector<8x128xf32>
    %92 = vector.extract_strided_slice %11 {offsets = [8, 0], sizes = [8, 384], strides = [1, 1]} : vector<64x768xf32> to vector<8x384xf32>
    %93 = vector.extract_strided_slice %11 {offsets = [48, 384], sizes = [8, 384], strides = [1, 1]} : vector<64x768xf32> to vector<8x384xf32>
    %94 = arith.truncf %88 : vector<8x128xf32> to vector<8x128xbf16>
    %cst_24 = arith.constant dense<0.000000e+00> : vector<8x384xf32>
    %95 = tpu.matmul %94, %12, %cst_24 {dimension_numbers = #tpu.dot_dimension_numbers<[1], [0], [0], [1], [0, 0, 1, 1], [], []>} : vector<8x128xbf16>, vector<128x384xbf16>, vector<8x384xf32> -> vector<8x384xf32>
    %96 = vector.extract_strided_slice %92 {offsets = [0, 0], sizes = [8, 128], strides = [1, 1]} : vector<8x384xf32> to vector<8x128xf32>
    %97 = vector.extract_strided_slice %95 {offsets = [0, 0], sizes = [8, 128], strides = [1, 1]} : vector<8x384xf32> to vector<8x128xf32>
    %98 = arith.addf %96, %97 : vector<8x128xf32>
    %99 = arith.negf %98 : vector<8x128xf32>
    %100 = math.exp %99 : vector<8x128xf32>
    %cst_25 = arith.constant 1.000000e+00 : f32
    %101 = vector.broadcast %cst_25 : f32 to vector<8x128xf32>
    %102 = arith.addf %101, %100 : vector<8x128xf32>
    %103 = arith.divf %101, %102 : vector<8x128xf32>
    %104 = vector.extract_strided_slice %92 {offsets = [0, 128], sizes = [8, 128], strides = [1, 1]} : vector<8x384xf32> to vector<8x128xf32>
    %105 = vector.extract_strided_slice %95 {offsets = [0, 128], sizes = [8, 128], strides = [1, 1]} : vector<8x384xf32> to vector<8x128xf32>
    %106 = arith.addf %104, %105 : vector<8x128xf32>
    %107 = arith.negf %106 : vector<8x128xf32>
    %108 = math.exp %107 : vector<8x128xf32>
    %cst_26 = arith.constant 1.000000e+00 : f32
    %109 = vector.broadcast %cst_26 : f32 to vector<8x128xf32>
    %110 = arith.addf %109, %108 : vector<8x128xf32>
    %111 = arith.divf %109, %110 : vector<8x128xf32>
    %112 = vector.extract_strided_slice %92 {offsets = [0, 256], sizes = [8, 128], strides = [1, 1]} : vector<8x384xf32> to vector<8x128xf32>
    %113 = vector.extract_strided_slice %95 {offsets = [0, 256], sizes = [8, 128], strides = [1, 1]} : vector<8x384xf32> to vector<8x128xf32>
    %114 = arith.addf %113, %16 : vector<8x128xf32>
    %115 = arith.mulf %103, %114 : vector<8x128xf32>
    %116 = arith.addf %112, %115 : vector<8x128xf32>
    %117 = math.tanh %116 : vector<8x128xf32>
    %cst_27 = arith.constant 1.000000e+00 : f32
    %118 = vector.broadcast %cst_27 : f32 to vector<8x128xf32>
    %119 = arith.subf %118, %111 : vector<8x128xf32>
    %120 = arith.mulf %119, %117 : vector<8x128xf32>
    %121 = arith.mulf %111, %88 : vector<8x128xf32>
    %122 = arith.addf %120, %121 : vector<8x128xf32>
    %123 = arith.truncf %91 : vector<8x128xf32> to vector<8x128xbf16>
    %cst_28 = arith.constant dense<0.000000e+00> : vector<8x384xf32>
    %124 = tpu.matmul %123, %13, %cst_28 {dimension_numbers = #tpu.dot_dimension_numbers<[1], [0], [0], [1], [0, 0, 1, 1], [], []>} : vector<8x128xbf16>, vector<128x384xbf16>, vector<8x384xf32> -> vector<8x384xf32>
    %125 = vector.extract_strided_slice %93 {offsets = [0, 0], sizes = [8, 128], strides = [1, 1]} : vector<8x384xf32> to vector<8x128xf32>
    %126 = vector.extract_strided_slice %124 {offsets = [0, 0], sizes = [8, 128], strides = [1, 1]} : vector<8x384xf32> to vector<8x128xf32>
    %127 = arith.addf %125, %126 : vector<8x128xf32>
    %128 = arith.negf %127 : vector<8x128xf32>
    %129 = math.exp %128 : vector<8x128xf32>
    %cst_29 = arith.constant 1.000000e+00 : f32
    %130 = vector.broadcast %cst_29 : f32 to vector<8x128xf32>
    %131 = arith.addf %130, %129 : vector<8x128xf32>
    %132 = arith.divf %130, %131 : vector<8x128xf32>
    %133 = vector.extract_strided_slice %93 {offsets = [0, 128], sizes = [8, 128], strides = [1, 1]} : vector<8x384xf32> to vector<8x128xf32>
    %134 = vector.extract_strided_slice %124 {offsets = [0, 128], sizes = [8, 128], strides = [1, 1]} : vector<8x384xf32> to vector<8x128xf32>
    %135 = arith.addf %133, %134 : vector<8x128xf32>
    %136 = arith.negf %135 : vector<8x128xf32>
    %137 = math.exp %136 : vector<8x128xf32>
    %cst_30 = arith.constant 1.000000e+00 : f32
    %138 = vector.broadcast %cst_30 : f32 to vector<8x128xf32>
    %139 = arith.addf %138, %137 : vector<8x128xf32>
    %140 = arith.divf %138, %139 : vector<8x128xf32>
    %141 = vector.extract_strided_slice %93 {offsets = [0, 256], sizes = [8, 128], strides = [1, 1]} : vector<8x384xf32> to vector<8x128xf32>
    %142 = vector.extract_strided_slice %124 {offsets = [0, 256], sizes = [8, 128], strides = [1, 1]} : vector<8x384xf32> to vector<8x128xf32>
    %143 = arith.addf %142, %19 : vector<8x128xf32>
    %144 = arith.mulf %132, %143 : vector<8x128xf32>
    %145 = arith.addf %141, %144 : vector<8x128xf32>
    %146 = math.tanh %145 : vector<8x128xf32>
    %cst_31 = arith.constant 1.000000e+00 : f32
    %147 = vector.broadcast %cst_31 : f32 to vector<8x128xf32>
    %148 = arith.subf %147, %140 : vector<8x128xf32>
    %149 = arith.mulf %148, %146 : vector<8x128xf32>
    %150 = arith.mulf %140, %91 : vector<8x128xf32>
    %151 = arith.addf %149, %150 : vector<8x128xf32>
    %152 = vector.extract_strided_slice %23 {offsets = [8, 0], sizes = [8, 128], strides = [1, 1]} : vector<64x128xf32> to vector<8x128xf32>
    %153 = vector.extract_strided_slice %23 {offsets = [48, 0], sizes = [8, 128], strides = [1, 1]} : vector<64x128xf32> to vector<8x128xf32>
    %154 = arith.subf %122, %88 : vector<8x128xf32>
    %155 = arith.mulf %152, %154 : vector<8x128xf32>
    %156 = arith.addf %88, %155 : vector<8x128xf32>
    %157 = arith.subf %151, %91 : vector<8x128xf32>
    %158 = arith.mulf %153, %157 : vector<8x128xf32>
    %159 = arith.addf %91, %158 : vector<8x128xf32>
    %160 = vector.extract_strided_slice %11 {offsets = [16, 0], sizes = [8, 384], strides = [1, 1]} : vector<64x768xf32> to vector<8x384xf32>
    %161 = vector.extract_strided_slice %11 {offsets = [40, 384], sizes = [8, 384], strides = [1, 1]} : vector<64x768xf32> to vector<8x384xf32>
    %162 = arith.truncf %156 : vector<8x128xf32> to vector<8x128xbf16>
    %cst_32 = arith.constant dense<0.000000e+00> : vector<8x384xf32>
    %163 = tpu.matmul %162, %12, %cst_32 {dimension_numbers = #tpu.dot_dimension_numbers<[1], [0], [0], [1], [0, 0, 1, 1], [], []>} : vector<8x128xbf16>, vector<128x384xbf16>, vector<8x384xf32> -> vector<8x384xf32>
    %164 = vector.extract_strided_slice %160 {offsets = [0, 0], sizes = [8, 128], strides = [1, 1]} : vector<8x384xf32> to vector<8x128xf32>
    %165 = vector.extract_strided_slice %163 {offsets = [0, 0], sizes = [8, 128], strides = [1, 1]} : vector<8x384xf32> to vector<8x128xf32>
    %166 = arith.addf %164, %165 : vector<8x128xf32>
    %167 = arith.negf %166 : vector<8x128xf32>
    %168 = math.exp %167 : vector<8x128xf32>
    %cst_33 = arith.constant 1.000000e+00 : f32
    %169 = vector.broadcast %cst_33 : f32 to vector<8x128xf32>
    %170 = arith.addf %169, %168 : vector<8x128xf32>
    %171 = arith.divf %169, %170 : vector<8x128xf32>
    %172 = vector.extract_strided_slice %160 {offsets = [0, 128], sizes = [8, 128], strides = [1, 1]} : vector<8x384xf32> to vector<8x128xf32>
    %173 = vector.extract_strided_slice %163 {offsets = [0, 128], sizes = [8, 128], strides = [1, 1]} : vector<8x384xf32> to vector<8x128xf32>
    %174 = arith.addf %172, %173 : vector<8x128xf32>
    %175 = arith.negf %174 : vector<8x128xf32>
    %176 = math.exp %175 : vector<8x128xf32>
    %cst_34 = arith.constant 1.000000e+00 : f32
    %177 = vector.broadcast %cst_34 : f32 to vector<8x128xf32>
    %178 = arith.addf %177, %176 : vector<8x128xf32>
    %179 = arith.divf %177, %178 : vector<8x128xf32>
    %180 = vector.extract_strided_slice %160 {offsets = [0, 256], sizes = [8, 128], strides = [1, 1]} : vector<8x384xf32> to vector<8x128xf32>
    %181 = vector.extract_strided_slice %163 {offsets = [0, 256], sizes = [8, 128], strides = [1, 1]} : vector<8x384xf32> to vector<8x128xf32>
    %182 = arith.addf %181, %16 : vector<8x128xf32>
    %183 = arith.mulf %171, %182 : vector<8x128xf32>
    %184 = arith.addf %180, %183 : vector<8x128xf32>
    %185 = math.tanh %184 : vector<8x128xf32>
    %cst_35 = arith.constant 1.000000e+00 : f32
    %186 = vector.broadcast %cst_35 : f32 to vector<8x128xf32>
    %187 = arith.subf %186, %179 : vector<8x128xf32>
    %188 = arith.mulf %187, %185 : vector<8x128xf32>
    %189 = arith.mulf %179, %156 : vector<8x128xf32>
    %190 = arith.addf %188, %189 : vector<8x128xf32>
    %191 = arith.truncf %159 : vector<8x128xf32> to vector<8x128xbf16>
    %cst_36 = arith.constant dense<0.000000e+00> : vector<8x384xf32>
    %192 = tpu.matmul %191, %13, %cst_36 {dimension_numbers = #tpu.dot_dimension_numbers<[1], [0], [0], [1], [0, 0, 1, 1], [], []>} : vector<8x128xbf16>, vector<128x384xbf16>, vector<8x384xf32> -> vector<8x384xf32>
    %193 = vector.extract_strided_slice %161 {offsets = [0, 0], sizes = [8, 128], strides = [1, 1]} : vector<8x384xf32> to vector<8x128xf32>
    %194 = vector.extract_strided_slice %192 {offsets = [0, 0], sizes = [8, 128], strides = [1, 1]} : vector<8x384xf32> to vector<8x128xf32>
    %195 = arith.addf %193, %194 : vector<8x128xf32>
    %196 = arith.negf %195 : vector<8x128xf32>
    %197 = math.exp %196 : vector<8x128xf32>
    %cst_37 = arith.constant 1.000000e+00 : f32
    %198 = vector.broadcast %cst_37 : f32 to vector<8x128xf32>
    %199 = arith.addf %198, %197 : vector<8x128xf32>
    %200 = arith.divf %198, %199 : vector<8x128xf32>
    %201 = vector.extract_strided_slice %161 {offsets = [0, 128], sizes = [8, 128], strides = [1, 1]} : vector<8x384xf32> to vector<8x128xf32>
    %202 = vector.extract_strided_slice %192 {offsets = [0, 128], sizes = [8, 128], strides = [1, 1]} : vector<8x384xf32> to vector<8x128xf32>
    %203 = arith.addf %201, %202 : vector<8x128xf32>
    %204 = arith.negf %203 : vector<8x128xf32>
    %205 = math.exp %204 : vector<8x128xf32>
    %cst_38 = arith.constant 1.000000e+00 : f32
    %206 = vector.broadcast %cst_38 : f32 to vector<8x128xf32>
    %207 = arith.addf %206, %205 : vector<8x128xf32>
    %208 = arith.divf %206, %207 : vector<8x128xf32>
    %209 = vector.extract_strided_slice %161 {offsets = [0, 256], sizes = [8, 128], strides = [1, 1]} : vector<8x384xf32> to vector<8x128xf32>
    %210 = vector.extract_strided_slice %192 {offsets = [0, 256], sizes = [8, 128], strides = [1, 1]} : vector<8x384xf32> to vector<8x128xf32>
    %211 = arith.addf %210, %19 : vector<8x128xf32>
    %212 = arith.mulf %200, %211 : vector<8x128xf32>
    %213 = arith.addf %209, %212 : vector<8x128xf32>
    %214 = math.tanh %213 : vector<8x128xf32>
    %cst_39 = arith.constant 1.000000e+00 : f32
    %215 = vector.broadcast %cst_39 : f32 to vector<8x128xf32>
    %216 = arith.subf %215, %208 : vector<8x128xf32>
    %217 = arith.mulf %216, %214 : vector<8x128xf32>
    %218 = arith.mulf %208, %159 : vector<8x128xf32>
    %219 = arith.addf %217, %218 : vector<8x128xf32>
    %220 = vector.extract_strided_slice %23 {offsets = [16, 0], sizes = [8, 128], strides = [1, 1]} : vector<64x128xf32> to vector<8x128xf32>
    %221 = vector.extract_strided_slice %23 {offsets = [40, 0], sizes = [8, 128], strides = [1, 1]} : vector<64x128xf32> to vector<8x128xf32>
    %222 = arith.subf %190, %156 : vector<8x128xf32>
    %223 = arith.mulf %220, %222 : vector<8x128xf32>
    %224 = arith.addf %156, %223 : vector<8x128xf32>
    %225 = arith.subf %219, %159 : vector<8x128xf32>
    %226 = arith.mulf %221, %225 : vector<8x128xf32>
    %227 = arith.addf %159, %226 : vector<8x128xf32>
    %228 = vector.extract_strided_slice %11 {offsets = [24, 0], sizes = [8, 384], strides = [1, 1]} : vector<64x768xf32> to vector<8x384xf32>
    %229 = vector.extract_strided_slice %11 {offsets = [32, 384], sizes = [8, 384], strides = [1, 1]} : vector<64x768xf32> to vector<8x384xf32>
    %230 = arith.truncf %224 : vector<8x128xf32> to vector<8x128xbf16>
    %cst_40 = arith.constant dense<0.000000e+00> : vector<8x384xf32>
    %231 = tpu.matmul %230, %12, %cst_40 {dimension_numbers = #tpu.dot_dimension_numbers<[1], [0], [0], [1], [0, 0, 1, 1], [], []>} : vector<8x128xbf16>, vector<128x384xbf16>, vector<8x384xf32> -> vector<8x384xf32>
    %232 = vector.extract_strided_slice %228 {offsets = [0, 0], sizes = [8, 128], strides = [1, 1]} : vector<8x384xf32> to vector<8x128xf32>
    %233 = vector.extract_strided_slice %231 {offsets = [0, 0], sizes = [8, 128], strides = [1, 1]} : vector<8x384xf32> to vector<8x128xf32>
    %234 = arith.addf %232, %233 : vector<8x128xf32>
    %235 = arith.negf %234 : vector<8x128xf32>
    %236 = math.exp %235 : vector<8x128xf32>
    %cst_41 = arith.constant 1.000000e+00 : f32
    %237 = vector.broadcast %cst_41 : f32 to vector<8x128xf32>
    %238 = arith.addf %237, %236 : vector<8x128xf32>
    %239 = arith.divf %237, %238 : vector<8x128xf32>
    %240 = vector.extract_strided_slice %228 {offsets = [0, 128], sizes = [8, 128], strides = [1, 1]} : vector<8x384xf32> to vector<8x128xf32>
    %241 = vector.extract_strided_slice %231 {offsets = [0, 128], sizes = [8, 128], strides = [1, 1]} : vector<8x384xf32> to vector<8x128xf32>
    %242 = arith.addf %240, %241 : vector<8x128xf32>
    %243 = arith.negf %242 : vector<8x128xf32>
    %244 = math.exp %243 : vector<8x128xf32>
    %cst_42 = arith.constant 1.000000e+00 : f32
    %245 = vector.broadcast %cst_42 : f32 to vector<8x128xf32>
    %246 = arith.addf %245, %244 : vector<8x128xf32>
    %247 = arith.divf %245, %246 : vector<8x128xf32>
    %248 = vector.extract_strided_slice %228 {offsets = [0, 256], sizes = [8, 128], strides = [1, 1]} : vector<8x384xf32> to vector<8x128xf32>
    %249 = vector.extract_strided_slice %231 {offsets = [0, 256], sizes = [8, 128], strides = [1, 1]} : vector<8x384xf32> to vector<8x128xf32>
    %250 = arith.addf %249, %16 : vector<8x128xf32>
    %251 = arith.mulf %239, %250 : vector<8x128xf32>
    %252 = arith.addf %248, %251 : vector<8x128xf32>
    %253 = math.tanh %252 : vector<8x128xf32>
    %cst_43 = arith.constant 1.000000e+00 : f32
    %254 = vector.broadcast %cst_43 : f32 to vector<8x128xf32>
    %255 = arith.subf %254, %247 : vector<8x128xf32>
    %256 = arith.mulf %255, %253 : vector<8x128xf32>
    %257 = arith.mulf %247, %224 : vector<8x128xf32>
    %258 = arith.addf %256, %257 : vector<8x128xf32>
    %259 = arith.truncf %227 : vector<8x128xf32> to vector<8x128xbf16>
    %cst_44 = arith.constant dense<0.000000e+00> : vector<8x384xf32>
    %260 = tpu.matmul %259, %13, %cst_44 {dimension_numbers = #tpu.dot_dimension_numbers<[1], [0], [0], [1], [0, 0, 1, 1], [], []>} : vector<8x128xbf16>, vector<128x384xbf16>, vector<8x384xf32> -> vector<8x384xf32>
    %261 = vector.extract_strided_slice %229 {offsets = [0, 0], sizes = [8, 128], strides = [1, 1]} : vector<8x384xf32> to vector<8x128xf32>
    %262 = vector.extract_strided_slice %260 {offsets = [0, 0], sizes = [8, 128], strides = [1, 1]} : vector<8x384xf32> to vector<8x128xf32>
    %263 = arith.addf %261, %262 : vector<8x128xf32>
    %264 = arith.negf %263 : vector<8x128xf32>
    %265 = math.exp %264 : vector<8x128xf32>
    %cst_45 = arith.constant 1.000000e+00 : f32
    %266 = vector.broadcast %cst_45 : f32 to vector<8x128xf32>
    %267 = arith.addf %266, %265 : vector<8x128xf32>
    %268 = arith.divf %266, %267 : vector<8x128xf32>
    %269 = vector.extract_strided_slice %229 {offsets = [0, 128], sizes = [8, 128], strides = [1, 1]} : vector<8x384xf32> to vector<8x128xf32>
    %270 = vector.extract_strided_slice %260 {offsets = [0, 128], sizes = [8, 128], strides = [1, 1]} : vector<8x384xf32> to vector<8x128xf32>
    %271 = arith.addf %269, %270 : vector<8x128xf32>
    %272 = arith.negf %271 : vector<8x128xf32>
    %273 = math.exp %272 : vector<8x128xf32>
    %cst_46 = arith.constant 1.000000e+00 : f32
    %274 = vector.broadcast %cst_46 : f32 to vector<8x128xf32>
    %275 = arith.addf %274, %273 : vector<8x128xf32>
    %276 = arith.divf %274, %275 : vector<8x128xf32>
    %277 = vector.extract_strided_slice %229 {offsets = [0, 256], sizes = [8, 128], strides = [1, 1]} : vector<8x384xf32> to vector<8x128xf32>
    %278 = vector.extract_strided_slice %260 {offsets = [0, 256], sizes = [8, 128], strides = [1, 1]} : vector<8x384xf32> to vector<8x128xf32>
    %279 = arith.addf %278, %19 : vector<8x128xf32>
    %280 = arith.mulf %268, %279 : vector<8x128xf32>
    %281 = arith.addf %277, %280 : vector<8x128xf32>
    %282 = math.tanh %281 : vector<8x128xf32>
    %cst_47 = arith.constant 1.000000e+00 : f32
    %283 = vector.broadcast %cst_47 : f32 to vector<8x128xf32>
    %284 = arith.subf %283, %276 : vector<8x128xf32>
    %285 = arith.mulf %284, %282 : vector<8x128xf32>
    %286 = arith.mulf %276, %227 : vector<8x128xf32>
    %287 = arith.addf %285, %286 : vector<8x128xf32>
    %288 = vector.extract_strided_slice %23 {offsets = [24, 0], sizes = [8, 128], strides = [1, 1]} : vector<64x128xf32> to vector<8x128xf32>
    %289 = vector.extract_strided_slice %23 {offsets = [32, 0], sizes = [8, 128], strides = [1, 1]} : vector<64x128xf32> to vector<8x128xf32>
    %290 = arith.subf %258, %224 : vector<8x128xf32>
    %291 = arith.mulf %288, %290 : vector<8x128xf32>
    %292 = arith.addf %224, %291 : vector<8x128xf32>
    %293 = arith.subf %287, %227 : vector<8x128xf32>
    %294 = arith.mulf %289, %293 : vector<8x128xf32>
    %295 = arith.addf %227, %294 : vector<8x128xf32>
    %296 = vector.extract_strided_slice %11 {offsets = [32, 0], sizes = [8, 384], strides = [1, 1]} : vector<64x768xf32> to vector<8x384xf32>
    %297 = vector.extract_strided_slice %11 {offsets = [24, 384], sizes = [8, 384], strides = [1, 1]} : vector<64x768xf32> to vector<8x384xf32>
    %298 = arith.truncf %292 : vector<8x128xf32> to vector<8x128xbf16>
    %cst_48 = arith.constant dense<0.000000e+00> : vector<8x384xf32>
    %299 = tpu.matmul %298, %12, %cst_48 {dimension_numbers = #tpu.dot_dimension_numbers<[1], [0], [0], [1], [0, 0, 1, 1], [], []>} : vector<8x128xbf16>, vector<128x384xbf16>, vector<8x384xf32> -> vector<8x384xf32>
    %300 = vector.extract_strided_slice %296 {offsets = [0, 0], sizes = [8, 128], strides = [1, 1]} : vector<8x384xf32> to vector<8x128xf32>
    %301 = vector.extract_strided_slice %299 {offsets = [0, 0], sizes = [8, 128], strides = [1, 1]} : vector<8x384xf32> to vector<8x128xf32>
    %302 = arith.addf %300, %301 : vector<8x128xf32>
    %303 = arith.negf %302 : vector<8x128xf32>
    %304 = math.exp %303 : vector<8x128xf32>
    %cst_49 = arith.constant 1.000000e+00 : f32
    %305 = vector.broadcast %cst_49 : f32 to vector<8x128xf32>
    %306 = arith.addf %305, %304 : vector<8x128xf32>
    %307 = arith.divf %305, %306 : vector<8x128xf32>
    %308 = vector.extract_strided_slice %296 {offsets = [0, 128], sizes = [8, 128], strides = [1, 1]} : vector<8x384xf32> to vector<8x128xf32>
    %309 = vector.extract_strided_slice %299 {offsets = [0, 128], sizes = [8, 128], strides = [1, 1]} : vector<8x384xf32> to vector<8x128xf32>
    %310 = arith.addf %308, %309 : vector<8x128xf32>
    %311 = arith.negf %310 : vector<8x128xf32>
    %312 = math.exp %311 : vector<8x128xf32>
    %cst_50 = arith.constant 1.000000e+00 : f32
    %313 = vector.broadcast %cst_50 : f32 to vector<8x128xf32>
    %314 = arith.addf %313, %312 : vector<8x128xf32>
    %315 = arith.divf %313, %314 : vector<8x128xf32>
    %316 = vector.extract_strided_slice %296 {offsets = [0, 256], sizes = [8, 128], strides = [1, 1]} : vector<8x384xf32> to vector<8x128xf32>
    %317 = vector.extract_strided_slice %299 {offsets = [0, 256], sizes = [8, 128], strides = [1, 1]} : vector<8x384xf32> to vector<8x128xf32>
    %318 = arith.addf %317, %16 : vector<8x128xf32>
    %319 = arith.mulf %307, %318 : vector<8x128xf32>
    %320 = arith.addf %316, %319 : vector<8x128xf32>
    %321 = math.tanh %320 : vector<8x128xf32>
    %cst_51 = arith.constant 1.000000e+00 : f32
    %322 = vector.broadcast %cst_51 : f32 to vector<8x128xf32>
    %323 = arith.subf %322, %315 : vector<8x128xf32>
    %324 = arith.mulf %323, %321 : vector<8x128xf32>
    %325 = arith.mulf %315, %292 : vector<8x128xf32>
    %326 = arith.addf %324, %325 : vector<8x128xf32>
    %327 = arith.truncf %295 : vector<8x128xf32> to vector<8x128xbf16>
    %cst_52 = arith.constant dense<0.000000e+00> : vector<8x384xf32>
    %328 = tpu.matmul %327, %13, %cst_52 {dimension_numbers = #tpu.dot_dimension_numbers<[1], [0], [0], [1], [0, 0, 1, 1], [], []>} : vector<8x128xbf16>, vector<128x384xbf16>, vector<8x384xf32> -> vector<8x384xf32>
    %329 = vector.extract_strided_slice %297 {offsets = [0, 0], sizes = [8, 128], strides = [1, 1]} : vector<8x384xf32> to vector<8x128xf32>
    %330 = vector.extract_strided_slice %328 {offsets = [0, 0], sizes = [8, 128], strides = [1, 1]} : vector<8x384xf32> to vector<8x128xf32>
    %331 = arith.addf %329, %330 : vector<8x128xf32>
    %332 = arith.negf %331 : vector<8x128xf32>
    %333 = math.exp %332 : vector<8x128xf32>
    %cst_53 = arith.constant 1.000000e+00 : f32
    %334 = vector.broadcast %cst_53 : f32 to vector<8x128xf32>
    %335 = arith.addf %334, %333 : vector<8x128xf32>
    %336 = arith.divf %334, %335 : vector<8x128xf32>
    %337 = vector.extract_strided_slice %297 {offsets = [0, 128], sizes = [8, 128], strides = [1, 1]} : vector<8x384xf32> to vector<8x128xf32>
    %338 = vector.extract_strided_slice %328 {offsets = [0, 128], sizes = [8, 128], strides = [1, 1]} : vector<8x384xf32> to vector<8x128xf32>
    %339 = arith.addf %337, %338 : vector<8x128xf32>
    %340 = arith.negf %339 : vector<8x128xf32>
    %341 = math.exp %340 : vector<8x128xf32>
    %cst_54 = arith.constant 1.000000e+00 : f32
    %342 = vector.broadcast %cst_54 : f32 to vector<8x128xf32>
    %343 = arith.addf %342, %341 : vector<8x128xf32>
    %344 = arith.divf %342, %343 : vector<8x128xf32>
    %345 = vector.extract_strided_slice %297 {offsets = [0, 256], sizes = [8, 128], strides = [1, 1]} : vector<8x384xf32> to vector<8x128xf32>
    %346 = vector.extract_strided_slice %328 {offsets = [0, 256], sizes = [8, 128], strides = [1, 1]} : vector<8x384xf32> to vector<8x128xf32>
    %347 = arith.addf %346, %19 : vector<8x128xf32>
    %348 = arith.mulf %336, %347 : vector<8x128xf32>
    %349 = arith.addf %345, %348 : vector<8x128xf32>
    %350 = math.tanh %349 : vector<8x128xf32>
    %cst_55 = arith.constant 1.000000e+00 : f32
    %351 = vector.broadcast %cst_55 : f32 to vector<8x128xf32>
    %352 = arith.subf %351, %344 : vector<8x128xf32>
    %353 = arith.mulf %352, %350 : vector<8x128xf32>
    %354 = arith.mulf %344, %295 : vector<8x128xf32>
    %355 = arith.addf %353, %354 : vector<8x128xf32>
    %356 = vector.extract_strided_slice %23 {offsets = [32, 0], sizes = [8, 128], strides = [1, 1]} : vector<64x128xf32> to vector<8x128xf32>
    %357 = vector.extract_strided_slice %23 {offsets = [24, 0], sizes = [8, 128], strides = [1, 1]} : vector<64x128xf32> to vector<8x128xf32>
    %358 = arith.subf %326, %292 : vector<8x128xf32>
    %359 = arith.mulf %356, %358 : vector<8x128xf32>
    %360 = arith.addf %292, %359 : vector<8x128xf32>
    %361 = arith.subf %355, %295 : vector<8x128xf32>
    %362 = arith.mulf %357, %361 : vector<8x128xf32>
    %363 = arith.addf %295, %362 : vector<8x128xf32>
    %364 = vector.extract_strided_slice %11 {offsets = [40, 0], sizes = [8, 384], strides = [1, 1]} : vector<64x768xf32> to vector<8x384xf32>
    %365 = vector.extract_strided_slice %11 {offsets = [16, 384], sizes = [8, 384], strides = [1, 1]} : vector<64x768xf32> to vector<8x384xf32>
    %366 = arith.truncf %360 : vector<8x128xf32> to vector<8x128xbf16>
    %cst_56 = arith.constant dense<0.000000e+00> : vector<8x384xf32>
    %367 = tpu.matmul %366, %12, %cst_56 {dimension_numbers = #tpu.dot_dimension_numbers<[1], [0], [0], [1], [0, 0, 1, 1], [], []>} : vector<8x128xbf16>, vector<128x384xbf16>, vector<8x384xf32> -> vector<8x384xf32>
    %368 = vector.extract_strided_slice %364 {offsets = [0, 0], sizes = [8, 128], strides = [1, 1]} : vector<8x384xf32> to vector<8x128xf32>
    %369 = vector.extract_strided_slice %367 {offsets = [0, 0], sizes = [8, 128], strides = [1, 1]} : vector<8x384xf32> to vector<8x128xf32>
    %370 = arith.addf %368, %369 : vector<8x128xf32>
    %371 = arith.negf %370 : vector<8x128xf32>
    %372 = math.exp %371 : vector<8x128xf32>
    %cst_57 = arith.constant 1.000000e+00 : f32
    %373 = vector.broadcast %cst_57 : f32 to vector<8x128xf32>
    %374 = arith.addf %373, %372 : vector<8x128xf32>
    %375 = arith.divf %373, %374 : vector<8x128xf32>
    %376 = vector.extract_strided_slice %364 {offsets = [0, 128], sizes = [8, 128], strides = [1, 1]} : vector<8x384xf32> to vector<8x128xf32>
    %377 = vector.extract_strided_slice %367 {offsets = [0, 128], sizes = [8, 128], strides = [1, 1]} : vector<8x384xf32> to vector<8x128xf32>
    %378 = arith.addf %376, %377 : vector<8x128xf32>
    %379 = arith.negf %378 : vector<8x128xf32>
    %380 = math.exp %379 : vector<8x128xf32>
    %cst_58 = arith.constant 1.000000e+00 : f32
    %381 = vector.broadcast %cst_58 : f32 to vector<8x128xf32>
    %382 = arith.addf %381, %380 : vector<8x128xf32>
    %383 = arith.divf %381, %382 : vector<8x128xf32>
    %384 = vector.extract_strided_slice %364 {offsets = [0, 256], sizes = [8, 128], strides = [1, 1]} : vector<8x384xf32> to vector<8x128xf32>
    %385 = vector.extract_strided_slice %367 {offsets = [0, 256], sizes = [8, 128], strides = [1, 1]} : vector<8x384xf32> to vector<8x128xf32>
    %386 = arith.addf %385, %16 : vector<8x128xf32>
    %387 = arith.mulf %375, %386 : vector<8x128xf32>
    %388 = arith.addf %384, %387 : vector<8x128xf32>
    %389 = math.tanh %388 : vector<8x128xf32>
    %cst_59 = arith.constant 1.000000e+00 : f32
    %390 = vector.broadcast %cst_59 : f32 to vector<8x128xf32>
    %391 = arith.subf %390, %383 : vector<8x128xf32>
    %392 = arith.mulf %391, %389 : vector<8x128xf32>
    %393 = arith.mulf %383, %360 : vector<8x128xf32>
    %394 = arith.addf %392, %393 : vector<8x128xf32>
    %395 = arith.truncf %363 : vector<8x128xf32> to vector<8x128xbf16>
    %cst_60 = arith.constant dense<0.000000e+00> : vector<8x384xf32>
    %396 = tpu.matmul %395, %13, %cst_60 {dimension_numbers = #tpu.dot_dimension_numbers<[1], [0], [0], [1], [0, 0, 1, 1], [], []>} : vector<8x128xbf16>, vector<128x384xbf16>, vector<8x384xf32> -> vector<8x384xf32>
    %397 = vector.extract_strided_slice %365 {offsets = [0, 0], sizes = [8, 128], strides = [1, 1]} : vector<8x384xf32> to vector<8x128xf32>
    %398 = vector.extract_strided_slice %396 {offsets = [0, 0], sizes = [8, 128], strides = [1, 1]} : vector<8x384xf32> to vector<8x128xf32>
    %399 = arith.addf %397, %398 : vector<8x128xf32>
    %400 = arith.negf %399 : vector<8x128xf32>
    %401 = math.exp %400 : vector<8x128xf32>
    %cst_61 = arith.constant 1.000000e+00 : f32
    %402 = vector.broadcast %cst_61 : f32 to vector<8x128xf32>
    %403 = arith.addf %402, %401 : vector<8x128xf32>
    %404 = arith.divf %402, %403 : vector<8x128xf32>
    %405 = vector.extract_strided_slice %365 {offsets = [0, 128], sizes = [8, 128], strides = [1, 1]} : vector<8x384xf32> to vector<8x128xf32>
    %406 = vector.extract_strided_slice %396 {offsets = [0, 128], sizes = [8, 128], strides = [1, 1]} : vector<8x384xf32> to vector<8x128xf32>
    %407 = arith.addf %405, %406 : vector<8x128xf32>
    %408 = arith.negf %407 : vector<8x128xf32>
    %409 = math.exp %408 : vector<8x128xf32>
    %cst_62 = arith.constant 1.000000e+00 : f32
    %410 = vector.broadcast %cst_62 : f32 to vector<8x128xf32>
    %411 = arith.addf %410, %409 : vector<8x128xf32>
    %412 = arith.divf %410, %411 : vector<8x128xf32>
    %413 = vector.extract_strided_slice %365 {offsets = [0, 256], sizes = [8, 128], strides = [1, 1]} : vector<8x384xf32> to vector<8x128xf32>
    %414 = vector.extract_strided_slice %396 {offsets = [0, 256], sizes = [8, 128], strides = [1, 1]} : vector<8x384xf32> to vector<8x128xf32>
    %415 = arith.addf %414, %19 : vector<8x128xf32>
    %416 = arith.mulf %404, %415 : vector<8x128xf32>
    %417 = arith.addf %413, %416 : vector<8x128xf32>
    %418 = math.tanh %417 : vector<8x128xf32>
    %cst_63 = arith.constant 1.000000e+00 : f32
    %419 = vector.broadcast %cst_63 : f32 to vector<8x128xf32>
    %420 = arith.subf %419, %412 : vector<8x128xf32>
    %421 = arith.mulf %420, %418 : vector<8x128xf32>
    %422 = arith.mulf %412, %363 : vector<8x128xf32>
    %423 = arith.addf %421, %422 : vector<8x128xf32>
    %424 = vector.extract_strided_slice %23 {offsets = [40, 0], sizes = [8, 128], strides = [1, 1]} : vector<64x128xf32> to vector<8x128xf32>
    %425 = vector.extract_strided_slice %23 {offsets = [16, 0], sizes = [8, 128], strides = [1, 1]} : vector<64x128xf32> to vector<8x128xf32>
    %426 = arith.subf %394, %360 : vector<8x128xf32>
    %427 = arith.mulf %424, %426 : vector<8x128xf32>
    %428 = arith.addf %360, %427 : vector<8x128xf32>
    %429 = arith.subf %423, %363 : vector<8x128xf32>
    %430 = arith.mulf %425, %429 : vector<8x128xf32>
    %431 = arith.addf %363, %430 : vector<8x128xf32>
    %432 = vector.extract_strided_slice %11 {offsets = [48, 0], sizes = [8, 384], strides = [1, 1]} : vector<64x768xf32> to vector<8x384xf32>
    %433 = vector.extract_strided_slice %11 {offsets = [8, 384], sizes = [8, 384], strides = [1, 1]} : vector<64x768xf32> to vector<8x384xf32>
    %434 = arith.truncf %428 : vector<8x128xf32> to vector<8x128xbf16>
    %cst_64 = arith.constant dense<0.000000e+00> : vector<8x384xf32>
    %435 = tpu.matmul %434, %12, %cst_64 {dimension_numbers = #tpu.dot_dimension_numbers<[1], [0], [0], [1], [0, 0, 1, 1], [], []>} : vector<8x128xbf16>, vector<128x384xbf16>, vector<8x384xf32> -> vector<8x384xf32>
    %436 = vector.extract_strided_slice %432 {offsets = [0, 0], sizes = [8, 128], strides = [1, 1]} : vector<8x384xf32> to vector<8x128xf32>
    %437 = vector.extract_strided_slice %435 {offsets = [0, 0], sizes = [8, 128], strides = [1, 1]} : vector<8x384xf32> to vector<8x128xf32>
    %438 = arith.addf %436, %437 : vector<8x128xf32>
    %439 = arith.negf %438 : vector<8x128xf32>
    %440 = math.exp %439 : vector<8x128xf32>
    %cst_65 = arith.constant 1.000000e+00 : f32
    %441 = vector.broadcast %cst_65 : f32 to vector<8x128xf32>
    %442 = arith.addf %441, %440 : vector<8x128xf32>
    %443 = arith.divf %441, %442 : vector<8x128xf32>
    %444 = vector.extract_strided_slice %432 {offsets = [0, 128], sizes = [8, 128], strides = [1, 1]} : vector<8x384xf32> to vector<8x128xf32>
    %445 = vector.extract_strided_slice %435 {offsets = [0, 128], sizes = [8, 128], strides = [1, 1]} : vector<8x384xf32> to vector<8x128xf32>
    %446 = arith.addf %444, %445 : vector<8x128xf32>
    %447 = arith.negf %446 : vector<8x128xf32>
    %448 = math.exp %447 : vector<8x128xf32>
    %cst_66 = arith.constant 1.000000e+00 : f32
    %449 = vector.broadcast %cst_66 : f32 to vector<8x128xf32>
    %450 = arith.addf %449, %448 : vector<8x128xf32>
    %451 = arith.divf %449, %450 : vector<8x128xf32>
    %452 = vector.extract_strided_slice %432 {offsets = [0, 256], sizes = [8, 128], strides = [1, 1]} : vector<8x384xf32> to vector<8x128xf32>
    %453 = vector.extract_strided_slice %435 {offsets = [0, 256], sizes = [8, 128], strides = [1, 1]} : vector<8x384xf32> to vector<8x128xf32>
    %454 = arith.addf %453, %16 : vector<8x128xf32>
    %455 = arith.mulf %443, %454 : vector<8x128xf32>
    %456 = arith.addf %452, %455 : vector<8x128xf32>
    %457 = math.tanh %456 : vector<8x128xf32>
    %cst_67 = arith.constant 1.000000e+00 : f32
    %458 = vector.broadcast %cst_67 : f32 to vector<8x128xf32>
    %459 = arith.subf %458, %451 : vector<8x128xf32>
    %460 = arith.mulf %459, %457 : vector<8x128xf32>
    %461 = arith.mulf %451, %428 : vector<8x128xf32>
    %462 = arith.addf %460, %461 : vector<8x128xf32>
    %463 = arith.truncf %431 : vector<8x128xf32> to vector<8x128xbf16>
    %cst_68 = arith.constant dense<0.000000e+00> : vector<8x384xf32>
    %464 = tpu.matmul %463, %13, %cst_68 {dimension_numbers = #tpu.dot_dimension_numbers<[1], [0], [0], [1], [0, 0, 1, 1], [], []>} : vector<8x128xbf16>, vector<128x384xbf16>, vector<8x384xf32> -> vector<8x384xf32>
    %465 = vector.extract_strided_slice %433 {offsets = [0, 0], sizes = [8, 128], strides = [1, 1]} : vector<8x384xf32> to vector<8x128xf32>
    %466 = vector.extract_strided_slice %464 {offsets = [0, 0], sizes = [8, 128], strides = [1, 1]} : vector<8x384xf32> to vector<8x128xf32>
    %467 = arith.addf %465, %466 : vector<8x128xf32>
    %468 = arith.negf %467 : vector<8x128xf32>
    %469 = math.exp %468 : vector<8x128xf32>
    %cst_69 = arith.constant 1.000000e+00 : f32
    %470 = vector.broadcast %cst_69 : f32 to vector<8x128xf32>
    %471 = arith.addf %470, %469 : vector<8x128xf32>
    %472 = arith.divf %470, %471 : vector<8x128xf32>
    %473 = vector.extract_strided_slice %433 {offsets = [0, 128], sizes = [8, 128], strides = [1, 1]} : vector<8x384xf32> to vector<8x128xf32>
    %474 = vector.extract_strided_slice %464 {offsets = [0, 128], sizes = [8, 128], strides = [1, 1]} : vector<8x384xf32> to vector<8x128xf32>
    %475 = arith.addf %473, %474 : vector<8x128xf32>
    %476 = arith.negf %475 : vector<8x128xf32>
    %477 = math.exp %476 : vector<8x128xf32>
    %cst_70 = arith.constant 1.000000e+00 : f32
    %478 = vector.broadcast %cst_70 : f32 to vector<8x128xf32>
    %479 = arith.addf %478, %477 : vector<8x128xf32>
    %480 = arith.divf %478, %479 : vector<8x128xf32>
    %481 = vector.extract_strided_slice %433 {offsets = [0, 256], sizes = [8, 128], strides = [1, 1]} : vector<8x384xf32> to vector<8x128xf32>
    %482 = vector.extract_strided_slice %464 {offsets = [0, 256], sizes = [8, 128], strides = [1, 1]} : vector<8x384xf32> to vector<8x128xf32>
    %483 = arith.addf %482, %19 : vector<8x128xf32>
    %484 = arith.mulf %472, %483 : vector<8x128xf32>
    %485 = arith.addf %481, %484 : vector<8x128xf32>
    %486 = math.tanh %485 : vector<8x128xf32>
    %cst_71 = arith.constant 1.000000e+00 : f32
    %487 = vector.broadcast %cst_71 : f32 to vector<8x128xf32>
    %488 = arith.subf %487, %480 : vector<8x128xf32>
    %489 = arith.mulf %488, %486 : vector<8x128xf32>
    %490 = arith.mulf %480, %431 : vector<8x128xf32>
    %491 = arith.addf %489, %490 : vector<8x128xf32>
    %492 = vector.extract_strided_slice %23 {offsets = [48, 0], sizes = [8, 128], strides = [1, 1]} : vector<64x128xf32> to vector<8x128xf32>
    %493 = vector.extract_strided_slice %23 {offsets = [8, 0], sizes = [8, 128], strides = [1, 1]} : vector<64x128xf32> to vector<8x128xf32>
    %494 = arith.subf %462, %428 : vector<8x128xf32>
    %495 = arith.mulf %492, %494 : vector<8x128xf32>
    %496 = arith.addf %428, %495 : vector<8x128xf32>
    %497 = arith.subf %491, %431 : vector<8x128xf32>
    %498 = arith.mulf %493, %497 : vector<8x128xf32>
    %499 = arith.addf %431, %498 : vector<8x128xf32>
    %500 = vector.extract_strided_slice %11 {offsets = [56, 0], sizes = [8, 384], strides = [1, 1]} : vector<64x768xf32> to vector<8x384xf32>
    %501 = vector.extract_strided_slice %11 {offsets = [0, 384], sizes = [8, 384], strides = [1, 1]} : vector<64x768xf32> to vector<8x384xf32>
    %502 = arith.truncf %496 : vector<8x128xf32> to vector<8x128xbf16>
    %cst_72 = arith.constant dense<0.000000e+00> : vector<8x384xf32>
    %503 = tpu.matmul %502, %12, %cst_72 {dimension_numbers = #tpu.dot_dimension_numbers<[1], [0], [0], [1], [0, 0, 1, 1], [], []>} : vector<8x128xbf16>, vector<128x384xbf16>, vector<8x384xf32> -> vector<8x384xf32>
    %504 = vector.extract_strided_slice %500 {offsets = [0, 0], sizes = [8, 128], strides = [1, 1]} : vector<8x384xf32> to vector<8x128xf32>
    %505 = vector.extract_strided_slice %503 {offsets = [0, 0], sizes = [8, 128], strides = [1, 1]} : vector<8x384xf32> to vector<8x128xf32>
    %506 = arith.addf %504, %505 : vector<8x128xf32>
    %507 = arith.negf %506 : vector<8x128xf32>
    %508 = math.exp %507 : vector<8x128xf32>
    %cst_73 = arith.constant 1.000000e+00 : f32
    %509 = vector.broadcast %cst_73 : f32 to vector<8x128xf32>
    %510 = arith.addf %509, %508 : vector<8x128xf32>
    %511 = arith.divf %509, %510 : vector<8x128xf32>
    %512 = vector.extract_strided_slice %500 {offsets = [0, 128], sizes = [8, 128], strides = [1, 1]} : vector<8x384xf32> to vector<8x128xf32>
    %513 = vector.extract_strided_slice %503 {offsets = [0, 128], sizes = [8, 128], strides = [1, 1]} : vector<8x384xf32> to vector<8x128xf32>
    %514 = arith.addf %512, %513 : vector<8x128xf32>
    %515 = arith.negf %514 : vector<8x128xf32>
    %516 = math.exp %515 : vector<8x128xf32>
    %cst_74 = arith.constant 1.000000e+00 : f32
    %517 = vector.broadcast %cst_74 : f32 to vector<8x128xf32>
    %518 = arith.addf %517, %516 : vector<8x128xf32>
    %519 = arith.divf %517, %518 : vector<8x128xf32>
    %520 = vector.extract_strided_slice %500 {offsets = [0, 256], sizes = [8, 128], strides = [1, 1]} : vector<8x384xf32> to vector<8x128xf32>
    %521 = vector.extract_strided_slice %503 {offsets = [0, 256], sizes = [8, 128], strides = [1, 1]} : vector<8x384xf32> to vector<8x128xf32>
    %522 = arith.addf %521, %16 : vector<8x128xf32>
    %523 = arith.mulf %511, %522 : vector<8x128xf32>
    %524 = arith.addf %520, %523 : vector<8x128xf32>
    %525 = math.tanh %524 : vector<8x128xf32>
    %cst_75 = arith.constant 1.000000e+00 : f32
    %526 = vector.broadcast %cst_75 : f32 to vector<8x128xf32>
    %527 = arith.subf %526, %519 : vector<8x128xf32>
    %528 = arith.mulf %527, %525 : vector<8x128xf32>
    %529 = arith.mulf %519, %496 : vector<8x128xf32>
    %530 = arith.addf %528, %529 : vector<8x128xf32>
    %531 = arith.truncf %499 : vector<8x128xf32> to vector<8x128xbf16>
    %cst_76 = arith.constant dense<0.000000e+00> : vector<8x384xf32>
    %532 = tpu.matmul %531, %13, %cst_76 {dimension_numbers = #tpu.dot_dimension_numbers<[1], [0], [0], [1], [0, 0, 1, 1], [], []>} : vector<8x128xbf16>, vector<128x384xbf16>, vector<8x384xf32> -> vector<8x384xf32>
    %533 = vector.extract_strided_slice %501 {offsets = [0, 0], sizes = [8, 128], strides = [1, 1]} : vector<8x384xf32> to vector<8x128xf32>
    %534 = vector.extract_strided_slice %532 {offsets = [0, 0], sizes = [8, 128], strides = [1, 1]} : vector<8x384xf32> to vector<8x128xf32>
    %535 = arith.addf %533, %534 : vector<8x128xf32>
    %536 = arith.negf %535 : vector<8x128xf32>
    %537 = math.exp %536 : vector<8x128xf32>
    %cst_77 = arith.constant 1.000000e+00 : f32
    %538 = vector.broadcast %cst_77 : f32 to vector<8x128xf32>
    %539 = arith.addf %538, %537 : vector<8x128xf32>
    %540 = arith.divf %538, %539 : vector<8x128xf32>
    %541 = vector.extract_strided_slice %501 {offsets = [0, 128], sizes = [8, 128], strides = [1, 1]} : vector<8x384xf32> to vector<8x128xf32>
    %542 = vector.extract_strided_slice %532 {offsets = [0, 128], sizes = [8, 128], strides = [1, 1]} : vector<8x384xf32> to vector<8x128xf32>
    %543 = arith.addf %541, %542 : vector<8x128xf32>
    %544 = arith.negf %543 : vector<8x128xf32>
    %545 = math.exp %544 : vector<8x128xf32>
    %cst_78 = arith.constant 1.000000e+00 : f32
    %546 = vector.broadcast %cst_78 : f32 to vector<8x128xf32>
    %547 = arith.addf %546, %545 : vector<8x128xf32>
    %548 = arith.divf %546, %547 : vector<8x128xf32>
    %549 = vector.extract_strided_slice %501 {offsets = [0, 256], sizes = [8, 128], strides = [1, 1]} : vector<8x384xf32> to vector<8x128xf32>
    %550 = vector.extract_strided_slice %532 {offsets = [0, 256], sizes = [8, 128], strides = [1, 1]} : vector<8x384xf32> to vector<8x128xf32>
    %551 = arith.addf %550, %19 : vector<8x128xf32>
    %552 = arith.mulf %540, %551 : vector<8x128xf32>
    %553 = arith.addf %549, %552 : vector<8x128xf32>
    %554 = math.tanh %553 : vector<8x128xf32>
    %cst_79 = arith.constant 1.000000e+00 : f32
    %555 = vector.broadcast %cst_79 : f32 to vector<8x128xf32>
    %556 = arith.subf %555, %548 : vector<8x128xf32>
    %557 = arith.mulf %556, %554 : vector<8x128xf32>
    %558 = arith.mulf %548, %499 : vector<8x128xf32>
    %559 = arith.addf %557, %558 : vector<8x128xf32>
    %560 = vector.extract_strided_slice %23 {offsets = [56, 0], sizes = [8, 128], strides = [1, 1]} : vector<64x128xf32> to vector<8x128xf32>
    %561 = vector.extract_strided_slice %23 {offsets = [0, 0], sizes = [8, 128], strides = [1, 1]} : vector<64x128xf32> to vector<8x128xf32>
    %562 = arith.subf %530, %496 : vector<8x128xf32>
    %563 = arith.mulf %560, %562 : vector<8x128xf32>
    %564 = arith.addf %496, %563 : vector<8x128xf32>
    %565 = arith.subf %559, %499 : vector<8x128xf32>
    %566 = arith.mulf %561, %565 : vector<8x128xf32>
    %567 = arith.addf %499, %566 : vector<8x128xf32>
    %c0_80 = arith.constant 0 : index
    %c0_81 = arith.constant 0 : index
    %568 = vector.load %arg8[%c0_80, %c0_81] : memref<128x5xf32, #tpu.memory_space<vmem>>, vector<128x5xf32>
    %cst_82 = arith.constant dense<0.000000e+00> : vector<8x5xf32>
    %569 = tpu.matmul %564, %568, %cst_82 {dimension_numbers = #tpu.dot_dimension_numbers<[1], [0], [0], [1], [0, 0, 1, 1], [], []>} : vector<8x128xf32>, vector<128x5xf32>, vector<8x5xf32> -> vector<8x5xf32>
    %c0_83 = arith.constant 0 : index
    %c0_84 = arith.constant 0 : index
    %570 = vector.load %arg9[%c0_83, %c0_84] : memref<128x5xf32, #tpu.memory_space<vmem>>, vector<128x5xf32>
    %cst_85 = arith.constant dense<0.000000e+00> : vector<8x5xf32>
    %571 = tpu.matmul %567, %570, %cst_85 {dimension_numbers = #tpu.dot_dimension_numbers<[1], [0], [0], [1], [0, 0, 1, 1], [], []>} : vector<8x128xf32>, vector<128x5xf32>, vector<8x5xf32> -> vector<8x5xf32>
    %572 = arith.addf %569, %571 : vector<8x5xf32>
    %c0_86 = arith.constant 0 : index
    %c0_87 = arith.constant 0 : index
    %573 = vector.load %arg10[%c0_86, %c0_87] : memref<1x5xf32, #tpu.memory_space<vmem>>, vector<1x5xf32>
    %574 = vector.broadcast %573 : vector<1x5xf32> to vector<8x5xf32>
    %575 = arith.addf %572, %574 : vector<8x5xf32>
    %cst_88 = arith.constant dense<0xFF800000> : vector<8xf32>
    %576 = vector.multi_reduction <maximumf>, %575, %cst_88 [1] : vector<8x5xf32> to vector<8xf32>
    %577 = vector.shape_cast %576 : vector<8xf32> to vector<8x1xf32>
    %578 = vector.broadcast %577 : vector<8x1xf32> to vector<8x5xf32>
    %579 = arith.subf %575, %578 : vector<8x5xf32>
    %580 = math.exp %579 : vector<8x5xf32>
    %cst_89 = arith.constant dense<0.000000e+00> : vector<8xf32>
    %581 = vector.multi_reduction <add>, %580, %cst_89 [1] : vector<8x5xf32> to vector<8xf32>
    %582 = vector.shape_cast %581 : vector<8xf32> to vector<8x1xf32>
    %583 = math.log %582 : vector<8x1xf32>
    %584 = arith.addf %577, %583 : vector<8x1xf32>
    %585 = vector.broadcast %584 : vector<8x1xf32> to vector<8x5xf32>
    %586 = arith.subf %575, %585 : vector<8x5xf32>
    %c0_90 = arith.constant 0 : index
    %c0_91 = arith.constant 0 : index
    %587 = vector.load %arg11[%c0_90, %c0_91] : memref<8x5xf32, #tpu.memory_space<vmem>>, vector<8x5xf32>
    tpu.vector_store %arg11[%c0_90, %c0_91], %586 {strides = array<i32>} : memref<8x5xf32, #tpu.memory_space<vmem>>, vector<8x5xf32>,
    return
  }
}

</mosaic_0001>

<llo_original>
// kernel: tpu_custom_call.1
$region0: #{tpu_custom_call.1}
  #allocation0 [shape = 'u32[]', space=smem, size = 0x4, offset = 0x4, fixed_abs, tag = 'smem constant byte address 0x4 - core index']
  #allocation1 [shape = 'u32[72,128]{1,0:T(1,128)}', space=vmem, size = 0x9000, scoped, tag = 'internal scratch']
  %s0 = inlined_call_operand.vmem [shape: s32[64,1], index: 0, kind: input, shape index: {}]
  %s1 = inlined_call_operand.vmem [shape: f32[64,1], index: 1, kind: input, shape index: {}]
  %s2 = inlined_call_operand.hbm [shape: bf16[128,768], index: 2, kind: input, shape index: {}]
  %s3 = inlined_call_operand.vmem [shape: f32[1,768], index: 3, kind: input, shape index: {}]
  %s4 = inlined_call_operand.vmem [shape: bf16[128,384], index: 4, kind: input, shape index: {}]
  %s5 = inlined_call_operand.hbm [shape: bf16[128,384], index: 5, kind: input, shape index: {}]
  %s6 = inlined_call_operand.vmem [shape: f32[1,128], index: 6, kind: input, shape index: {}]
  %s7 = inlined_call_operand.vmem [shape: f32[1,128], index: 7, kind: input, shape index: {}]
  %s8 = inlined_call_operand.vmem [shape: f32[128,5], index: 8, kind: input, shape index: {}]
  %s9 = inlined_call_operand.vmem [shape: f32[128,5], index: 9, kind: input, shape index: {}]
  %s10 = inlined_call_operand.vmem [shape: f32[1,5], index: 10, kind: input, shape index: {}]
  %s11 = inlined_call_operand.hbm [shape: f32[8,5], index: 11, kind: output, shape index: {}]
  %s12 = sld [smem:[#allocation0]]
  $region62: #{tpu_custom_call.1} parent=0
    _
  %s14 = ssub.s32 1, %s12
  %s15 = scalar_select 0, %s14, %s12
  $region1: #{tpu_custom_call.1} parent=0
    #allocation2 [shape = 'u8[196608]{0}', space=vmem, size = 0x30000, scoped, tag = 'input window, operand 2, single buffered']
    #allocation3 [shape = 's32[1]{0}', space=sflag, size = 0x4, scoped, tag = 'scoped memory for tpu_custom_call.1']
    #allocation4 [shape = 's32[1]{0}', space=sflag, size = 0x4, scoped, tag = 'scoped memory for tpu_custom_call.1']
    #allocation5 [shape = 'u8[98304]{0}', space=vmem, size = 0x18000, scoped, tag = 'input window, operand 5, single buffered']
    #allocation6 [shape = 's32[1]{0}', space=sflag, size = 0x4, scoped, tag = 'scoped memory for tpu_custom_call.1']
    #allocation7 [shape = 'u8[4096]{0}', space=vmem, size = 0x1000, scoped, tag = 'output window, operand 0, single buffered']
    %16 = vsyncpa [#allocation3], 0
    %17 = vsyncpa [#allocation6], 0
    %18 = vsyncpa [#allocation4], 0
    // Predicated region
    $region2: #{tpu_custom_call.1} parent=1 // pred_check
      _
    $region3: #{tpu_custom_call.1} parent=1 // pred_check_branch
      %20 = sbr.rel (0) target = $region5
    $region4: #{tpu_custom_call.1} parent=1 // pred_region
      _
    $region5: #{tpu_custom_call.1} parent=1 // pred_fallthru
      _
    // Predicated region
    $region6: #{tpu_custom_call.1} parent=1 // pred_check
      _
    $region7: #{tpu_custom_call.1} parent=1 // pred_check_branch
      %22 = sbr.rel (0) target = $region9
    $region8: #{tpu_custom_call.1} parent=1 // pred_region
      _
    $region9: #{tpu_custom_call.1} parent=1 // pred_fallthru
      _
    // Predicated region
    $region10: #{tpu_custom_call.1} parent=1 // pred_check
      _
    $region11: #{tpu_custom_call.1} parent=1 // pred_check_branch
      %24 = sbr.rel (0) target = $region13
    $region12: #{tpu_custom_call.1} parent=1 // pred_region
      %26 = vsyncadd [#allocation3], 0
      %s27 = sshll.u32 %s2, 4
      %s28 = int_to_ptr.hbm [resolvable:$true] %s27
      %s29 = sshll.u32 [#allocation2], 4
      %s30 = int_to_ptr.vmem [resolvable:$true] %s29
      %35 = dma.hbm_to_vmem [thread:$0]  %s28, 6144, %s30, [#allocation3], 384, 384, 24
    $region13: #{tpu_custom_call.1} parent=1 // pred_fallthru
      _
    // Predicated region
    $region14: #{tpu_custom_call.1} parent=1 // pred_check
      _
    $region15: #{tpu_custom_call.1} parent=1 // pred_check_branch
      %37 = sbr.rel (0) target = $region17
    $region16: #{tpu_custom_call.1} parent=1 // pred_region
      _
    $region17: #{tpu_custom_call.1} parent=1 // pred_fallthru
      _
    // Predicated region
    $region18: #{tpu_custom_call.1} parent=1 // pred_check
      _
    $region19: #{tpu_custom_call.1} parent=1 // pred_check_branch
      %39 = sbr.rel (0) target = $region21
    $region20: #{tpu_custom_call.1} parent=1 // pred_region
      _
    $region21: #{tpu_custom_call.1} parent=1 // pred_fallthru
      _
    // Predicated region
    $region22: #{tpu_custom_call.1} parent=1 // pred_check
      _
    $region23: #{tpu_custom_call.1} parent=1 // pred_check_branch
      %41 = sbr.rel (0) target = $region25
    $region24: #{tpu_custom_call.1} parent=1 // pred_region
      %43 = vsyncadd [#allocation6], 0
      %s44 = sshll.u32 %s5, 4
      %s45 = int_to_ptr.hbm [resolvable:$true] %s44
      %s46 = sshll.u32 [#allocation5], 4
      %s47 = int_to_ptr.vmem [resolvable:$true] %s46
      %52 = dma.hbm_to_vmem [thread:$0]  %s45, 3072, %s47, [#allocation6], 192, 192, 12
    $region25: #{tpu_custom_call.1} parent=1 // pred_fallthru
      _
    // Predicated region
    $region26: #{tpu_custom_call.1} parent=1 // pred_check
      _
    $region27: #{tpu_custom_call.1} parent=1 // pred_check_branch
      %54 = sbr.rel (0) target = $region29
    $region28: #{tpu_custom_call.1} parent=1 // pred_region
      _
    $region29: #{tpu_custom_call.1} parent=1 // pred_fallthru
      _
    // Predicated region
    $region30: #{tpu_custom_call.1} parent=1 // pred_check
      _
    $region31: #{tpu_custom_call.1} parent=1 // pred_check_branch
      %56 = sbr.rel (0) target = $region33
    $region32: #{tpu_custom_call.1} parent=1 // pred_region
      _
    $region33: #{tpu_custom_call.1} parent=1 // pred_fallthru
      _
    // Predicated region
    $region34: #{tpu_custom_call.1} parent=1 // pred_check
      _
    $region35: #{tpu_custom_call.1} parent=1 // pred_check_branch
      %58 = sbr.rel (0) target = $region37
    $region36: #{tpu_custom_call.1} parent=1 // pred_region
      _
    $region37: #{tpu_custom_call.1} parent=1 // pred_fallthru
      _
    // Predicated region
    $region38: #{tpu_custom_call.1} parent=1 // pred_check
      _
    $region39: #{tpu_custom_call.1} parent=1 // pred_check_branch
      %60 = sbr.rel (0) target = $region41
    $region40: #{tpu_custom_call.1} parent=1 // pred_region
      _
    $region41: #{tpu_custom_call.1} parent=1 // pred_fallthru
      _
    // Predicated region
    $region42: #{tpu_custom_call.1} parent=1 // pred_check
      _
    $region43: #{tpu_custom_call.1} parent=1 // pred_check_branch
      %62 = sbr.rel (0) target = $region45
    $region44: #{tpu_custom_call.1} parent=1 // pred_region
      _
    $region45: #{tpu_custom_call.1} parent=1 // pred_fallthru
      _
    // Predicated region
    $region46: #{tpu_custom_call.1} parent=1 // pred_check
      _
    $region47: #{tpu_custom_call.1} parent=1 // pred_check_branch
      %64 = sbr.rel (0) target = $region49
    $region48: #{tpu_custom_call.1} parent=1 // pred_region
      %66 = dma.done [#allocation3], 6144
    $region49: #{tpu_custom_call.1} parent=1 // pred_fallthru
      _
    // Predicated region
    $region50: #{tpu_custom_call.1} parent=1 // pred_check
      _
    $region51: #{tpu_custom_call.1} parent=1 // pred_check_branch
      %68 = sbr.rel (0) target = $region53
    $region52: #{tpu_custom_call.1} parent=1 // pred_region
      %70 = dma.done [#allocation6], 3072
    $region53: #{tpu_custom_call.1} parent=1 // pred_fallthru
      _
    %v72 = vlaneseq
    %v73 = vand.u32 %v72, 127
    %v74 = vld [vmem:[%s0] sm:$0xff]
    %v75 = vld [vmem:[%s0 + $0x8] sm:$0xff]
    %v76 = vld [vmem:[%s0 + $0x10] sm:$0xff]
    %v77 = vld [vmem:[%s0 + $0x18] sm:$0xff]
    %v78 = vld [vmem:[%s0 + $0x20] sm:$0xff]
    %v79 = vld [vmem:[%s0 + $0x28] sm:$0xff]
    %v80 = vld [vmem:[%s0 + $0x30] sm:$0xff]
    %v81 = vld [vmem:[%s0 + $0x38] sm:$0xff]
    %82 = vset.pattern.permute.xlu0 0
    %83 = vperm.xlu0 %82, %v74
    %v84 = vpop.permute.xlu0 %83
    %85 = vset.pattern.permute.xlu0 0
    %86 = vperm.xlu0 %85, %v75
    %v87 = vpop.permute.xlu0 %86
    %88 = vset.pattern.permute.xlu0 0
    %89 = vperm.xlu0 %88, %v76
    %v90 = vpop.permute.xlu0 %89
    %91 = vset.pattern.permute.xlu0 0
    %92 = vperm.xlu0 %91, %v77
    %v93 = vpop.permute.xlu0 %92
    %94 = vset.pattern.permute.xlu0 0
    %95 = vperm.xlu0 %94, %v78
    %v96 = vpop.permute.xlu0 %95
    %97 = vset.pattern.permute.xlu0 0
    %98 = vperm.xlu0 %97, %v79
    %v99 = vpop.permute.xlu0 %98
    %100 = vset.pattern.permute.xlu0 0
    %101 = vperm.xlu0 %100, %v80
    %v102 = vpop.permute.xlu0 %101
    %103 = vset.pattern.permute.xlu0 0
    %104 = vperm.xlu0 %103, %v81
    %v105 = vpop.permute.xlu0 %104
    %vm106 = vcmp.eq.s32.totalorder %v73, %v84
    %vm107 = vcmp.eq.s32.totalorder %v73, %v87
    %vm108 = vcmp.eq.s32.totalorder %v73, %v90
    %vm109 = vcmp.eq.s32.totalorder %v73, %v93
    %vm110 = vcmp.eq.s32.totalorder %v73, %v96
    %vm111 = vcmp.eq.s32.totalorder %v73, %v99
    %vm112 = vcmp.eq.s32.totalorder %v73, %v102
    %vm113 = vcmp.eq.s32.totalorder %v73, %v105
    %v114 = vsel %vm106, 1, 0
    %v115 = vsel %vm107, 1, 0
    %v116 = vsel %vm108, 1, 0
    %v117 = vsel %vm109, 1, 0
    %v118 = vsel %vm110, 1, 0
    %v119 = vsel %vm111, 1, 0
    %v120 = vsel %vm112, 1, 0
    %v121 = vsel %vm113, 1, 0
    %v122 = vcvt.s32.f32 %v114
    %v123 = vcvt.s32.f32 %v115
    %v124 = vcvt.s32.f32 %v116
    %v125 = vcvt.s32.f32 %v117
    %v126 = vcvt.s32.f32 %v118
    %v127 = vcvt.s32.f32 %v119
    %v128 = vcvt.s32.f32 %v120
    %v129 = vcvt.s32.f32 %v121
    %v130 = vpack.c.bf16 %v123, %v122
    %v131 = vpack.c.bf16 %v125, %v124
    %v132 = vpack.c.bf16 %v127, %v126
    %v133 = vpack.c.bf16 %v129, %v128
    %v134 = vld [vmem:[#allocation2] sm:$0xff]
    %v135 = vld [vmem:[#allocation2 + $0x8] sm:$0xff]
    %v136 = vld [vmem:[#allocation2 + $0x10] sm:$0xff]
    %v137 = vld [vmem:[#allocation2 + $0x18] sm:$0xff]
    %v138 = vld [vmem:[#allocation2 + $0x20] sm:$0xff]
    %v139 = vld [vmem:[#allocation2 + $0x28] sm:$0xff]
    %v140 = vld [vmem:[#allocation2 + $0x30] sm:$0xff]
    %v141 = vld [vmem:[#allocation2 + $0x38] sm:$0xff]
    %v142 = vld [vmem:[#allocation2 + $0x40] sm:$0xff]
    %v143 = vld [vmem:[#allocation2 + $0x48] sm:$0xff]
    %v144 = vld [vmem:[#allocation2 + $0x50] sm:$0xff]
    %v145 = vld [vmem:[#allocation2 + $0x58] sm:$0xff]
    %v146 = vld [vmem:[#allocation2 + $0x60] sm:$0xff]
    %v147 = vld [vmem:[#allocation2 + $0x68] sm:$0xff]
    %v148 = vld [vmem:[#allocation2 + $0x70] sm:$0xff]
    %v149 = vld [vmem:[#allocation2 + $0x78] sm:$0xff]
    %v150 = vld [vmem:[#allocation2 + $0x80] sm:$0xff]
    %v151 = vld [vmem:[#allocation2 + $0x88] sm:$0xff]
    %v152 = vld [vmem:[#allocation2 + $0x90] sm:$0xff]
    %v153 = vld [vmem:[#allocation2 + $0x98] sm:$0xff]
    %v154 = vld [vmem:[#allocation2 + $0xa0] sm:$0xff]
    %v155 = vld [vmem:[#allocation2 + $0xa8] sm:$0xff]
    %v156 = vld [vmem:[#allocation2 + $0xb0] sm:$0xff]
    %v157 = vld [vmem:[#allocation2 + $0xb8] sm:$0xff]
    %v158 = vld [vmem:[#allocation2 + $0xc0] sm:$0xff]
    %v159 = vld [vmem:[#allocation2 + $0xc8] sm:$0xff]
    %v160 = vld [vmem:[#allocation2 + $0xd0] sm:$0xff]
    %v161 = vld [vmem:[#allocation2 + $0xd8] sm:$0xff]
    %v162 = vld [vmem:[#allocation2 + $0xe0] sm:$0xff]
    %v163 = vld [vmem:[#allocation2 + $0xe8] sm:$0xff]
    %v164 = vld [vmem:[#allocation2 + $0xf0] sm:$0xff]
    %v165 = vld [vmem:[#allocation2 + $0xf8] sm:$0xff]
    %v166 = vld [vmem:[#allocation2 + $0x100] sm:$0xff]
    %v167 = vld [vmem:[#allocation2 + $0x108] sm:$0xff]
    %v168 = vld [vmem:[#allocation2 + $0x110] sm:$0xff]
    %v169 = vld [vmem:[#allocation2 + $0x118] sm:$0xff]
    %v170 = vld [vmem:[#allocation2 + $0x120] sm:$0xff]
    %v171 = vld [vmem:[#allocation2 + $0x128] sm:$0xff]
    %v172 = vld [vmem:[#allocation2 + $0x130] sm:$0xff]
    %v173 = vld [vmem:[#allocation2 + $0x138] sm:$0xff]
    %v174 = vld [vmem:[#allocation2 + $0x140] sm:$0xff]
    %v175 = vld [vmem:[#allocation2 + $0x148] sm:$0xff]
    %v176 = vld [vmem:[#allocation2 + $0x150] sm:$0xff]
    %v177 = vld [vmem:[#allocation2 + $0x158] sm:$0xff]
    %v178 = vld [vmem:[#allocation2 + $0x160] sm:$0xff]
    %v179 = vld [vmem:[#allocation2 + $0x168] sm:$0xff]
    %v180 = vld [vmem:[#allocation2 + $0x170] sm:$0xff]
    %v181 = vld [vmem:[#allocation2 + $0x178] sm:$0xff]
    %v182 = vld [vmem:[%s3] sm:$0x3f]
    %v184 = vperm.slane %v182, 0
    %v185 = vperm.slane %v182, 1
    %v186 = vperm.slane %v182, 2
    %v187 = vperm.slane %v182, 3
    %v188 = vperm.slane %v182, 4
    %v189 = vperm.slane %v182, 5
    %v244 = vunpack.c.l.b16 %v134
    %v245 = vunpack.c.h.b16 %v134
    %v246 = vunpack.c.l.b16 %v135
    %v247 = vunpack.c.h.b16 %v135
    %v248 = vunpack.c.l.b16 %v136
    %v249 = vunpack.c.h.b16 %v136
    %v250 = vunpack.c.l.b16 %v137
    %v251 = vunpack.c.h.b16 %v137
    %v252 = vunpack.c.l.b16 %v138
    %v253 = vunpack.c.h.b16 %v138
    %v254 = vunpack.c.l.b16 %v139
    %v255 = vunpack.c.h.b16 %v139
    %v256 = vunpack.c.l.b16 %v140
    %v257 = vunpack.c.h.b16 %v140
    %v258 = vunpack.c.l.b16 %v141
    %v259 = vunpack.c.h.b16 %v141
    %v260 = vunpack.c.l.b16 %v142
    %v261 = vunpack.c.h.b16 %v142
    %v262 = vunpack.c.l.b16 %v143
    %v263 = vunpack.c.h.b16 %v143
    %v264 = vunpack.c.l.b16 %v144
    %v265 = vunpack.c.h.b16 %v144
    %v266 = vunpack.c.l.b16 %v145
    %v267 = vunpack.c.h.b16 %v145
    %v268 = vunpack.c.l.b16 %v146
    %v269 = vunpack.c.h.b16 %v146
    %v270 = vunpack.c.l.b16 %v147
    %v271 = vunpack.c.h.b16 %v147
    %v272 = vunpack.c.l.b16 %v148
    %v273 = vunpack.c.h.b16 %v148
    %v274 = vunpack.c.l.b16 %v149
    %v275 = vunpack.c.h.b16 %v149
    %v276 = vunpack.c.l.b16 %v150
    %v277 = vunpack.c.h.b16 %v150
    %v278 = vunpack.c.l.b16 %v151
    %v279 = vunpack.c.h.b16 %v151
    %v280 = vunpack.c.l.b16 %v152
    %v281 = vunpack.c.h.b16 %v152
    %v282 = vunpack.c.l.b16 %v153
    %v283 = vunpack.c.h.b16 %v153
    %v284 = vunpack.c.l.b16 %v154
    %v285 = vunpack.c.h.b16 %v154
    %v286 = vunpack.c.l.b16 %v155
    %v287 = vunpack.c.h.b16 %v155
    %v288 = vunpack.c.l.b16 %v156
    %v289 = vunpack.c.h.b16 %v156
    %v290 = vunpack.c.l.b16 %v157
    %v291 = vunpack.c.h.b16 %v157
    %v292 = vunpack.c.l.b16 %v158
    %v293 = vunpack.c.h.b16 %v158
    %v294 = vunpack.c.l.b16 %v159
    %v295 = vunpack.c.h.b16 %v159
    %v296 = vunpack.c.l.b16 %v160
    %v297 = vunpack.c.h.b16 %v160
    %v298 = vunpack.c.l.b16 %v161
    %v299 = vunpack.c.h.b16 %v161
    %v300 = vunpack.c.l.b16 %v162
    %v301 = vunpack.c.h.b16 %v162
    %v302 = vunpack.c.l.b16 %v163
    %v303 = vunpack.c.h.b16 %v163
    %v304 = vunpack.c.l.b16 %v164
    %v305 = vunpack.c.h.b16 %v164
    %v306 = vunpack.c.l.b16 %v165
    %v307 = vunpack.c.h.b16 %v165
    %v308 = vunpack.c.l.b16 %v166
    %v309 = vunpack.c.h.b16 %v166
    %v310 = vunpack.c.l.b16 %v167
    %v311 = vunpack.c.h.b16 %v167
    %v312 = vunpack.c.l.b16 %v168
    %v313 = vunpack.c.h.b16 %v168
    %v314 = vunpack.c.l.b16 %v169
    %v315 = vunpack.c.h.b16 %v169
    %v316 = vunpack.c.l.b16 %v170
    %v317 = vunpack.c.h.b16 %v170
    %v318 = vunpack.c.l.b16 %v171
    %v319 = vunpack.c.h.b16 %v171
    %v320 = vunpack.c.l.b16 %v172
    %v321 = vunpack.c.h.b16 %v172
    %v322 = vunpack.c.l.b16 %v173
    %v323 = vunpack.c.h.b16 %v173
    %v324 = vunpack.c.l.b16 %v174
    %v325 = vunpack.c.h.b16 %v174
    %v326 = vunpack.c.l.b16 %v175
    %v327 = vunpack.c.h.b16 %v175
    %v328 = vunpack.c.l.b16 %v176
    %v329 = vunpack.c.h.b16 %v176
    %v330 = vunpack.c.l.b16 %v177
    %v331 = vunpack.c.h.b16 %v177
    %v332 = vunpack.c.l.b16 %v178
    %v333 = vunpack.c.h.b16 %v178
    %v334 = vunpack.c.l.b16 %v179
    %v335 = vunpack.c.h.b16 %v179
    %v336 = vunpack.c.l.b16 %v180
    %v337 = vunpack.c.h.b16 %v180
    %v338 = vunpack.c.l.b16 %v181
    %v339 = vunpack.c.h.b16 %v181
    %v340 = vpack.c.b16 %v250, %v244
    %v341 = vpack.c.b16 %v251, %v245
    %v342 = vpack.c.b16 %v252, %v246
    %v343 = vpack.c.b16 %v253, %v247
    %v344 = vpack.c.b16 %v254, %v248
    %v345 = vpack.c.b16 %v255, %v249
    %v346 = vpack.c.b16 %v262, %v256
    %v347 = vpack.c.b16 %v263, %v257
    %v348 = vpack.c.b16 %v264, %v258
    %v349 = vpack.c.b16 %v265, %v259
    %v350 = vpack.c.b16 %v266, %v260
    %v351 = vpack.c.b16 %v267, %v261
    %v352 = vpack.c.b16 %v274, %v268
    %v353 = vpack.c.b16 %v275, %v269
    %v354 = vpack.c.b16 %v276, %v270
    %v355 = vpack.c.b16 %v277, %v271
    %v356 = vpack.c.b16 %v278, %v272
    %v357 = vpack.c.b16 %v279, %v273
    %v358 = vpack.c.b16 %v286, %v280
    %v359 = vpack.c.b16 %v287, %v281
    %v360 = vpack.c.b16 %v288, %v282
    %v361 = vpack.c.b16 %v289, %v283
    %v362 = vpack.c.b16 %v290, %v284
    %v363 = vpack.c.b16 %v291, %v285
    %v364 = vpack.c.b16 %v298, %v292
    %v365 = vpack.c.b16 %v299, %v293
    %v366 = vpack.c.b16 %v300, %v294
    %v367 = vpack.c.b16 %v301, %v295
    %v368 = vpack.c.b16 %v302, %v296
    %v369 = vpack.c.b16 %v303, %v297
    %v370 = vpack.c.b16 %v310, %v304
    %v371 = vpack.c.b16 %v311, %v305
    %v372 = vpack.c.b16 %v312, %v306
    %v373 = vpack.c.b16 %v313, %v307
    %v374 = vpack.c.b16 %v314, %v308
    %v375 = vpack.c.b16 %v315, %v309
    %v376 = vpack.c.b16 %v322, %v316
    %v377 = vpack.c.b16 %v323, %v317
    %v378 = vpack.c.b16 %v324, %v318
    %v379 = vpack.c.b16 %v325, %v319
    %v380 = vpack.c.b16 %v326, %v320
    %v381 = vpack.c.b16 %v327, %v321
    %v382 = vpack.c.b16 %v334, %v328
    %v383 = vpack.c.b16 %v335, %v329
    %v384 = vpack.c.b16 %v336, %v330
    %v385 = vpack.c.b16 %v337, %v331
    %v386 = vpack.c.b16 %v338, %v332
    %v387 = vpack.c.b16 %v339, %v333
    %436 = vmatpush.bf16.msra.mxu0 %v382
    %437 = vmatpush.bf16.msra.mxu0 %v376
    %438 = vmatpush.bf16.msra.mxu0 %v370
    %439 = vmatpush.bf16.msra.mxu0 %v364
    %440 = vmatpush.bf16.msra.mxu0 %v358
    %441 = vmatpush.bf16.msra.mxu0 %v352
    %442 = vmatpush.bf16.msra.mxu0 %v346
    %443 = vmatpush.bf16.msra.mxu0 %v340
    %444 = vmatmul.bf16.gmra.mxu0 %v130
    %v445 = vpop.f32.mrf.mxu0
    %v446 = vadd.f32 %v184, %v445
    %v447 = vpop.f32.mrf.mxu0
    %v448 = vadd.f32 %v184, %v447
    %449 = vmatmul.bf16.gmra.mxu0 %v131
    %v450 = vpop.f32.mrf.mxu0
    %v451 = vadd.f32 %v184, %v450
    %v452 = vpop.f32.mrf.mxu0
    %v453 = vadd.f32 %v184, %v452
    %454 = vmatmul.bf16.gmra.mxu0 %v132
    %v455 = vpop.f32.mrf.mxu0
    %v456 = vadd.f32 %v184, %v455
    %v457 = vpop.f32.mrf.mxu0
    %v458 = vadd.f32 %v184, %v457
    %459 = vmatmul.bf16.gmra.mxu0 %v133
    %v460 = vpop.f32.mrf.mxu0
    %v461 = vadd.f32 %v184, %v460
    %v462 = vpop.f32.mrf.mxu0
    %v463 = vadd.f32 %v184, %v462
    %464 = vdwg.mxu0
    %465 = vmatpush.bf16.msra.mxu0 %v383
    %466 = vmatpush.bf16.msra.mxu0 %v377
    %467 = vmatpush.bf16.msra.mxu0 %v371
    %468 = vmatpush.bf16.msra.mxu0 %v365
    %469 = vmatpush.bf16.msra.mxu0 %v359
    %470 = vmatpush.bf16.msra.mxu0 %v353
    %471 = vmatpush.bf16.msra.mxu0 %v347
    %472 = vmatpush.bf16.msra.mxu0 %v341
    %473 = vmatmul.bf16.gmra.mxu0 %v130
    %v474 = vpop.f32.mrf.mxu0
    %v475 = vadd.f32 %v185, %v474
    %v476 = vpop.f32.mrf.mxu0
    %v477 = vadd.f32 %v185, %v476
    %478 = vmatmul.bf16.gmra.mxu0 %v131
    %v479 = vpop.f32.mrf.mxu0
    %v480 = vadd.f32 %v185, %v479
    %v481 = vpop.f32.mrf.mxu0
    %v482 = vadd.f32 %v185, %v481
    %483 = vmatmul.bf16.gmra.mxu0 %v132
    %v484 = vpop.f32.mrf.mxu0
    %v485 = vadd.f32 %v185, %v484
    %v486 = vpop.f32.mrf.mxu0
    %v487 = vadd.f32 %v185, %v486
    %488 = vmatmul.bf16.gmra.mxu0 %v133
    %v489 = vpop.f32.mrf.mxu0
    %v490 = vadd.f32 %v185, %v489
    %v491 = vpop.f32.mrf.mxu0
    %v492 = vadd.f32 %v185, %v491
    %493 = vdwg.mxu0
    %494 = vmatpush.bf16.msra.mxu0 %v384
    %495 = vmatpush.bf16.msra.mxu0 %v378
    %496 = vmatpush.bf16.msra.mxu0 %v372
    %497 = vmatpush.bf16.msra.mxu0 %v366
    %498 = vmatpush.bf16.msra.mxu0 %v360
    %499 = vmatpush.bf16.msra.mxu0 %v354
    %500 = vmatpush.bf16.msra.mxu0 %v348
    %501 = vmatpush.bf16.msra.mxu0 %v342
    %502 = vmatmul.bf16.gmra.mxu0 %v130
    %v503 = vpop.f32.mrf.mxu0
    %v504 = vadd.f32 %v186, %v503
    %v505 = vpop.f32.mrf.mxu0
    %v506 = vadd.f32 %v186, %v505
    %507 = vmatmul.bf16.gmra.mxu0 %v131
    %v508 = vpop.f32.mrf.mxu0
    %v509 = vadd.f32 %v186, %v508
    %v510 = vpop.f32.mrf.mxu0
    %v511 = vadd.f32 %v186, %v510
    %512 = vmatmul.bf16.gmra.mxu0 %v132
    %v513 = vpop.f32.mrf.mxu0
    %v514 = vadd.f32 %v186, %v513
    %v515 = vpop.f32.mrf.mxu0
    %v516 = vadd.f32 %v186, %v515
    %517 = vmatmul.bf16.gmra.mxu0 %v133
    %v518 = vpop.f32.mrf.mxu0
    %v519 = vadd.f32 %v186, %v518
    %v520 = vpop.f32.mrf.mxu0
    %v521 = vadd.f32 %v186, %v520
    %522 = vdwg.mxu0
    %523 = vmatpush.bf16.msra.mxu0 %v385
    %524 = vmatpush.bf16.msra.mxu0 %v379
    %525 = vmatpush.bf16.msra.mxu0 %v373
    %526 = vmatpush.bf16.msra.mxu0 %v367
    %527 = vmatpush.bf16.msra.mxu0 %v361
    %528 = vmatpush.bf16.msra.mxu0 %v355
    %529 = vmatpush.bf16.msra.mxu0 %v349
    %530 = vmatpush.bf16.msra.mxu0 %v343
    %531 = vmatmul.bf16.gmra.mxu0 %v130
    %v532 = vpop.f32.mrf.mxu0
    %v533 = vadd.f32 %v187, %v532
    %v534 = vpop.f32.mrf.mxu0
    %v535 = vadd.f32 %v187, %v534
    %536 = vmatmul.bf16.gmra.mxu0 %v131
    %v537 = vpop.f32.mrf.mxu0
    %v538 = vadd.f32 %v187, %v537
    %v539 = vpop.f32.mrf.mxu0
    %v540 = vadd.f32 %v187, %v539
    %541 = vmatmul.bf16.gmra.mxu0 %v132
    %v542 = vpop.f32.mrf.mxu0
    %v543 = vadd.f32 %v187, %v542
    %v544 = vpop.f32.mrf.mxu0
    %v545 = vadd.f32 %v187, %v544
    %546 = vmatmul.bf16.gmra.mxu0 %v133
    %v547 = vpop.f32.mrf.mxu0
    %v548 = vadd.f32 %v187, %v547
    %v549 = vpop.f32.mrf.mxu0
    %v550 = vadd.f32 %v187, %v549
    %551 = vdwg.mxu0
    %552 = vmatpush.bf16.msra.mxu0 %v386
    %553 = vmatpush.bf16.msra.mxu0 %v380
    %554 = vmatpush.bf16.msra.mxu0 %v374
    %555 = vmatpush.bf16.msra.mxu0 %v368
    %556 = vmatpush.bf16.msra.mxu0 %v362
    %557 = vmatpush.bf16.msra.mxu0 %v356
    %558 = vmatpush.bf16.msra.mxu0 %v350
    %559 = vmatpush.bf16.msra.mxu0 %v344
    %560 = vmatmul.bf16.gmra.mxu0 %v130
    %v561 = vpop.f32.mrf.mxu0
    %v562 = vadd.f32 %v188, %v561
    %v563 = vpop.f32.mrf.mxu0
    %v564 = vadd.f32 %v188, %v563
    %565 = vmatmul.bf16.gmra.mxu0 %v131
    %v566 = vpop.f32.mrf.mxu0
    %v567 = vadd.f32 %v188, %v566
    %v568 = vpop.f32.mrf.mxu0
    %v569 = vadd.f32 %v188, %v568
    %570 = vmatmul.bf16.gmra.mxu0 %v132
    %v571 = vpop.f32.mrf.mxu0
    %v572 = vadd.f32 %v188, %v571
    %v573 = vpop.f32.mrf.mxu0
    %v574 = vadd.f32 %v188, %v573
    %575 = vmatmul.bf16.gmra.mxu0 %v133
    %v576 = vpop.f32.mrf.mxu0
    %v577 = vadd.f32 %v188, %v576
    %v578 = vpop.f32.mrf.mxu0
    %v579 = vadd.f32 %v188, %v578
    %580 = vdwg.mxu0
    %581 = vmatpush.bf16.msra.mxu0 %v387
    %582 = vmatpush.bf16.msra.mxu0 %v381
    %583 = vmatpush.bf16.msra.mxu0 %v375
    %584 = vmatpush.bf16.msra.mxu0 %v369
    %585 = vmatpush.bf16.msra.mxu0 %v363
    %586 = vmatpush.bf16.msra.mxu0 %v357
    %587 = vmatpush.bf16.msra.mxu0 %v351
    %588 = vmatpush.bf16.msra.mxu0 %v345
    %589 = vmatmul.bf16.gmra.mxu0 %v130
    %v590 = vpop.f32.mrf.mxu0
    %v591 = vadd.f32 %v189, %v590
    %v592 = vpop.f32.mrf.mxu0
    %v593 = vadd.f32 %v189, %v592
    %594 = vmatmul.bf16.gmra.mxu0 %v131
    %v595 = vpop.f32.mrf.mxu0
    %v596 = vadd.f32 %v189, %v595
    %v597 = vpop.f32.mrf.mxu0
    %v598 = vadd.f32 %v189, %v597
    %599 = vmatmul.bf16.gmra.mxu0 %v132
    %v600 = vpop.f32.mrf.mxu0
    %v601 = vadd.f32 %v189, %v600
    %v602 = vpop.f32.mrf.mxu0
    %v603 = vadd.f32 %v189, %v602
    %604 = vmatmul.bf16.gmra.mxu0 %v133
    %v605 = vpop.f32.mrf.mxu0
    %v606 = vadd.f32 %v189, %v605
    %v607 = vpop.f32.mrf.mxu0
    %v608 = vadd.f32 %v189, %v607
    %609 = vdwg.mxu0
    %v610 = vld [vmem:[%s4] sm:$0xff]
    %v611 = vld [vmem:[%s4 + $0x8] sm:$0xf]
    %v612 = vld [vmem:[%s4 + $0xc] sm:$0xff]
    %v613 = vld [vmem:[%s4 + $0x14] sm:$0xf]
    %v614 = vld [vmem:[%s4 + $0x18] sm:$0xff]
    %v615 = vld [vmem:[%s4 + $0x20] sm:$0xf]
    %v616 = vld [vmem:[%s4 + $0x24] sm:$0xff]
    %v617 = vld [vmem:[%s4 + $0x2c] sm:$0xf]
    %v618 = vld [vmem:[%s4 + $0x30] sm:$0xff]
    %v619 = vld [vmem:[%s4 + $0x38] sm:$0xf]
    %v620 = vld [vmem:[%s4 + $0x3c] sm:$0xff]
    %v621 = vld [vmem:[%s4 + $0x44] sm:$0xf]
    %v622 = vld [vmem:[%s4 + $0x48] sm:$0xff]
    %v623 = vld [vmem:[%s4 + $0x50] sm:$0xf]
    %v624 = vld [vmem:[%s4 + $0x54] sm:$0xff]
    %v625 = vld [vmem:[%s4 + $0x5c] sm:$0xf]
    %v626 = vld [vmem:[%s4 + $0x60] sm:$0xff]
    %v627 = vld [vmem:[%s4 + $0x68] sm:$0xf]
    %v628 = vld [vmem:[%s4 + $0x6c] sm:$0xff]
    %v629 = vld [vmem:[%s4 + $0x74] sm:$0xf]
    %v630 = vld [vmem:[%s4 + $0x78] sm:$0xff]
    %v631 = vld [vmem:[%s4 + $0x80] sm:$0xf]
    %v632 = vld [vmem:[%s4 + $0x84] sm:$0xff]
    %v633 = vld [vmem:[%s4 + $0x8c] sm:$0xf]
    %v634 = vld [vmem:[%s4 + $0x90] sm:$0xff]
    %v635 = vld [vmem:[%s4 + $0x98] sm:$0xf]
    %v636 = vld [vmem:[%s4 + $0x9c] sm:$0xff]
    %v637 = vld [vmem:[%s4 + $0xa4] sm:$0xf]
    %v638 = vld [vmem:[%s4 + $0xa8] sm:$0xff]
    %v639 = vld [vmem:[%s4 + $0xb0] sm:$0xf]
    %v640 = vld [vmem:[%s4 + $0xb4] sm:$0xff]
    %v641 = vld [vmem:[%s4 + $0xbc] sm:$0xf]
    %v642 = vld [vmem:[#allocation5] sm:$0xff]
    %v643 = vld [vmem:[#allocation5 + $0x8] sm:$0xf]
    %v644 = vld [vmem:[#allocation5 + $0xc] sm:$0xff]
    %v645 = vld [vmem:[#allocation5 + $0x14] sm:$0xf]
    %v646 = vld [vmem:[#allocation5 + $0x18] sm:$0xff]
    %v647 = vld [vmem:[#allocation5 + $0x20] sm:$0xf]
    %v648 = vld [vmem:[#allocation5 + $0x24] sm:$0xff]
    %v649 = vld [vmem:[#allocation5 + $0x2c] sm:$0xf]
    %v650 = vld [vmem:[#allocation5 + $0x30] sm:$0xff]
    %v651 = vld [vmem:[#allocation5 + $0x38] sm:$0xf]
    %v652 = vld [vmem:[#allocation5 + $0x3c] sm:$0xff]
    %v653 = vld [vmem:[#allocation5 + $0x44] sm:$0xf]
    %v654 = vld [vmem:[#allocation5 + $0x48] sm:$0xff]
    %v655 = vld [vmem:[#allocation5 + $0x50] sm:$0xf]
    %v656 = vld [vmem:[#allocation5 + $0x54] sm:$0xff]
    %v657 = vld [vmem:[#allocation5 + $0x5c] sm:$0xf]
    %v658 = vld [vmem:[#allocation5 + $0x60] sm:$0xff]
    %v659 = vld [vmem:[#allocation5 + $0x68] sm:$0xf]
    %v660 = vld [vmem:[#allocation5 + $0x6c] sm:$0xff]
    %v661 = vld [vmem:[#allocation5 + $0x74] sm:$0xf]
    %v662 = vld [vmem:[#allocation5 + $0x78] sm:$0xff]
    %v663 = vld [vmem:[#allocation5 + $0x80] sm:$0xf]
    %v664 = vld [vmem:[#allocation5 + $0x84] sm:$0xff]
    %v665 = vld [vmem:[#allocation5 + $0x8c] sm:$0xf]
    %v666 = vld [vmem:[#allocation5 + $0x90] sm:$0xff]
    %v667 = vld [vmem:[#allocation5 + $0x98] sm:$0xf]
    %v668 = vld [vmem:[#allocation5 + $0x9c] sm:$0xff]
    %v669 = vld [vmem:[#allocation5 + $0xa4] sm:$0xf]
    %v670 = vld [vmem:[#allocation5 + $0xa8] sm:$0xff]
    %v671 = vld [vmem:[#allocation5 + $0xb0] sm:$0xf]
    %v672 = vld [vmem:[#allocation5 + $0xb4] sm:$0xff]
    %v673 = vld [vmem:[#allocation5 + $0xbc] sm:$0xf]
    %v674 = vld [vmem:[%s6] sm:$0x1]
    %v676 = vperm.slane %v674, 0
    %v678 = vld [vmem:[%s7] sm:$0x1]
    %v680 = vperm.slane %v678, 0
    %v682 = vld [vmem:[%s1] sm:$0xff]
    %v683 = vld [vmem:[%s1 + $0x8] sm:$0xff]
    %v684 = vld [vmem:[%s1 + $0x10] sm:$0xff]
    %v685 = vld [vmem:[%s1 + $0x18] sm:$0xff]
    %v686 = vld [vmem:[%s1 + $0x20] sm:$0xff]
    %v687 = vld [vmem:[%s1 + $0x28] sm:$0xff]
    %v688 = vld [vmem:[%s1 + $0x30] sm:$0xff]
    %v689 = vld [vmem:[%s1 + $0x38] sm:$0xff]
    %v722 = vunpack.c.l.b16 %v610
    %v723 = vunpack.c.h.b16 %v610
    %v724 = vunpack.c.l.b16 %v611
    %v725 = vunpack.c.l.b16 %v612
    %v726 = vunpack.c.h.b16 %v612
    %v727 = vunpack.c.l.b16 %v613
    %v728 = vunpack.c.l.b16 %v614
    %v729 = vunpack.c.h.b16 %v614
    %v730 = vunpack.c.l.b16 %v615
    %v731 = vunpack.c.l.b16 %v616
    %v732 = vunpack.c.h.b16 %v616
    %v733 = vunpack.c.l.b16 %v617
    %v734 = vunpack.c.l.b16 %v618
    %v735 = vunpack.c.h.b16 %v618
    %v736 = vunpack.c.l.b16 %v619
    %v737 = vunpack.c.l.b16 %v620
    %v738 = vunpack.c.h.b16 %v620
    %v739 = vunpack.c.l.b16 %v621
    %v740 = vunpack.c.l.b16 %v622
    %v741 = vunpack.c.h.b16 %v622
    %v742 = vunpack.c.l.b16 %v623
    %v743 = vunpack.c.l.b16 %v624
    %v744 = vunpack.c.h.b16 %v624
    %v745 = vunpack.c.l.b16 %v625
    %v746 = vunpack.c.l.b16 %v626
    %v747 = vunpack.c.h.b16 %v626
    %v748 = vunpack.c.l.b16 %v627
    %v749 = vunpack.c.l.b16 %v628
    %v750 = vunpack.c.h.b16 %v628
    %v751 = vunpack.c.l.b16 %v629
    %v752 = vunpack.c.l.b16 %v630
    %v753 = vunpack.c.h.b16 %v630
    %v754 = vunpack.c.l.b16 %v631
    %v755 = vunpack.c.l.b16 %v632
    %v756 = vunpack.c.h.b16 %v632
    %v757 = vunpack.c.l.b16 %v633
    %v758 = vunpack.c.l.b16 %v634
    %v759 = vunpack.c.h.b16 %v634
    %v760 = vunpack.c.l.b16 %v635
    %v761 = vunpack.c.l.b16 %v636
    %v762 = vunpack.c.h.b16 %v636
    %v763 = vunpack.c.l.b16 %v637
    %v764 = vunpack.c.l.b16 %v638
    %v765 = vunpack.c.h.b16 %v638
    %v766 = vunpack.c.l.b16 %v639
    %v767 = vunpack.c.l.b16 %v640
    %v768 = vunpack.c.h.b16 %v640
    %v769 = vunpack.c.l.b16 %v641
    %v770 = vpack.c.b16 %v725, %v722
    %v771 = vpack.c.b16 %v726, %v723
    %v772 = vpack.c.b16 %v727, %v724
    %v773 = vpack.c.b16 %v731, %v728
    %v774 = vpack.c.b16 %v732, %v729
    %v775 = vpack.c.b16 %v733, %v730
    %v776 = vpack.c.b16 %v737, %v734
    %v777 = vpack.c.b16 %v738, %v735
    %v778 = vpack.c.b16 %v739, %v736
    %v779 = vpack.c.b16 %v743, %v740
    %v780 = vpack.c.b16 %v744, %v741
    %v781 = vpack.c.b16 %v745, %v742
    %v782 = vpack.c.b16 %v749, %v746
    %v783 = vpack.c.b16 %v750, %v747
    %v784 = vpack.c.b16 %v751, %v748
    %v785 = vpack.c.b16 %v755, %v752
    %v786 = vpack.c.b16 %v756, %v753
    %v787 = vpack.c.b16 %v757, %v754
    %v788 = vpack.c.b16 %v761, %v758
    %v789 = vpack.c.b16 %v762, %v759
    %v790 = vpack.c.b16 %v763, %v760
    %v791 = vpack.c.b16 %v767, %v764
    %v792 = vpack.c.b16 %v768, %v765
    %v793 = vpack.c.b16 %v769, %v766
    %818 = vmatpush.bf16.msra.mxu0 %v791
    %819 = vmatpush.bf16.msra.mxu0 %v788
    %820 = vmatpush.bf16.msra.mxu0 %v785
    %821 = vmatpush.bf16.msra.mxu0 %v782
    %822 = vmatpush.bf16.msra.mxu0 %v779
    %823 = vmatpush.bf16.msra.mxu0 %v776
    %824 = vmatpush.bf16.msra.mxu0 %v773
    %825 = vmatpush.bf16.msra.mxu0 %v770
    %826 = vmatmul.bf16.gmra.mxu0 0
    %v827 = vpop.f32.mrf.mxu0
    %v828 = vadd.f32 0.0, %v827
    %v829 = vpop.f32.mrf.mxu0
    %830 = vdwg.mxu0
    %831 = vmatpush.bf16.msra.mxu0 %v792
    %832 = vmatpush.bf16.msra.mxu0 %v789
    %833 = vmatpush.bf16.msra.mxu0 %v786
    %834 = vmatpush.bf16.msra.mxu0 %v783
    %835 = vmatpush.bf16.msra.mxu0 %v780
    %836 = vmatpush.bf16.msra.mxu0 %v777
    %837 = vmatpush.bf16.msra.mxu0 %v774
    %838 = vmatpush.bf16.msra.mxu0 %v771
    %839 = vmatmul.bf16.gmra.mxu0 0
    %v840 = vpop.f32.mrf.mxu0
    %v841 = vadd.f32 0.0, %v840
    %v842 = vpop.f32.mrf.mxu0
    %843 = vdwg.mxu0
    %844 = vmatpush.bf16.msra.mxu0 %v793
    %845 = vmatpush.bf16.msra.mxu0 %v790
    %846 = vmatpush.bf16.msra.mxu0 %v787
    %847 = vmatpush.bf16.msra.mxu0 %v784
    %848 = vmatpush.bf16.msra.mxu0 %v781
    %849 = vmatpush.bf16.msra.mxu0 %v778
    %850 = vmatpush.bf16.msra.mxu0 %v775
    %851 = vmatpush.bf16.msra.mxu0 %v772
    %852 = vmatmul.bf16.gmra.mxu0 0
    %v853 = vpop.f32.mrf.mxu0
    %v854 = vadd.f32 0.0, %v853
    %v855 = vpop.f32.mrf.mxu0
    %856 = vdwg.mxu0
    %v857 = vadd.f32 %v446, %v828
    %v858 = vxor.u32 %v857, 2147483648
    %v859 = vmul.f32 %v858, 1.442695
    %v860 = vpow.pop %v859
    %v861 = vadd.f32 %v860, 1.0
    %v862 = vrcp.pop %v861
    %v863 = vmul.f32 %v861, %v862
    %v864 = vsub.f32 1.0, %v863
    %v865 = vmul.f32 %v862, %v864
    %v866 = vadd.f32 %v862, %v865
    %vm867 = vweird.f32 %v861
    %vm868 = vweird.f32 %v862
    %vm869 = vmor %vm867, %vm868
    %v870 = vsel %vm869, %v862, %v866
    %v871 = vand.u32 2147483647, %v861
    %vm872 = vcmp.eq.f32.partialorder %v871, 8.507059e+37
    %v873 = vand.u32 %v861, 2147483648
    %v874 = vor.u32 1.1754944e-38, %v873
    %v875 = vsel %vm872, %v874, %v870
    %v876 = vmul.f32 1.0, %v875
    %v877 = vadd.f32 %v475, %v841
    %v878 = vxor.u32 %v877, 2147483648
    %v879 = vmul.f32 %v878, 1.442695
    %v880 = vpow.pop %v879
    %v881 = vadd.f32 %v880, 1.0
    %v882 = vrcp.pop %v881
    %v883 = vmul.f32 %v881, %v882
    %v884 = vsub.f32 1.0, %v883
    %v885 = vmul.f32 %v882, %v884
    %v886 = vadd.f32 %v882, %v885
    %vm887 = vweird.f32 %v881
    %vm888 = vweird.f32 %v882
    %vm889 = vmor %vm887, %vm888
    %v890 = vsel %vm889, %v882, %v886
    %v891 = vand.u32 2147483647, %v881
    %vm892 = vcmp.eq.f32.partialorder %v891, 8.507059e+37
    %v893 = vand.u32 %v881, 2147483648
    %v894 = vor.u32 1.1754944e-38, %v893
    %v895 = vsel %vm892, %v894, %v890
    %v896 = vmul.f32 1.0, %v895
    %v897 = vadd.f32 %v854, %v676
    %v898 = vmul.f32 %v876, %v897
    %v899 = vadd.f32 %v504, %v898
    %v900 = vtanh.pop %v899
    %v901 = vsub.f32 1.0, %v896
    %v902 = vmul.f32 %v901, %v900
    %v903 = vmul.f32 %v896, 0.0
    %v904 = vadd.f32 %v902, %v903
    %v937 = vunpack.c.l.b16 %v642
    %v938 = vunpack.c.h.b16 %v642
    %v939 = vunpack.c.l.b16 %v643
    %v940 = vunpack.c.l.b16 %v644
    %v941 = vunpack.c.h.b16 %v644
    %v942 = vunpack.c.l.b16 %v645
    %v943 = vunpack.c.l.b16 %v646
    %v944 = vunpack.c.h.b16 %v646
    %v945 = vunpack.c.l.b16 %v647
    %v946 = vunpack.c.l.b16 %v648
    %v947 = vunpack.c.h.b16 %v648
    %v948 = vunpack.c.l.b16 %v649
    %v949 = vunpack.c.l.b16 %v650
    %v950 = vunpack.c.h.b16 %v650
    %v951 = vunpack.c.l.b16 %v651
    %v952 = vunpack.c.l.b16 %v652
    %v953 = vunpack.c.h.b16 %v652
    %v954 = vunpack.c.l.b16 %v653
    %v955 = vunpack.c.l.b16 %v654
    %v956 = vunpack.c.h.b16 %v654
    %v957 = vunpack.c.l.b16 %v655
    %v958 = vunpack.c.l.b16 %v656
    %v959 = vunpack.c.h.b16 %v656
    %v960 = vunpack.c.l.b16 %v657
    %v961 = vunpack.c.l.b16 %v658
    %v962 = vunpack.c.h.b16 %v658
    %v963 = vunpack.c.l.b16 %v659
    %v964 = vunpack.c.l.b16 %v660
    %v965 = vunpack.c.h.b16 %v660
    %v966 = vunpack.c.l.b16 %v661
    %v967 = vunpack.c.l.b16 %v662
    %v968 = vunpack.c.h.b16 %v662
    %v969 = vunpack.c.l.b16 %v663
    %v970 = vunpack.c.l.b16 %v664
    %v971 = vunpack.c.h.b16 %v664
    %v972 = vunpack.c.l.b16 %v665
    %v973 = vunpack.c.l.b16 %v666
    %v974 = vunpack.c.h.b16 %v666
    %v975 = vunpack.c.l.b16 %v667
    %v976 = vunpack.c.l.b16 %v668
    %v977 = vunpack.c.h.b16 %v668
    %v978 = vunpack.c.l.b16 %v669
    %v979 = vunpack.c.l.b16 %v670
    %v980 = vunpack.c.h.b16 %v670
    %v981 = vunpack.c.l.b16 %v671
    %v982 = vunpack.c.l.b16 %v672
    %v983 = vunpack.c.h.b16 %v672
    %v984 = vunpack.c.l.b16 %v673
    %v985 = vpack.c.b16 %v940, %v937
    %v986 = vpack.c.b16 %v941, %v938
    %v987 = vpack.c.b16 %v942, %v939
    %v988 = vpack.c.b16 %v946, %v943
    %v989 = vpack.c.b16 %v947, %v944
    %v990 = vpack.c.b16 %v948, %v945
    %v991 = vpack.c.b16 %v952, %v949
    %v992 = vpack.c.b16 %v953, %v950
    %v993 = vpack.c.b16 %v954, %v951
    %v994 = vpack.c.b16 %v958, %v955
    %v995 = vpack.c.b16 %v959, %v956
    %v996 = vpack.c.b16 %v960, %v957
    %v997 = vpack.c.b16 %v964, %v961
    %v998 = vpack.c.b16 %v965, %v962
    %v999 = vpack.c.b16 %v966, %v963
    %v1000 = vpack.c.b16 %v970, %v967
    %v1001 = vpack.c.b16 %v971, %v968
    %v1002 = vpack.c.b16 %v972, %v969
    %v1003 = vpack.c.b16 %v976, %v973
    %v1004 = vpack.c.b16 %v977, %v974
    %v1005 = vpack.c.b16 %v978, %v975
    %v1006 = vpack.c.b16 %v982, %v979
    %v1007 = vpack.c.b16 %v983, %v980
    %v1008 = vpack.c.b16 %v984, %v981
    %1033 = vmatpush.bf16.msra.mxu0 %v1006
    %1034 = vmatpush.bf16.msra.mxu0 %v1003
    %1035 = vmatpush.bf16.msra.mxu0 %v1000
    %1036 = vmatpush.bf16.msra.mxu0 %v997
    %1037 = vmatpush.bf16.msra.mxu0 %v994
    %1038 = vmatpush.bf16.msra.mxu0 %v991
    %1039 = vmatpush.bf16.msra.mxu0 %v988
    %1040 = vmatpush.bf16.msra.mxu0 %v985
    %1041 = vmatmul.bf16.gmra.mxu0 0
    %v1042 = vpop.f32.mrf.mxu0
    %v1043 = vadd.f32 0.0, %v1042
    %v1044 = vpop.f32.mrf.mxu0
    %1045 = vdwg.mxu0
    %1046 = vmatpush.bf16.msra.mxu0 %v1007
    %1047 = vmatpush.bf16.msra.mxu0 %v1004
    %1048 = vmatpush.bf16.msra.mxu0 %v1001
    %1049 = vmatpush.bf16.msra.mxu0 %v998
    %1050 = vmatpush.bf16.msra.mxu0 %v995
    %1051 = vmatpush.bf16.msra.mxu0 %v992
    %1052 = vmatpush.bf16.msra.mxu0 %v989
    %1053 = vmatpush.bf16.msra.mxu0 %v986
    %1054 = vmatmul.bf16.gmra.mxu0 0
    %v1055 = vpop.f32.mrf.mxu0
    %v1056 = vadd.f32 0.0, %v1055
    %v1057 = vpop.f32.mrf.mxu0
    %1058 = vdwg.mxu0
    %1059 = vmatpush.bf16.msra.mxu0 %v1008
    %1060 = vmatpush.bf16.msra.mxu0 %v1005
    %1061 = vmatpush.bf16.msra.mxu0 %v1002
    %1062 = vmatpush.bf16.msra.mxu0 %v999
    %1063 = vmatpush.bf16.msra.mxu0 %v996
    %1064 = vmatpush.bf16.msra.mxu0 %v993
    %1065 = vmatpush.bf16.msra.mxu0 %v990
    %1066 = vmatpush.bf16.msra.mxu0 %v987
    %1067 = vmatmul.bf16.gmra.mxu0 0
    %v1068 = vpop.f32.mrf.mxu0
    %v1069 = vadd.f32 0.0, %v1068
    %v1070 = vpop.f32.mrf.mxu0
    %1071 = vdwg.mxu0
    %v1072 = vadd.f32 %v550, %v1043
    %v1073 = vxor.u32 %v1072, 2147483648
    %v1074 = vmul.f32 %v1073, 1.442695
    %v1075 = vpow.pop %v1074
    %v1076 = vadd.f32 %v1075, 1.0
    %v1077 = vrcp.pop %v1076
    %v1078 = vmul.f32 %v1076, %v1077
    %v1079 = vsub.f32 1.0, %v1078
    %v1080 = vmul.f32 %v1077, %v1079
    %v1081 = vadd.f32 %v1077, %v1080
    %vm1082 = vweird.f32 %v1076
    %vm1083 = vweird.f32 %v1077
    %vm1084 = vmor %vm1082, %vm1083
    %v1085 = vsel %vm1084, %v1077, %v1081
    %v1086 = vand.u32 2147483647, %v1076
    %vm1087 = vcmp.eq.f32.partialorder %v1086, 8.507059e+37
    %v1088 = vand.u32 %v1076, 2147483648
    %v1089 = vor.u32 1.1754944e-38, %v1088
    %v1090 = vsel %vm1087, %v1089, %v1085
    %v1091 = vmul.f32 1.0, %v1090
    %v1092 = vadd.f32 %v579, %v1056
    %v1093 = vxor.u32 %v1092, 2147483648
    %v1094 = vmul.f32 %v1093, 1.442695
    %v1095 = vpow.pop %v1094
    %v1096 = vadd.f32 %v1095, 1.0
    %v1097 = vrcp.pop %v1096
    %v1098 = vmul.f32 %v1096, %v1097
    %v1099 = vsub.f32 1.0, %v1098
    %v1100 = vmul.f32 %v1097, %v1099
    %v1101 = vadd.f32 %v1097, %v1100
    %vm1102 = vweird.f32 %v1096
    %vm1103 = vweird.f32 %v1097
    %vm1104 = vmor %vm1102, %vm1103
    %v1105 = vsel %vm1104, %v1097, %v1101
    %v1106 = vand.u32 2147483647, %v1096
    %vm1107 = vcmp.eq.f32.partialorder %v1106, 8.507059e+37
    %v1108 = vand.u32 %v1096, 2147483648
    %v1109 = vor.u32 1.1754944e-38, %v1108
    %v1110 = vsel %vm1107, %v1109, %v1105
    %v1111 = vmul.f32 1.0, %v1110
    %v1112 = vadd.f32 %v1069, %v680
    %v1113 = vmul.f32 %v1091, %v1112
    %v1114 = vadd.f32 %v608, %v1113
    %v1115 = vtanh.pop %v1114
    %v1116 = vsub.f32 1.0, %v1111
    %v1117 = vmul.f32 %v1116, %v1115
    %v1118 = vmul.f32 %v1111, 0.0
    %v1119 = vadd.f32 %v1117, %v1118
    %1121 = vset.pattern.permute.xlu0 0
    %1122 = vperm.xlu0 %1121, %v682
    %v1123 = vpop.permute.xlu0 %1122
    %1126 = vset.pattern.permute.xlu0 0
    %1127 = vperm.xlu0 %1126, %v689
    %v1128 = vpop.permute.xlu0 %1127
    %v1130 = vmul.f32 %v1123, %v904
    %v1131 = vadd.f32 %v1130, 0.0
    %v1132 = vmul.f32 %v1128, %v1119
    %v1133 = vadd.f32 %v1132, 0.0
    %v1134 = vpack.c.bf16 %v1131, %v1131
    %1135 = vmatpush.bf16.msra.mxu0 %v791
    %1136 = vmatpush.bf16.msra.mxu0 %v788
    %1137 = vmatpush.bf16.msra.mxu0 %v785
    %1138 = vmatpush.bf16.msra.mxu0 %v782
    %1139 = vmatpush.bf16.msra.mxu0 %v779
    %1140 = vmatpush.bf16.msra.mxu0 %v776
    %1141 = vmatpush.bf16.msra.mxu0 %v773
    %1142 = vmatpush.bf16.msra.mxu0 %v770
    %1143 = vmatmul.bf16.gmra.mxu0 %v1134
    %v1144 = vpop.f32.mrf.mxu0
    %v1145 = vadd.f32 0.0, %v1144
    %v1146 = vpop.f32.mrf.mxu0
    %1147 = vdwg.mxu0
    %1148 = vmatpush.bf16.msra.mxu0 %v792
    %1149 = vmatpush.bf16.msra.mxu0 %v789
    %1150 = vmatpush.bf16.msra.mxu0 %v786
    %1151 = vmatpush.bf16.msra.mxu0 %v783
    %1152 = vmatpush.bf16.msra.mxu0 %v780
    %1153 = vmatpush.bf16.msra.mxu0 %v777
    %1154 = vmatpush.bf16.msra.mxu0 %v774
    %1155 = vmatpush.bf16.msra.mxu0 %v771
    %1156 = vmatmul.bf16.gmra.mxu0 %v1134
    %v1157 = vpop.f32.mrf.mxu0
    %v1158 = vadd.f32 0.0, %v1157
    %v1159 = vpop.f32.mrf.mxu0
    %1160 = vdwg.mxu0
    %1161 = vmatpush.bf16.msra.mxu0 %v793
    %1162 = vmatpush.bf16.msra.mxu0 %v790
    %1163 = vmatpush.bf16.msra.mxu0 %v787
    %1164 = vmatpush.bf16.msra.mxu0 %v784
    %1165 = vmatpush.bf16.msra.mxu0 %v781
    %1166 = vmatpush.bf16.msra.mxu0 %v778
    %1167 = vmatpush.bf16.msra.mxu0 %v775
    %1168 = vmatpush.bf16.msra.mxu0 %v772
    %1169 = vmatmul.bf16.gmra.mxu0 %v1134
    %v1170 = vpop.f32.mrf.mxu0
    %v1171 = vadd.f32 0.0, %v1170
    %v1172 = vpop.f32.mrf.mxu0
    %1173 = vdwg.mxu0
    %v1174 = vadd.f32 %v448, %v1145
    %v1175 = vxor.u32 %v1174, 2147483648
    %v1176 = vmul.f32 %v1175, 1.442695
    %v1177 = vpow.pop %v1176
    %v1178 = vadd.f32 %v1177, 1.0
    %v1179 = vrcp.pop %v1178
    %v1180 = vmul.f32 %v1178, %v1179
    %v1181 = vsub.f32 1.0, %v1180
    %v1182 = vmul.f32 %v1179, %v1181
    %v1183 = vadd.f32 %v1179, %v1182
    %vm1184 = vweird.f32 %v1178
    %vm1185 = vweird.f32 %v1179
    %vm1186 = vmor %vm1184, %vm1185
    %v1187 = vsel %vm1186, %v1179, %v1183
    %v1188 = vand.u32 2147483647, %v1178
    %vm1189 = vcmp.eq.f32.partialorder %v1188, 8.507059e+37
    %v1190 = vand.u32 %v1178, 2147483648
    %v1191 = vor.u32 1.1754944e-38, %v1190
    %v1192 = vsel %vm1189, %v1191, %v1187
    %v1193 = vmul.f32 1.0, %v1192
    %v1194 = vadd.f32 %v477, %v1158
    %v1195 = vxor.u32 %v1194, 2147483648
    %v1196 = vmul.f32 %v1195, 1.442695
    %v1197 = vpow.pop %v1196
    %v1198 = vadd.f32 %v1197, 1.0
    %v1199 = vrcp.pop %v1198
    %v1200 = vmul.f32 %v1198, %v1199
    %v1201 = vsub.f32 1.0, %v1200
    %v1202 = vmul.f32 %v1199, %v1201
    %v1203 = vadd.f32 %v1199, %v1202
    %vm1204 = vweird.f32 %v1198
    %vm1205 = vweird.f32 %v1199
    %vm1206 = vmor %vm1204, %vm1205
    %v1207 = vsel %vm1206, %v1199, %v1203
    %v1208 = vand.u32 2147483647, %v1198
    %vm1209 = vcmp.eq.f32.partialorder %v1208, 8.507059e+37
    %v1210 = vand.u32 %v1198, 2147483648
    %v1211 = vor.u32 1.1754944e-38, %v1210
    %v1212 = vsel %vm1209, %v1211, %v1207
    %v1213 = vmul.f32 1.0, %v1212
    %v1214 = vadd.f32 %v1171, %v676
    %v1215 = vmul.f32 %v1193, %v1214
    %v1216 = vadd.f32 %v506, %v1215
    %v1217 = vtanh.pop %v1216
    %v1218 = vsub.f32 1.0, %v1213
    %v1219 = vmul.f32 %v1218, %v1217
    %v1220 = vmul.f32 %v1213, %v1131
    %v1221 = vadd.f32 %v1219, %v1220
    %v1222 = vpack.c.bf16 %v1133, %v1133
    %1223 = vmatpush.bf16.msra.mxu0 %v1006
    %1224 = vmatpush.bf16.msra.mxu0 %v1003
    %1225 = vmatpush.bf16.msra.mxu0 %v1000
    %1226 = vmatpush.bf16.msra.mxu0 %v997
    %1227 = vmatpush.bf16.msra.mxu0 %v994
    %1228 = vmatpush.bf16.msra.mxu0 %v991
    %1229 = vmatpush.bf16.msra.mxu0 %v988
    %1230 = vmatpush.bf16.msra.mxu0 %v985
    %1231 = vmatmul.bf16.gmra.mxu0 %v1222
    %v1232 = vpop.f32.mrf.mxu0
    %v1233 = vadd.f32 0.0, %v1232
    %v1234 = vpop.f32.mrf.mxu0
    %1235 = vdwg.mxu0
    %1236 = vmatpush.bf16.msra.mxu0 %v1007
    %1237 = vmatpush.bf16.msra.mxu0 %v1004
    %1238 = vmatpush.bf16.msra.mxu0 %v1001
    %1239 = vmatpush.bf16.msra.mxu0 %v998
    %1240 = vmatpush.bf16.msra.mxu0 %v995
    %1241 = vmatpush.bf16.msra.mxu0 %v992
    %1242 = vmatpush.bf16.msra.mxu0 %v989
    %1243 = vmatpush.bf16.msra.mxu0 %v986
    %1244 = vmatmul.bf16.gmra.mxu0 %v1222
    %v1245 = vpop.f32.mrf.mxu0
    %v1246 = vadd.f32 0.0, %v1245
    %v1247 = vpop.f32.mrf.mxu0
    %1248 = vdwg.mxu0
    %1249 = vmatpush.bf16.msra.mxu0 %v1008
    %1250 = vmatpush.bf16.msra.mxu0 %v1005
    %1251 = vmatpush.bf16.msra.mxu0 %v1002
    %1252 = vmatpush.bf16.msra.mxu0 %v999
    %1253 = vmatpush.bf16.msra.mxu0 %v996
    %1254 = vmatpush.bf16.msra.mxu0 %v993
    %1255 = vmatpush.bf16.msra.mxu0 %v990
    %1256 = vmatpush.bf16.msra.mxu0 %v987
    %1257 = vmatmul.bf16.gmra.mxu0 %v1222
    %v1258 = vpop.f32.mrf.mxu0
    %v1259 = vadd.f32 0.0, %v1258
    %v1260 = vpop.f32.mrf.mxu0
    %1261 = vdwg.mxu0
    %v1262 = vadd.f32 %v548, %v1233
    %v1263 = vxor.u32 %v1262, 2147483648
    %v1264 = vmul.f32 %v1263, 1.442695
    %v1265 = vpow.pop %v1264
    %v1266 = vadd.f32 %v1265, 1.0
    %v1267 = vrcp.pop %v1266
    %v1268 = vmul.f32 %v1266, %v1267
    %v1269 = vsub.f32 1.0, %v1268
    %v1270 = vmul.f32 %v1267, %v1269
    %v1271 = vadd.f32 %v1267, %v1270
    %vm1272 = vweird.f32 %v1266
    %vm1273 = vweird.f32 %v1267
    %vm1274 = vmor %vm1272, %vm1273
    %v1275 = vsel %vm1274, %v1267, %v1271
    %v1276 = vand.u32 2147483647, %v1266
    %vm1277 = vcmp.eq.f32.partialorder %v1276, 8.507059e+37
    %v1278 = vand.u32 %v1266, 2147483648
    %v1279 = vor.u32 1.1754944e-38, %v1278
    %v1280 = vsel %vm1277, %v1279, %v1275
    %v1281 = vmul.f32 1.0, %v1280
    %v1282 = vadd.f32 %v577, %v1246
    %v1283 = vxor.u32 %v1282, 2147483648
    %v1284 = vmul.f32 %v1283, 1.442695
    %v1285 = vpow.pop %v1284
    %v1286 = vadd.f32 %v1285, 1.0
    %v1287 = vrcp.pop %v1286
    %v1288 = vmul.f32 %v1286, %v1287
    %v1289 = vsub.f32 1.0, %v1288
    %v1290 = vmul.f32 %v1287, %v1289
    %v1291 = vadd.f32 %v1287, %v1290
    %vm1292 = vweird.f32 %v1286
    %vm1293 = vweird.f32 %v1287
    %vm1294 = vmor %vm1292, %vm1293
    %v1295 = vsel %vm1294, %v1287, %v1291
    %v1296 = vand.u32 2147483647, %v1286
    %vm1297 = vcmp.eq.f32.partialorder %v1296, 8.507059e+37
    %v1298 = vand.u32 %v1286, 2147483648
    %v1299 = vor.u32 1.1754944e-38, %v1298
    %v1300 = vsel %vm1297, %v1299, %v1295
    %v1301 = vmul.f32 1.0, %v1300
    %v1302 = vadd.f32 %v1259, %v680
    %v1303 = vmul.f32 %v1281, %v1302
    %v1304 = vadd.f32 %v606, %v1303
    %v1305 = vtanh.pop %v1304
    %v1306 = vsub.f32 1.0, %v1301
    %v1307 = vmul.f32 %v1306, %v1305
    %v1308 = vmul.f32 %v1301, %v1133
    %v1309 = vadd.f32 %v1307, %v1308
    %1311 = vset.pattern.permute.xlu0 0
    %1312 = vperm.xlu0 %1311, %v683
    %v1313 = vpop.permute.xlu0 %1312
    %1316 = vset.pattern.permute.xlu0 0
    %1317 = vperm.xlu0 %1316, %v688
    %v1318 = vpop.permute.xlu0 %1317
    %v1320 = vsub.f32 %v1221, %v1131
    %v1321 = vmul.f32 %v1313, %v1320
    %v1322 = vadd.f32 %v1131, %v1321
    %v1323 = vsub.f32 %v1309, %v1133
    %v1324 = vmul.f32 %v1318, %v1323
    %v1325 = vadd.f32 %v1133, %v1324
    %v1326 = vpack.c.bf16 %v1322, %v1322
    %1327 = vmatpush.bf16.msra.mxu0 %v791
    %1328 = vmatpush.bf16.msra.mxu0 %v788
    %1329 = vmatpush.bf16.msra.mxu0 %v785
    %1330 = vmatpush.bf16.msra.mxu0 %v782
    %1331 = vmatpush.bf16.msra.mxu0 %v779
    %1332 = vmatpush.bf16.msra.mxu0 %v776
    %1333 = vmatpush.bf16.msra.mxu0 %v773
    %1334 = vmatpush.bf16.msra.mxu0 %v770
    %1335 = vmatmul.bf16.gmra.mxu0 %v1326
    %v1336 = vpop.f32.mrf.mxu0
    %v1337 = vadd.f32 0.0, %v1336
    %v1338 = vpop.f32.mrf.mxu0
    %1339 = vdwg.mxu0
    %1340 = vmatpush.bf16.msra.mxu0 %v792
    %1341 = vmatpush.bf16.msra.mxu0 %v789
    %1342 = vmatpush.bf16.msra.mxu0 %v786
    %1343 = vmatpush.bf16.msra.mxu0 %v783
    %1344 = vmatpush.bf16.msra.mxu0 %v780
    %1345 = vmatpush.bf16.msra.mxu0 %v777
    %1346 = vmatpush.bf16.msra.mxu0 %v774
    %1347 = vmatpush.bf16.msra.mxu0 %v771
    %1348 = vmatmul.bf16.gmra.mxu0 %v1326
    %v1349 = vpop.f32.mrf.mxu0
    %v1350 = vadd.f32 0.0, %v1349
    %v1351 = vpop.f32.mrf.mxu0
    %1352 = vdwg.mxu0
    %1353 = vmatpush.bf16.msra.mxu0 %v793
    %1354 = vmatpush.bf16.msra.mxu0 %v790
    %1355 = vmatpush.bf16.msra.mxu0 %v787
    %1356 = vmatpush.bf16.msra.mxu0 %v784
    %1357 = vmatpush.bf16.msra.mxu0 %v781
    %1358 = vmatpush.bf16.msra.mxu0 %v778
    %1359 = vmatpush.bf16.msra.mxu0 %v775
    %1360 = vmatpush.bf16.msra.mxu0 %v772
    %1361 = vmatmul.bf16.gmra.mxu0 %v1326
    %v1362 = vpop.f32.mrf.mxu0
    %v1363 = vadd.f32 0.0, %v1362
    %v1364 = vpop.f32.mrf.mxu0
    %1365 = vdwg.mxu0
    %v1366 = vadd.f32 %v451, %v1337
    %v1367 = vxor.u32 %v1366, 2147483648
    %v1368 = vmul.f32 %v1367, 1.442695
    %v1369 = vpow.pop %v1368
    %v1370 = vadd.f32 %v1369, 1.0
    %v1371 = vrcp.pop %v1370
    %v1372 = vmul.f32 %v1370, %v1371
    %v1373 = vsub.f32 1.0, %v1372
    %v1374 = vmul.f32 %v1371, %v1373
    %v1375 = vadd.f32 %v1371, %v1374
    %vm1376 = vweird.f32 %v1370
    %vm1377 = vweird.f32 %v1371
    %vm1378 = vmor %vm1376, %vm1377
    %v1379 = vsel %vm1378, %v1371, %v1375
    %v1380 = vand.u32 2147483647, %v1370
    %vm1381 = vcmp.eq.f32.partialorder %v1380, 8.507059e+37
    %v1382 = vand.u32 %v1370, 2147483648
    %v1383 = vor.u32 1.1754944e-38, %v1382
    %v1384 = vsel %vm1381, %v1383, %v1379
    %v1385 = vmul.f32 1.0, %v1384
    %v1386 = vadd.f32 %v480, %v1350
    %v1387 = vxor.u32 %v1386, 2147483648
    %v1388 = vmul.f32 %v1387, 1.442695
    %v1389 = vpow.pop %v1388
    %v1390 = vadd.f32 %v1389, 1.0
    %v1391 = vrcp.pop %v1390
    %v1392 = vmul.f32 %v1390, %v1391
    %v1393 = vsub.f32 1.0, %v1392
    %v1394 = vmul.f32 %v1391, %v1393
    %v1395 = vadd.f32 %v1391, %v1394
    %vm1396 = vweird.f32 %v1390
    %vm1397 = vweird.f32 %v1391
    %vm1398 = vmor %vm1396, %vm1397
    %v1399 = vsel %vm1398, %v1391, %v1395
    %v1400 = vand.u32 2147483647, %v1390
    %vm1401 = vcmp.eq.f32.partialorder %v1400, 8.507059e+37
    %v1402 = vand.u32 %v1390, 2147483648
    %v1403 = vor.u32 1.1754944e-38, %v1402
    %v1404 = vsel %vm1401, %v1403, %v1399
    %v1405 = vmul.f32 1.0, %v1404
    %v1406 = vadd.f32 %v1363, %v676
    %v1407 = vmul.f32 %v1385, %v1406
    %v1408 = vadd.f32 %v509, %v1407
    %v1409 = vtanh.pop %v1408
    %v1410 = vsub.f32 1.0, %v1405
    %v1411 = vmul.f32 %v1410, %v1409
    %v1412 = vmul.f32 %v1405, %v1322
    %v1413 = vadd.f32 %v1411, %v1412
    %v1414 = vpack.c.bf16 %v1325, %v1325
    %1415 = vmatpush.bf16.msra.mxu0 %v1006
    %1416 = vmatpush.bf16.msra.mxu0 %v1003
    %1417 = vmatpush.bf16.msra.mxu0 %v1000
    %1418 = vmatpush.bf16.msra.mxu0 %v997
    %1419 = vmatpush.bf16.msra.mxu0 %v994
    %1420 = vmatpush.bf16.msra.mxu0 %v991
    %1421 = vmatpush.bf16.msra.mxu0 %v988
    %1422 = vmatpush.bf16.msra.mxu0 %v985
    %1423 = vmatmul.bf16.gmra.mxu0 %v1414
    %v1424 = vpop.f32.mrf.mxu0
    %v1425 = vadd.f32 0.0, %v1424
    %v1426 = vpop.f32.mrf.mxu0
    %1427 = vdwg.mxu0
    %1428 = vmatpush.bf16.msra.mxu0 %v1007
    %1429 = vmatpush.bf16.msra.mxu0 %v1004
    %1430 = vmatpush.bf16.msra.mxu0 %v1001
    %1431 = vmatpush.bf16.msra.mxu0 %v998
    %1432 = vmatpush.bf16.msra.mxu0 %v995
    %1433 = vmatpush.bf16.msra.mxu0 %v992
    %1434 = vmatpush.bf16.msra.mxu0 %v989
    %1435 = vmatpush.bf16.msra.mxu0 %v986
    %1436 = vmatmul.bf16.gmra.mxu0 %v1414
    %v1437 = vpop.f32.mrf.mxu0
    %v1438 = vadd.f32 0.0, %v1437
    %v1439 = vpop.f32.mrf.mxu0
    %1440 = vdwg.mxu0
    %1441 = vmatpush.bf16.msra.mxu0 %v1008
    %1442 = vmatpush.bf16.msra.mxu0 %v1005
    %1443 = vmatpush.bf16.msra.mxu0 %v1002
    %1444 = vmatpush.bf16.msra.mxu0 %v999
    %1445 = vmatpush.bf16.msra.mxu0 %v996
    %1446 = vmatpush.bf16.msra.mxu0 %v993
    %1447 = vmatpush.bf16.msra.mxu0 %v990
    %1448 = vmatpush.bf16.msra.mxu0 %v987
    %1449 = vmatmul.bf16.gmra.mxu0 %v1414
    %v1450 = vpop.f32.mrf.mxu0
    %v1451 = vadd.f32 0.0, %v1450
    %v1452 = vpop.f32.mrf.mxu0
    %1453 = vdwg.mxu0
    %v1454 = vadd.f32 %v545, %v1425
    %v1455 = vxor.u32 %v1454, 2147483648
    %v1456 = vmul.f32 %v1455, 1.442695
    %v1457 = vpow.pop %v1456
    %v1458 = vadd.f32 %v1457, 1.0
    %v1459 = vrcp.pop %v1458
    %v1460 = vmul.f32 %v1458, %v1459
    %v1461 = vsub.f32 1.0, %v1460
    %v1462 = vmul.f32 %v1459, %v1461
    %v1463 = vadd.f32 %v1459, %v1462
    %vm1464 = vweird.f32 %v1458
    %vm1465 = vweird.f32 %v1459
    %vm1466 = vmor %vm1464, %vm1465
    %v1467 = vsel %vm1466, %v1459, %v1463
    %v1468 = vand.u32 2147483647, %v1458
    %vm1469 = vcmp.eq.f32.partialorder %v1468, 8.507059e+37
    %v1470 = vand.u32 %v1458, 2147483648
    %v1471 = vor.u32 1.1754944e-38, %v1470
    %v1472 = vsel %vm1469, %v1471, %v1467
    %v1473 = vmul.f32 1.0, %v1472
    %v1474 = vadd.f32 %v574, %v1438
    %v1475 = vxor.u32 %v1474, 2147483648
    %v1476 = vmul.f32 %v1475, 1.442695
    %v1477 = vpow.pop %v1476
    %v1478 = vadd.f32 %v1477, 1.0
    %v1479 = vrcp.pop %v1478
    %v1480 = vmul.f32 %v1478, %v1479
    %v1481 = vsub.f32 1.0, %v1480
    %v1482 = vmul.f32 %v1479, %v1481
    %v1483 = vadd.f32 %v1479, %v1482
    %vm1484 = vweird.f32 %v1478
    %vm1485 = vweird.f32 %v1479
    %vm1486 = vmor %vm1484, %vm1485
    %v1487 = vsel %vm1486, %v1479, %v1483
    %v1488 = vand.u32 2147483647, %v1478
    %vm1489 = vcmp.eq.f32.partialorder %v1488, 8.507059e+37
    %v1490 = vand.u32 %v1478, 2147483648
    %v1491 = vor.u32 1.1754944e-38, %v1490
    %v1492 = vsel %vm1489, %v1491, %v1487
    %v1493 = vmul.f32 1.0, %v1492
    %v1494 = vadd.f32 %v1451, %v680
    %v1495 = vmul.f32 %v1473, %v1494
    %v1496 = vadd.f32 %v603, %v1495
    %v1497 = vtanh.pop %v1496
    %v1498 = vsub.f32 1.0, %v1493
    %v1499 = vmul.f32 %v1498, %v1497
    %v1500 = vmul.f32 %v1493, %v1325
    %v1501 = vadd.f32 %v1499, %v1500
    %1503 = vset.pattern.permute.xlu0 0
    %1504 = vperm.xlu0 %1503, %v684
    %v1505 = vpop.permute.xlu0 %1504
    %1508 = vset.pattern.permute.xlu0 0
    %1509 = vperm.xlu0 %1508, %v687
    %v1510 = vpop.permute.xlu0 %1509
    %v1512 = vsub.f32 %v1413, %v1322
    %v1513 = vmul.f32 %v1505, %v1512
    %v1514 = vadd.f32 %v1322, %v1513
    %v1515 = vsub.f32 %v1501, %v1325
    %v1516 = vmul.f32 %v1510, %v1515
    %v1517 = vadd.f32 %v1325, %v1516
    %v1518 = vpack.c.bf16 %v1514, %v1514
    %1519 = vmatpush.bf16.msra.mxu0 %v791
    %1520 = vmatpush.bf16.msra.mxu0 %v788
    %1521 = vmatpush.bf16.msra.mxu0 %v785
    %1522 = vmatpush.bf16.msra.mxu0 %v782
    %1523 = vmatpush.bf16.msra.mxu0 %v779
    %1524 = vmatpush.bf16.msra.mxu0 %v776
    %1525 = vmatpush.bf16.msra.mxu0 %v773
    %1526 = vmatpush.bf16.msra.mxu0 %v770
    %1527 = vmatmul.bf16.gmra.mxu0 %v1518
    %v1528 = vpop.f32.mrf.mxu0
    %v1529 = vadd.f32 0.0, %v1528
    %v1530 = vpop.f32.mrf.mxu0
    %1531 = vdwg.mxu0
    %1532 = vmatpush.bf16.msra.mxu0 %v792
    %1533 = vmatpush.bf16.msra.mxu0 %v789
    %1534 = vmatpush.bf16.msra.mxu0 %v786
    %1535 = vmatpush.bf16.msra.mxu0 %v783
    %1536 = vmatpush.bf16.msra.mxu0 %v780
    %1537 = vmatpush.bf16.msra.mxu0 %v777
    %1538 = vmatpush.bf16.msra.mxu0 %v774
    %1539 = vmatpush.bf16.msra.mxu0 %v771
    %1540 = vmatmul.bf16.gmra.mxu0 %v1518
    %v1541 = vpop.f32.mrf.mxu0
    %v1542 = vadd.f32 0.0, %v1541
    %v1543 = vpop.f32.mrf.mxu0
    %1544 = vdwg.mxu0
    %1545 = vmatpush.bf16.msra.mxu0 %v793
    %1546 = vmatpush.bf16.msra.mxu0 %v790
    %1547 = vmatpush.bf16.msra.mxu0 %v787
    %1548 = vmatpush.bf16.msra.mxu0 %v784
    %1549 = vmatpush.bf16.msra.mxu0 %v781
    %1550 = vmatpush.bf16.msra.mxu0 %v778
    %1551 = vmatpush.bf16.msra.mxu0 %v775
    %1552 = vmatpush.bf16.msra.mxu0 %v772
    %1553 = vmatmul.bf16.gmra.mxu0 %v1518
    %v1554 = vpop.f32.mrf.mxu0
    %v1555 = vadd.f32 0.0, %v1554
    %v1556 = vpop.f32.mrf.mxu0
    %1557 = vdwg.mxu0
    %v1558 = vadd.f32 %v453, %v1529
    %v1559 = vxor.u32 %v1558, 2147483648
    %v1560 = vmul.f32 %v1559, 1.442695
    %v1561 = vpow.pop %v1560
    %v1562 = vadd.f32 %v1561, 1.0
    %v1563 = vrcp.pop %v1562
    %v1564 = vmul.f32 %v1562, %v1563
    %v1565 = vsub.f32 1.0, %v1564
    %v1566 = vmul.f32 %v1563, %v1565
    %v1567 = vadd.f32 %v1563, %v1566
    %vm1568 = vweird.f32 %v1562
    %vm1569 = vweird.f32 %v1563
    %vm1570 = vmor %vm1568, %vm1569
    %v1571 = vsel %vm1570, %v1563, %v1567
    %v1572 = vand.u32 2147483647, %v1562
    %vm1573 = vcmp.eq.f32.partialorder %v1572, 8.507059e+37
    %v1574 = vand.u32 %v1562, 2147483648
    %v1575 = vor.u32 1.1754944e-38, %v1574
    %v1576 = vsel %vm1573, %v1575, %v1571
    %v1577 = vmul.f32 1.0, %v1576
    %v1578 = vadd.f32 %v482, %v1542
    %v1579 = vxor.u32 %v1578, 2147483648
    %v1580 = vmul.f32 %v1579, 1.442695
    %v1581 = vpow.pop %v1580
    %v1582 = vadd.f32 %v1581, 1.0
    %v1583 = vrcp.pop %v1582
    %v1584 = vmul.f32 %v1582, %v1583
    %v1585 = vsub.f32 1.0, %v1584
    %v1586 = vmul.f32 %v1583, %v1585
    %v1587 = vadd.f32 %v1583, %v1586
    %vm1588 = vweird.f32 %v1582
    %vm1589 = vweird.f32 %v1583
    %vm1590 = vmor %vm1588, %vm1589
    %v1591 = vsel %vm1590, %v1583, %v1587
    %v1592 = vand.u32 2147483647, %v1582
    %vm1593 = vcmp.eq.f32.partialorder %v1592, 8.507059e+37
    %v1594 = vand.u32 %v1582, 2147483648
    %v1595 = vor.u32 1.1754944e-38, %v1594
    %v1596 = vsel %vm1593, %v1595, %v1591
    %v1597 = vmul.f32 1.0, %v1596
    %v1598 = vadd.f32 %v1555, %v676
    %v1599 = vmul.f32 %v1577, %v1598
    %v1600 = vadd.f32 %v511, %v1599
    %v1601 = vtanh.pop %v1600
    %v1602 = vsub.f32 1.0, %v1597
    %v1603 = vmul.f32 %v1602, %v1601
    %v1604 = vmul.f32 %v1597, %v1514
    %v1605 = vadd.f32 %v1603, %v1604
    %v1606 = vpack.c.bf16 %v1517, %v1517
    %1607 = vmatpush.bf16.msra.mxu0 %v1006
    %1608 = vmatpush.bf16.msra.mxu0 %v1003
    %1609 = vmatpush.bf16.msra.mxu0 %v1000
    %1610 = vmatpush.bf16.msra.mxu0 %v997
    %1611 = vmatpush.bf16.msra.mxu0 %v994
    %1612 = vmatpush.bf16.msra.mxu0 %v991
    %1613 = vmatpush.bf16.msra.mxu0 %v988
    %1614 = vmatpush.bf16.msra.mxu0 %v985
    %1615 = vmatmul.bf16.gmra.mxu0 %v1606
    %v1616 = vpop.f32.mrf.mxu0
    %v1617 = vadd.f32 0.0, %v1616
    %v1618 = vpop.f32.mrf.mxu0
    %1619 = vdwg.mxu0
    %1620 = vmatpush.bf16.msra.mxu0 %v1007
    %1621 = vmatpush.bf16.msra.mxu0 %v1004
    %1622 = vmatpush.bf16.msra.mxu0 %v1001
    %1623 = vmatpush.bf16.msra.mxu0 %v998
    %1624 = vmatpush.bf16.msra.mxu0 %v995
    %1625 = vmatpush.bf16.msra.mxu0 %v992
    %1626 = vmatpush.bf16.msra.mxu0 %v989
    %1627 = vmatpush.bf16.msra.mxu0 %v986
    %1628 = vmatmul.bf16.gmra.mxu0 %v1606
    %v1629 = vpop.f32.mrf.mxu0
    %v1630 = vadd.f32 0.0, %v1629
    %v1631 = vpop.f32.mrf.mxu0
    %1632 = vdwg.mxu0
    %1633 = vmatpush.bf16.msra.mxu0 %v1008
    %1634 = vmatpush.bf16.msra.mxu0 %v1005
    %1635 = vmatpush.bf16.msra.mxu0 %v1002
    %1636 = vmatpush.bf16.msra.mxu0 %v999
    %1637 = vmatpush.bf16.msra.mxu0 %v996
    %1638 = vmatpush.bf16.msra.mxu0 %v993
    %1639 = vmatpush.bf16.msra.mxu0 %v990
    %1640 = vmatpush.bf16.msra.mxu0 %v987
    %1641 = vmatmul.bf16.gmra.mxu0 %v1606
    %v1642 = vpop.f32.mrf.mxu0
    %v1643 = vadd.f32 0.0, %v1642
    %v1644 = vpop.f32.mrf.mxu0
    %1645 = vdwg.mxu0
    %v1646 = vadd.f32 %v543, %v1617
    %v1647 = vxor.u32 %v1646, 2147483648
    %v1648 = vmul.f32 %v1647, 1.442695
    %v1649 = vpow.pop %v1648
    %v1650 = vadd.f32 %v1649, 1.0
    %v1651 = vrcp.pop %v1650
    %v1652 = vmul.f32 %v1650, %v1651
    %v1653 = vsub.f32 1.0, %v1652
    %v1654 = vmul.f32 %v1651, %v1653
    %v1655 = vadd.f32 %v1651, %v1654
    %vm1656 = vweird.f32 %v1650
    %vm1657 = vweird.f32 %v1651
    %vm1658 = vmor %vm1656, %vm1657
    %v1659 = vsel %vm1658, %v1651, %v1655
    %v1660 = vand.u32 2147483647, %v1650
    %vm1661 = vcmp.eq.f32.partialorder %v1660, 8.507059e+37
    %v1662 = vand.u32 %v1650, 2147483648
    %v1663 = vor.u32 1.1754944e-38, %v1662
    %v1664 = vsel %vm1661, %v1663, %v1659
    %v1665 = vmul.f32 1.0, %v1664
    %v1666 = vadd.f32 %v572, %v1630
    %v1667 = vxor.u32 %v1666, 2147483648
    %v1668 = vmul.f32 %v1667, 1.442695
    %v1669 = vpow.pop %v1668
    %v1670 = vadd.f32 %v1669, 1.0
    %v1671 = vrcp.pop %v1670
    %v1672 = vmul.f32 %v1670, %v1671
    %v1673 = vsub.f32 1.0, %v1672
    %v1674 = vmul.f32 %v1671, %v1673
    %v1675 = vadd.f32 %v1671, %v1674
    %vm1676 = vweird.f32 %v1670
    %vm1677 = vweird.f32 %v1671
    %vm1678 = vmor %vm1676, %vm1677
    %v1679 = vsel %vm1678, %v1671, %v1675
    %v1680 = vand.u32 2147483647, %v1670
    %vm1681 = vcmp.eq.f32.partialorder %v1680, 8.507059e+37
    %v1682 = vand.u32 %v1670, 2147483648
    %v1683 = vor.u32 1.1754944e-38, %v1682
    %v1684 = vsel %vm1681, %v1683, %v1679
    %v1685 = vmul.f32 1.0, %v1684
    %v1686 = vadd.f32 %v1643, %v680
    %v1687 = vmul.f32 %v1665, %v1686
    %v1688 = vadd.f32 %v601, %v1687
    %v1689 = vtanh.pop %v1688
    %v1690 = vsub.f32 1.0, %v1685
    %v1691 = vmul.f32 %v1690, %v1689
    %v1692 = vmul.f32 %v1685, %v1517
    %v1693 = vadd.f32 %v1691, %v1692
    %1695 = vset.pattern.permute.xlu0 0
    %1696 = vperm.xlu0 %1695, %v685
    %v1697 = vpop.permute.xlu0 %1696
    %1700 = vset.pattern.permute.xlu0 0
    %1701 = vperm.xlu0 %1700, %v686
    %v1702 = vpop.permute.xlu0 %1701
    %v1704 = vsub.f32 %v1605, %v1514
    %v1705 = vmul.f32 %v1697, %v1704
    %v1706 = vadd.f32 %v1514, %v1705
    %v1707 = vsub.f32 %v1693, %v1517
    %v1708 = vmul.f32 %v1702, %v1707
    %v1709 = vadd.f32 %v1517, %v1708
    %v1710 = vpack.c.bf16 %v1706, %v1706
    %1711 = vmatpush.bf16.msra.mxu0 %v791
    %1712 = vmatpush.bf16.msra.mxu0 %v788
    %1713 = vmatpush.bf16.msra.mxu0 %v785
    %1714 = vmatpush.bf16.msra.mxu0 %v782
    %1715 = vmatpush.bf16.msra.mxu0 %v779
    %1716 = vmatpush.bf16.msra.mxu0 %v776
    %1717 = vmatpush.bf16.msra.mxu0 %v773
    %1718 = vmatpush.bf16.msra.mxu0 %v770
    %1719 = vmatmul.bf16.gmra.mxu0 %v1710
    %v1720 = vpop.f32.mrf.mxu0
    %v1721 = vadd.f32 0.0, %v1720
    %v1722 = vpop.f32.mrf.mxu0
    %1723 = vdwg.mxu0
    %1724 = vmatpush.bf16.msra.mxu0 %v792
    %1725 = vmatpush.bf16.msra.mxu0 %v789
    %1726 = vmatpush.bf16.msra.mxu0 %v786
    %1727 = vmatpush.bf16.msra.mxu0 %v783
    %1728 = vmatpush.bf16.msra.mxu0 %v780
    %1729 = vmatpush.bf16.msra.mxu0 %v777
    %1730 = vmatpush.bf16.msra.mxu0 %v774
    %1731 = vmatpush.bf16.msra.mxu0 %v771
    %1732 = vmatmul.bf16.gmra.mxu0 %v1710
    %v1733 = vpop.f32.mrf.mxu0
    %v1734 = vadd.f32 0.0, %v1733
    %v1735 = vpop.f32.mrf.mxu0
    %1736 = vdwg.mxu0
    %1737 = vmatpush.bf16.msra.mxu0 %v793
    %1738 = vmatpush.bf16.msra.mxu0 %v790
    %1739 = vmatpush.bf16.msra.mxu0 %v787
    %1740 = vmatpush.bf16.msra.mxu0 %v784
    %1741 = vmatpush.bf16.msra.mxu0 %v781
    %1742 = vmatpush.bf16.msra.mxu0 %v778
    %1743 = vmatpush.bf16.msra.mxu0 %v775
    %1744 = vmatpush.bf16.msra.mxu0 %v772
    %1745 = vmatmul.bf16.gmra.mxu0 %v1710
    %v1746 = vpop.f32.mrf.mxu0
    %v1747 = vadd.f32 0.0, %v1746
    %v1748 = vpop.f32.mrf.mxu0
    %1749 = vdwg.mxu0
    %v1750 = vadd.f32 %v456, %v1721
    %v1751 = vxor.u32 %v1750, 2147483648
    %v1752 = vmul.f32 %v1751, 1.442695
    %v1753 = vpow.pop %v1752
    %v1754 = vadd.f32 %v1753, 1.0
    %v1755 = vrcp.pop %v1754
    %v1756 = vmul.f32 %v1754, %v1755
    %v1757 = vsub.f32 1.0, %v1756
    %v1758 = vmul.f32 %v1755, %v1757
    %v1759 = vadd.f32 %v1755, %v1758
    %vm1760 = vweird.f32 %v1754
    %vm1761 = vweird.f32 %v1755
    %vm1762 = vmor %vm1760, %vm1761
    %v1763 = vsel %vm1762, %v1755, %v1759
    %v1764 = vand.u32 2147483647, %v1754
    %vm1765 = vcmp.eq.f32.partialorder %v1764, 8.507059e+37
    %v1766 = vand.u32 %v1754, 2147483648
    %v1767 = vor.u32 1.1754944e-38, %v1766
    %v1768 = vsel %vm1765, %v1767, %v1763
    %v1769 = vmul.f32 1.0, %v1768
    %v1770 = vadd.f32 %v485, %v1734
    %v1771 = vxor.u32 %v1770, 2147483648
    %v1772 = vmul.f32 %v1771, 1.442695
    %v1773 = vpow.pop %v1772
    %v1774 = vadd.f32 %v1773, 1.0
    %v1775 = vrcp.pop %v1774
    %v1776 = vmul.f32 %v1774, %v1775
    %v1777 = vsub.f32 1.0, %v1776
    %v1778 = vmul.f32 %v1775, %v1777
    %v1779 = vadd.f32 %v1775, %v1778
    %vm1780 = vweird.f32 %v1774
    %vm1781 = vweird.f32 %v1775
    %vm1782 = vmor %vm1780, %vm1781
    %v1783 = vsel %vm1782, %v1775, %v1779
    %v1784 = vand.u32 2147483647, %v1774
    %vm1785 = vcmp.eq.f32.partialorder %v1784, 8.507059e+37
    %v1786 = vand.u32 %v1774, 2147483648
    %v1787 = vor.u32 1.1754944e-38, %v1786
    %v1788 = vsel %vm1785, %v1787, %v1783
    %v1789 = vmul.f32 1.0, %v1788
    %v1790 = vadd.f32 %v1747, %v676
    %v1791 = vmul.f32 %v1769, %v1790
    %v1792 = vadd.f32 %v514, %v1791
    %v1793 = vtanh.pop %v1792
    %v1794 = vsub.f32 1.0, %v1789
    %v1795 = vmul.f32 %v1794, %v1793
    %v1796 = vmul.f32 %v1789, %v1706
    %v1797 = vadd.f32 %v1795, %v1796
    %v1798 = vpack.c.bf16 %v1709, %v1709
    %1799 = vmatpush.bf16.msra.mxu0 %v1006
    %1800 = vmatpush.bf16.msra.mxu0 %v1003
    %1801 = vmatpush.bf16.msra.mxu0 %v1000
    %1802 = vmatpush.bf16.msra.mxu0 %v997
    %1803 = vmatpush.bf16.msra.mxu0 %v994
    %1804 = vmatpush.bf16.msra.mxu0 %v991
    %1805 = vmatpush.bf16.msra.mxu0 %v988
    %1806 = vmatpush.bf16.msra.mxu0 %v985
    %1807 = vmatmul.bf16.gmra.mxu0 %v1798
    %v1808 = vpop.f32.mrf.mxu0
    %v1809 = vadd.f32 0.0, %v1808
    %v1810 = vpop.f32.mrf.mxu0
    %1811 = vdwg.mxu0
    %1812 = vmatpush.bf16.msra.mxu0 %v1007
    %1813 = vmatpush.bf16.msra.mxu0 %v1004
    %1814 = vmatpush.bf16.msra.mxu0 %v1001
    %1815 = vmatpush.bf16.msra.mxu0 %v998
    %1816 = vmatpush.bf16.msra.mxu0 %v995
    %1817 = vmatpush.bf16.msra.mxu0 %v992
    %1818 = vmatpush.bf16.msra.mxu0 %v989
    %1819 = vmatpush.bf16.msra.mxu0 %v986
    %1820 = vmatmul.bf16.gmra.mxu0 %v1798
    %v1821 = vpop.f32.mrf.mxu0
    %v1822 = vadd.f32 0.0, %v1821
    %v1823 = vpop.f32.mrf.mxu0
    %1824 = vdwg.mxu0
    %1825 = vmatpush.bf16.msra.mxu0 %v1008
    %1826 = vmatpush.bf16.msra.mxu0 %v1005
    %1827 = vmatpush.bf16.msra.mxu0 %v1002
    %1828 = vmatpush.bf16.msra.mxu0 %v999
    %1829 = vmatpush.bf16.msra.mxu0 %v996
    %1830 = vmatpush.bf16.msra.mxu0 %v993
    %1831 = vmatpush.bf16.msra.mxu0 %v990
    %1832 = vmatpush.bf16.msra.mxu0 %v987
    %1833 = vmatmul.bf16.gmra.mxu0 %v1798
    %v1834 = vpop.f32.mrf.mxu0
    %v1835 = vadd.f32 0.0, %v1834
    %v1836 = vpop.f32.mrf.mxu0
    %1837 = vdwg.mxu0
    %v1838 = vadd.f32 %v540, %v1809
    %v1839 = vxor.u32 %v1838, 2147483648
    %v1840 = vmul.f32 %v1839, 1.442695
    %v1841 = vpow.pop %v1840
    %v1842 = vadd.f32 %v1841, 1.0
    %v1843 = vrcp.pop %v1842
    %v1844 = vmul.f32 %v1842, %v1843
    %v1845 = vsub.f32 1.0, %v1844
    %v1846 = vmul.f32 %v1843, %v1845
    %v1847 = vadd.f32 %v1843, %v1846
    %vm1848 = vweird.f32 %v1842
    %vm1849 = vweird.f32 %v1843
    %vm1850 = vmor %vm1848, %vm1849
    %v1851 = vsel %vm1850, %v1843, %v1847
    %v1852 = vand.u32 2147483647, %v1842
    %vm1853 = vcmp.eq.f32.partialorder %v1852, 8.507059e+37
    %v1854 = vand.u32 %v1842, 2147483648
    %v1855 = vor.u32 1.1754944e-38, %v1854
    %v1856 = vsel %vm1853, %v1855, %v1851
    %v1857 = vmul.f32 1.0, %v1856
    %v1858 = vadd.f32 %v569, %v1822
    %v1859 = vxor.u32 %v1858, 2147483648
    %v1860 = vmul.f32 %v1859, 1.442695
    %v1861 = vpow.pop %v1860
    %v1862 = vadd.f32 %v1861, 1.0
    %v1863 = vrcp.pop %v1862
    %v1864 = vmul.f32 %v1862, %v1863
    %v1865 = vsub.f32 1.0, %v1864
    %v1866 = vmul.f32 %v1863, %v1865
    %v1867 = vadd.f32 %v1863, %v1866
    %vm1868 = vweird.f32 %v1862
    %vm1869 = vweird.f32 %v1863
    %vm1870 = vmor %vm1868, %vm1869
    %v1871 = vsel %vm1870, %v1863, %v1867
    %v1872 = vand.u32 2147483647, %v1862
    %vm1873 = vcmp.eq.f32.partialorder %v1872, 8.507059e+37
    %v1874 = vand.u32 %v1862, 2147483648
    %v1875 = vor.u32 1.1754944e-38, %v1874
    %v1876 = vsel %vm1873, %v1875, %v1871
    %v1877 = vmul.f32 1.0, %v1876
    %v1878 = vadd.f32 %v1835, %v680
    %v1879 = vmul.f32 %v1857, %v1878
    %v1880 = vadd.f32 %v598, %v1879
    %v1881 = vtanh.pop %v1880
    %v1882 = vsub.f32 1.0, %v1877
    %v1883 = vmul.f32 %v1882, %v1881
    %v1884 = vmul.f32 %v1877, %v1709
    %v1885 = vadd.f32 %v1883, %v1884
    %v1886 = vsub.f32 %v1797, %v1706
    %v1887 = vmul.f32 %v1702, %v1886
    %v1888 = vadd.f32 %v1706, %v1887
    %v1889 = vsub.f32 %v1885, %v1709
    %v1890 = vmul.f32 %v1697, %v1889
    %v1891 = vadd.f32 %v1709, %v1890
    %v1892 = vpack.c.bf16 %v1888, %v1888
    %1893 = vmatpush.bf16.msra.mxu0 %v791
    %1894 = vmatpush.bf16.msra.mxu0 %v788
    %1895 = vmatpush.bf16.msra.mxu0 %v785
    %1896 = vmatpush.bf16.msra.mxu0 %v782
    %1897 = vmatpush.bf16.msra.mxu0 %v779
    %1898 = vmatpush.bf16.msra.mxu0 %v776
    %1899 = vmatpush.bf16.msra.mxu0 %v773
    %1900 = vmatpush.bf16.msra.mxu0 %v770
    %1901 = vmatmul.bf16.gmra.mxu0 %v1892
    %v1902 = vpop.f32.mrf.mxu0
    %v1903 = vadd.f32 0.0, %v1902
    %v1904 = vpop.f32.mrf.mxu0
    %1905 = vdwg.mxu0
    %1906 = vmatpush.bf16.msra.mxu0 %v792
    %1907 = vmatpush.bf16.msra.mxu0 %v789
    %1908 = vmatpush.bf16.msra.mxu0 %v786
    %1909 = vmatpush.bf16.msra.mxu0 %v783
    %1910 = vmatpush.bf16.msra.mxu0 %v780
    %1911 = vmatpush.bf16.msra.mxu0 %v777
    %1912 = vmatpush.bf16.msra.mxu0 %v774
    %1913 = vmatpush.bf16.msra.mxu0 %v771
    %1914 = vmatmul.bf16.gmra.mxu0 %v1892
    %v1915 = vpop.f32.mrf.mxu0
    %v1916 = vadd.f32 0.0, %v1915
    %v1917 = vpop.f32.mrf.mxu0
    %1918 = vdwg.mxu0
    %1919 = vmatpush.bf16.msra.mxu0 %v793
    %1920 = vmatpush.bf16.msra.mxu0 %v790
    %1921 = vmatpush.bf16.msra.mxu0 %v787
    %1922 = vmatpush.bf16.msra.mxu0 %v784
    %1923 = vmatpush.bf16.msra.mxu0 %v781
    %1924 = vmatpush.bf16.msra.mxu0 %v778
    %1925 = vmatpush.bf16.msra.mxu0 %v775
    %1926 = vmatpush.bf16.msra.mxu0 %v772
    %1927 = vmatmul.bf16.gmra.mxu0 %v1892
    %v1928 = vpop.f32.mrf.mxu0
    %v1929 = vadd.f32 0.0, %v1928
    %v1930 = vpop.f32.mrf.mxu0
    %1931 = vdwg.mxu0
    %v1932 = vadd.f32 %v458, %v1903
    %v1933 = vxor.u32 %v1932, 2147483648
    %v1934 = vmul.f32 %v1933, 1.442695
    %v1935 = vpow.pop %v1934
    %v1936 = vadd.f32 %v1935, 1.0
    %v1937 = vrcp.pop %v1936
    %v1938 = vmul.f32 %v1936, %v1937
    %v1939 = vsub.f32 1.0, %v1938
    %v1940 = vmul.f32 %v1937, %v1939
    %v1941 = vadd.f32 %v1937, %v1940
    %vm1942 = vweird.f32 %v1936
    %vm1943 = vweird.f32 %v1937
    %vm1944 = vmor %vm1942, %vm1943
    %v1945 = vsel %vm1944, %v1937, %v1941
    %v1946 = vand.u32 2147483647, %v1936
    %vm1947 = vcmp.eq.f32.partialorder %v1946, 8.507059e+37
    %v1948 = vand.u32 %v1936, 2147483648
    %v1949 = vor.u32 1.1754944e-38, %v1948
    %v1950 = vsel %vm1947, %v1949, %v1945
    %v1951 = vmul.f32 1.0, %v1950
    %v1952 = vadd.f32 %v487, %v1916
    %v1953 = vxor.u32 %v1952, 2147483648
    %v1954 = vmul.f32 %v1953, 1.442695
    %v1955 = vpow.pop %v1954
    %v1956 = vadd.f32 %v1955, 1.0
    %v1957 = vrcp.pop %v1956
    %v1958 = vmul.f32 %v1956, %v1957
    %v1959 = vsub.f32 1.0, %v1958
    %v1960 = vmul.f32 %v1957, %v1959
    %v1961 = vadd.f32 %v1957, %v1960
    %vm1962 = vweird.f32 %v1956
    %vm1963 = vweird.f32 %v1957
    %vm1964 = vmor %vm1962, %vm1963
    %v1965 = vsel %vm1964, %v1957, %v1961
    %v1966 = vand.u32 2147483647, %v1956
    %vm1967 = vcmp.eq.f32.partialorder %v1966, 8.507059e+37
    %v1968 = vand.u32 %v1956, 2147483648
    %v1969 = vor.u32 1.1754944e-38, %v1968
    %v1970 = vsel %vm1967, %v1969, %v1965
    %v1971 = vmul.f32 1.0, %v1970
    %v1972 = vadd.f32 %v1929, %v676
    %v1973 = vmul.f32 %v1951, %v1972
    %v1974 = vadd.f32 %v516, %v1973
    %v1975 = vtanh.pop %v1974
    %v1976 = vsub.f32 1.0, %v1971
    %v1977 = vmul.f32 %v1976, %v1975
    %v1978 = vmul.f32 %v1971, %v1888
    %v1979 = vadd.f32 %v1977, %v1978
    %v1980 = vpack.c.bf16 %v1891, %v1891
    %1981 = vmatpush.bf16.msra.mxu0 %v1006
    %1982 = vmatpush.bf16.msra.mxu0 %v1003
    %1983 = vmatpush.bf16.msra.mxu0 %v1000
    %1984 = vmatpush.bf16.msra.mxu0 %v997
    %1985 = vmatpush.bf16.msra.mxu0 %v994
    %1986 = vmatpush.bf16.msra.mxu0 %v991
    %1987 = vmatpush.bf16.msra.mxu0 %v988
    %1988 = vmatpush.bf16.msra.mxu0 %v985
    %1989 = vmatmul.bf16.gmra.mxu0 %v1980
    %v1990 = vpop.f32.mrf.mxu0
    %v1991 = vadd.f32 0.0, %v1990
    %v1992 = vpop.f32.mrf.mxu0
    %1993 = vdwg.mxu0
    %1994 = vmatpush.bf16.msra.mxu0 %v1007
    %1995 = vmatpush.bf16.msra.mxu0 %v1004
    %1996 = vmatpush.bf16.msra.mxu0 %v1001
    %1997 = vmatpush.bf16.msra.mxu0 %v998
    %1998 = vmatpush.bf16.msra.mxu0 %v995
    %1999 = vmatpush.bf16.msra.mxu0 %v992
    %2000 = vmatpush.bf16.msra.mxu0 %v989
    %2001 = vmatpush.bf16.msra.mxu0 %v986
    %2002 = vmatmul.bf16.gmra.mxu0 %v1980
    %v2003 = vpop.f32.mrf.mxu0
    %v2004 = vadd.f32 0.0, %v2003
    %v2005 = vpop.f32.mrf.mxu0
    %2006 = vdwg.mxu0
    %2007 = vmatpush.bf16.msra.mxu0 %v1008
    %2008 = vmatpush.bf16.msra.mxu0 %v1005
    %2009 = vmatpush.bf16.msra.mxu0 %v1002
    %2010 = vmatpush.bf16.msra.mxu0 %v999
    %2011 = vmatpush.bf16.msra.mxu0 %v996
    %2012 = vmatpush.bf16.msra.mxu0 %v993
    %2013 = vmatpush.bf16.msra.mxu0 %v990
    %2014 = vmatpush.bf16.msra.mxu0 %v987
    %2015 = vmatmul.bf16.gmra.mxu0 %v1980
    %v2016 = vpop.f32.mrf.mxu0
    %v2017 = vadd.f32 0.0, %v2016
    %v2018 = vpop.f32.mrf.mxu0
    %2019 = vdwg.mxu0
    %v2020 = vadd.f32 %v538, %v1991
    %v2021 = vxor.u32 %v2020, 2147483648
    %v2022 = vmul.f32 %v2021, 1.442695
    %v2023 = vpow.pop %v2022
    %v2024 = vadd.f32 %v2023, 1.0
    %v2025 = vrcp.pop %v2024
    %v2026 = vmul.f32 %v2024, %v2025
    %v2027 = vsub.f32 1.0, %v2026
    %v2028 = vmul.f32 %v2025, %v2027
    %v2029 = vadd.f32 %v2025, %v2028
    %vm2030 = vweird.f32 %v2024
    %vm2031 = vweird.f32 %v2025
    %vm2032 = vmor %vm2030, %vm2031
    %v2033 = vsel %vm2032, %v2025, %v2029
    %v2034 = vand.u32 2147483647, %v2024
    %vm2035 = vcmp.eq.f32.partialorder %v2034, 8.507059e+37
    %v2036 = vand.u32 %v2024, 2147483648
    %v2037 = vor.u32 1.1754944e-38, %v2036
    %v2038 = vsel %vm2035, %v2037, %v2033
    %v2039 = vmul.f32 1.0, %v2038
    %v2040 = vadd.f32 %v567, %v2004
    %v2041 = vxor.u32 %v2040, 2147483648
    %v2042 = vmul.f32 %v2041, 1.442695
    %v2043 = vpow.pop %v2042
    %v2044 = vadd.f32 %v2043, 1.0
    %v2045 = vrcp.pop %v2044
    %v2046 = vmul.f32 %v2044, %v2045
    %v2047 = vsub.f32 1.0, %v2046
    %v2048 = vmul.f32 %v2045, %v2047
    %v2049 = vadd.f32 %v2045, %v2048
    %vm2050 = vweird.f32 %v2044
    %vm2051 = vweird.f32 %v2045
    %vm2052 = vmor %vm2050, %vm2051
    %v2053 = vsel %vm2052, %v2045, %v2049
    %v2054 = vand.u32 2147483647, %v2044
    %vm2055 = vcmp.eq.f32.partialorder %v2054, 8.507059e+37
    %v2056 = vand.u32 %v2044, 2147483648
    %v2057 = vor.u32 1.1754944e-38, %v2056
    %v2058 = vsel %vm2055, %v2057, %v2053
    %v2059 = vmul.f32 1.0, %v2058
    %v2060 = vadd.f32 %v2017, %v680
    %v2061 = vmul.f32 %v2039, %v2060
    %v2062 = vadd.f32 %v596, %v2061
    %v2063 = vtanh.pop %v2062
    %v2064 = vsub.f32 1.0, %v2059
    %v2065 = vmul.f32 %v2064, %v2063
    %v2066 = vmul.f32 %v2059, %v1891
    %v2067 = vadd.f32 %v2065, %v2066
    %v2068 = vsub.f32 %v1979, %v1888
    %v2069 = vmul.f32 %v1510, %v2068
    %v2070 = vadd.f32 %v1888, %v2069
    %v2071 = vsub.f32 %v2067, %v1891
    %v2072 = vmul.f32 %v1505, %v2071
    %v2073 = vadd.f32 %v1891, %v2072
    %v2074 = vpack.c.bf16 %v2070, %v2070
    %2075 = vmatpush.bf16.msra.mxu0 %v791
    %2076 = vmatpush.bf16.msra.mxu0 %v788
    %2077 = vmatpush.bf16.msra.mxu0 %v785
    %2078 = vmatpush.bf16.msra.mxu0 %v782
    %2079 = vmatpush.bf16.msra.mxu0 %v779
    %2080 = vmatpush.bf16.msra.mxu0 %v776
    %2081 = vmatpush.bf16.msra.mxu0 %v773
    %2082 = vmatpush.bf16.msra.mxu0 %v770
    %2083 = vmatmul.bf16.gmra.mxu0 %v2074
    %v2084 = vpop.f32.mrf.mxu0
    %v2085 = vadd.f32 0.0, %v2084
    %v2086 = vpop.f32.mrf.mxu0
    %2087 = vdwg.mxu0
    %2088 = vmatpush.bf16.msra.mxu0 %v792
    %2089 = vmatpush.bf16.msra.mxu0 %v789
    %2090 = vmatpush.bf16.msra.mxu0 %v786
    %2091 = vmatpush.bf16.msra.mxu0 %v783
    %2092 = vmatpush.bf16.msra.mxu0 %v780
    %2093 = vmatpush.bf16.msra.mxu0 %v777
    %2094 = vmatpush.bf16.msra.mxu0 %v774
    %2095 = vmatpush.bf16.msra.mxu0 %v771
    %2096 = vmatmul.bf16.gmra.mxu0 %v2074
    %v2097 = vpop.f32.mrf.mxu0
    %v2098 = vadd.f32 0.0, %v2097
    %v2099 = vpop.f32.mrf.mxu0
    %2100 = vdwg.mxu0
    %2101 = vmatpush.bf16.msra.mxu0 %v793
    %2102 = vmatpush.bf16.msra.mxu0 %v790
    %2103 = vmatpush.bf16.msra.mxu0 %v787
    %2104 = vmatpush.bf16.msra.mxu0 %v784
    %2105 = vmatpush.bf16.msra.mxu0 %v781
    %2106 = vmatpush.bf16.msra.mxu0 %v778
    %2107 = vmatpush.bf16.msra.mxu0 %v775
    %2108 = vmatpush.bf16.msra.mxu0 %v772
    %2109 = vmatmul.bf16.gmra.mxu0 %v2074
    %v2110 = vpop.f32.mrf.mxu0
    %v2111 = vadd.f32 0.0, %v2110
    %v2112 = vpop.f32.mrf.mxu0
    %2113 = vdwg.mxu0
    %v2114 = vadd.f32 %v461, %v2085
    %v2115 = vxor.u32 %v2114, 2147483648
    %v2116 = vmul.f32 %v2115, 1.442695
    %v2117 = vpow.pop %v2116
    %v2118 = vadd.f32 %v2117, 1.0
    %v2119 = vrcp.pop %v2118
    %v2120 = vmul.f32 %v2118, %v2119
    %v2121 = vsub.f32 1.0, %v2120
    %v2122 = vmul.f32 %v2119, %v2121
    %v2123 = vadd.f32 %v2119, %v2122
    %vm2124 = vweird.f32 %v2118
    %vm2125 = vweird.f32 %v2119
    %vm2126 = vmor %vm2124, %vm2125
    %v2127 = vsel %vm2126, %v2119, %v2123
    %v2128 = vand.u32 2147483647, %v2118
    %vm2129 = vcmp.eq.f32.partialorder %v2128, 8.507059e+37
    %v2130 = vand.u32 %v2118, 2147483648
    %v2131 = vor.u32 1.1754944e-38, %v2130
    %v2132 = vsel %vm2129, %v2131, %v2127
    %v2133 = vmul.f32 1.0, %v2132
    %v2134 = vadd.f32 %v490, %v2098
    %v2135 = vxor.u32 %v2134, 2147483648
    %v2136 = vmul.f32 %v2135, 1.442695
    %v2137 = vpow.pop %v2136
    %v2138 = vadd.f32 %v2137, 1.0
    %v2139 = vrcp.pop %v2138
    %v2140 = vmul.f32 %v2138, %v2139
    %v2141 = vsub.f32 1.0, %v2140
    %v2142 = vmul.f32 %v2139, %v2141
    %v2143 = vadd.f32 %v2139, %v2142
    %vm2144 = vweird.f32 %v2138
    %vm2145 = vweird.f32 %v2139
    %vm2146 = vmor %vm2144, %vm2145
    %v2147 = vsel %vm2146, %v2139, %v2143
    %v2148 = vand.u32 2147483647, %v2138
    %vm2149 = vcmp.eq.f32.partialorder %v2148, 8.507059e+37
    %v2150 = vand.u32 %v2138, 2147483648
    %v2151 = vor.u32 1.1754944e-38, %v2150
    %v2152 = vsel %vm2149, %v2151, %v2147
    %v2153 = vmul.f32 1.0, %v2152
    %v2154 = vadd.f32 %v2111, %v676
    %v2155 = vmul.f32 %v2133, %v2154
    %v2156 = vadd.f32 %v519, %v2155
    %v2157 = vtanh.pop %v2156
    %v2158 = vsub.f32 1.0, %v2153
    %v2159 = vmul.f32 %v2158, %v2157
    %v2160 = vmul.f32 %v2153, %v2070
    %v2161 = vadd.f32 %v2159, %v2160
    %v2162 = vpack.c.bf16 %v2073, %v2073
    %2163 = vmatpush.bf16.msra.mxu0 %v1006
    %2164 = vmatpush.bf16.msra.mxu0 %v1003
    %2165 = vmatpush.bf16.msra.mxu0 %v1000
    %2166 = vmatpush.bf16.msra.mxu0 %v997
    %2167 = vmatpush.bf16.msra.mxu0 %v994
    %2168 = vmatpush.bf16.msra.mxu0 %v991
    %2169 = vmatpush.bf16.msra.mxu0 %v988
    %2170 = vmatpush.bf16.msra.mxu0 %v985
    %2171 = vmatmul.bf16.gmra.mxu0 %v2162
    %v2172 = vpop.f32.mrf.mxu0
    %v2173 = vadd.f32 0.0, %v2172
    %v2174 = vpop.f32.mrf.mxu0
    %2175 = vdwg.mxu0
    %2176 = vmatpush.bf16.msra.mxu0 %v1007
    %2177 = vmatpush.bf16.msra.mxu0 %v1004
    %2178 = vmatpush.bf16.msra.mxu0 %v1001
    %2179 = vmatpush.bf16.msra.mxu0 %v998
    %2180 = vmatpush.bf16.msra.mxu0 %v995
    %2181 = vmatpush.bf16.msra.mxu0 %v992
    %2182 = vmatpush.bf16.msra.mxu0 %v989
    %2183 = vmatpush.bf16.msra.mxu0 %v986
    %2184 = vmatmul.bf16.gmra.mxu0 %v2162
    %v2185 = vpop.f32.mrf.mxu0
    %v2186 = vadd.f32 0.0, %v2185
    %v2187 = vpop.f32.mrf.mxu0
    %2188 = vdwg.mxu0
    %2189 = vmatpush.bf16.msra.mxu0 %v1008
    %2190 = vmatpush.bf16.msra.mxu0 %v1005
    %2191 = vmatpush.bf16.msra.mxu0 %v1002
    %2192 = vmatpush.bf16.msra.mxu0 %v999
    %2193 = vmatpush.bf16.msra.mxu0 %v996
    %2194 = vmatpush.bf16.msra.mxu0 %v993
    %2195 = vmatpush.bf16.msra.mxu0 %v990
    %2196 = vmatpush.bf16.msra.mxu0 %v987
    %2197 = vmatmul.bf16.gmra.mxu0 %v2162
    %v2198 = vpop.f32.mrf.mxu0
    %v2199 = vadd.f32 0.0, %v2198
    %v2200 = vpop.f32.mrf.mxu0
    %2201 = vdwg.mxu0
    %v2202 = vadd.f32 %v535, %v2173
    %v2203 = vxor.u32 %v2202, 2147483648
    %v2204 = vmul.f32 %v2203, 1.442695
    %v2205 = vpow.pop %v2204
    %v2206 = vadd.f32 %v2205, 1.0
    %v2207 = vrcp.pop %v2206
    %v2208 = vmul.f32 %v2206, %v2207
    %v2209 = vsub.f32 1.0, %v2208
    %v2210 = vmul.f32 %v2207, %v2209
    %v2211 = vadd.f32 %v2207, %v2210
    %vm2212 = vweird.f32 %v2206
    %vm2213 = vweird.f32 %v2207
    %vm2214 = vmor %vm2212, %vm2213
    %v2215 = vsel %vm2214, %v2207, %v2211
    %v2216 = vand.u32 2147483647, %v2206
    %vm2217 = vcmp.eq.f32.partialorder %v2216, 8.507059e+37
    %v2218 = vand.u32 %v2206, 2147483648
    %v2219 = vor.u32 1.1754944e-38, %v2218
    %v2220 = vsel %vm2217, %v2219, %v2215
    %v2221 = vmul.f32 1.0, %v2220
    %v2222 = vadd.f32 %v564, %v2186
    %v2223 = vxor.u32 %v2222, 2147483648
    %v2224 = vmul.f32 %v2223, 1.442695
    %v2225 = vpow.pop %v2224
    %v2226 = vadd.f32 %v2225, 1.0
    %v2227 = vrcp.pop %v2226
    %v2228 = vmul.f32 %v2226, %v2227
    %v2229 = vsub.f32 1.0, %v2228
    %v2230 = vmul.f32 %v2227, %v2229
    %v2231 = vadd.f32 %v2227, %v2230
    %vm2232 = vweird.f32 %v2226
    %vm2233 = vweird.f32 %v2227
    %vm2234 = vmor %vm2232, %vm2233
    %v2235 = vsel %vm2234, %v2227, %v2231
    %v2236 = vand.u32 2147483647, %v2226
    %vm2237 = vcmp.eq.f32.partialorder %v2236, 8.507059e+37
    %v2238 = vand.u32 %v2226, 2147483648
    %v2239 = vor.u32 1.1754944e-38, %v2238
    %v2240 = vsel %vm2237, %v2239, %v2235
    %v2241 = vmul.f32 1.0, %v2240
    %v2242 = vadd.f32 %v2199, %v680
    %v2243 = vmul.f32 %v2221, %v2242
    %v2244 = vadd.f32 %v593, %v2243
    %v2245 = vtanh.pop %v2244
    %v2246 = vsub.f32 1.0, %v2241
    %v2247 = vmul.f32 %v2246, %v2245
    %v2248 = vmul.f32 %v2241, %v2073
    %v2249 = vadd.f32 %v2247, %v2248
    %v2250 = vsub.f32 %v2161, %v2070
    %v2251 = vmul.f32 %v1318, %v2250
    %v2252 = vadd.f32 %v2070, %v2251
    %v2253 = vsub.f32 %v2249, %v2073
    %v2254 = vmul.f32 %v1313, %v2253
    %v2255 = vadd.f32 %v2073, %v2254
    %v2256 = vpack.c.bf16 %v2252, %v2252
    %2257 = vmatpush.bf16.msra.mxu0 %v791
    %2258 = vmatpush.bf16.msra.mxu0 %v788
    %2259 = vmatpush.bf16.msra.mxu0 %v785
    %2260 = vmatpush.bf16.msra.mxu0 %v782
    %2261 = vmatpush.bf16.msra.mxu0 %v779
    %2262 = vmatpush.bf16.msra.mxu0 %v776
    %2263 = vmatpush.bf16.msra.mxu0 %v773
    %2264 = vmatpush.bf16.msra.mxu0 %v770
    %2265 = vmatmul.bf16.gmra.mxu0 %v2256
    %v2266 = vpop.f32.mrf.mxu0
    %v2267 = vadd.f32 0.0, %v2266
    %v2268 = vpop.f32.mrf.mxu0
    %2269 = vdwg.mxu0
    %2270 = vmatpush.bf16.msra.mxu0 %v792
    %2271 = vmatpush.bf16.msra.mxu0 %v789
    %2272 = vmatpush.bf16.msra.mxu0 %v786
    %2273 = vmatpush.bf16.msra.mxu0 %v783
    %2274 = vmatpush.bf16.msra.mxu0 %v780
    %2275 = vmatpush.bf16.msra.mxu0 %v777
    %2276 = vmatpush.bf16.msra.mxu0 %v774
    %2277 = vmatpush.bf16.msra.mxu0 %v771
    %2278 = vmatmul.bf16.gmra.mxu0 %v2256
    %v2279 = vpop.f32.mrf.mxu0
    %v2280 = vadd.f32 0.0, %v2279
    %v2281 = vpop.f32.mrf.mxu0
    %2282 = vdwg.mxu0
    %2283 = vmatpush.bf16.msra.mxu0 %v793
    %2284 = vmatpush.bf16.msra.mxu0 %v790
    %2285 = vmatpush.bf16.msra.mxu0 %v787
    %2286 = vmatpush.bf16.msra.mxu0 %v784
    %2287 = vmatpush.bf16.msra.mxu0 %v781
    %2288 = vmatpush.bf16.msra.mxu0 %v778
    %2289 = vmatpush.bf16.msra.mxu0 %v775
    %2290 = vmatpush.bf16.msra.mxu0 %v772
    %2291 = vmatmul.bf16.gmra.mxu0 %v2256
    %v2292 = vpop.f32.mrf.mxu0
    %v2293 = vadd.f32 0.0, %v2292
    %v2294 = vpop.f32.mrf.mxu0
    %2295 = vdwg.mxu0
    %v2296 = vadd.f32 %v463, %v2267
    %v2297 = vxor.u32 %v2296, 2147483648
    %v2298 = vmul.f32 %v2297, 1.442695
    %v2299 = vpow.pop %v2298
    %v2300 = vadd.f32 %v2299, 1.0
    %v2301 = vrcp.pop %v2300
    %v2302 = vmul.f32 %v2300, %v2301
    %v2303 = vsub.f32 1.0, %v2302
    %v2304 = vmul.f32 %v2301, %v2303
    %v2305 = vadd.f32 %v2301, %v2304
    %vm2306 = vweird.f32 %v2300
    %vm2307 = vweird.f32 %v2301
    %vm2308 = vmor %vm2306, %vm2307
    %v2309 = vsel %vm2308, %v2301, %v2305
    %v2310 = vand.u32 2147483647, %v2300
    %vm2311 = vcmp.eq.f32.partialorder %v2310, 8.507059e+37
    %v2312 = vand.u32 %v2300, 2147483648
    %v2313 = vor.u32 1.1754944e-38, %v2312
    %v2314 = vsel %vm2311, %v2313, %v2309
    %v2315 = vmul.f32 1.0, %v2314
    %v2316 = vadd.f32 %v492, %v2280
    %v2317 = vxor.u32 %v2316, 2147483648
    %v2318 = vmul.f32 %v2317, 1.442695
    %v2319 = vpow.pop %v2318
    %v2320 = vadd.f32 %v2319, 1.0
    %v2321 = vrcp.pop %v2320
    %v2322 = vmul.f32 %v2320, %v2321
    %v2323 = vsub.f32 1.0, %v2322
    %v2324 = vmul.f32 %v2321, %v2323
    %v2325 = vadd.f32 %v2321, %v2324
    %vm2326 = vweird.f32 %v2320
    %vm2327 = vweird.f32 %v2321
    %vm2328 = vmor %vm2326, %vm2327
    %v2329 = vsel %vm2328, %v2321, %v2325
    %v2330 = vand.u32 2147483647, %v2320
    %vm2331 = vcmp.eq.f32.partialorder %v2330, 8.507059e+37
    %v2332 = vand.u32 %v2320, 2147483648
    %v2333 = vor.u32 1.1754944e-38, %v2332
    %v2334 = vsel %vm2331, %v2333, %v2329
    %v2335 = vmul.f32 1.0, %v2334
    %v2336 = vadd.f32 %v2293, %v676
    %v2337 = vmul.f32 %v2315, %v2336
    %v2338 = vadd.f32 %v521, %v2337
    %v2339 = vtanh.pop %v2338
    %v2340 = vsub.f32 1.0, %v2335
    %v2341 = vmul.f32 %v2340, %v2339
    %v2342 = vmul.f32 %v2335, %v2252
    %v2343 = vadd.f32 %v2341, %v2342
    %v2344 = vpack.c.bf16 %v2255, %v2255
    %2345 = vmatpush.bf16.msra.mxu0 %v1006
    %2346 = vmatpush.bf16.msra.mxu0 %v1003
    %2347 = vmatpush.bf16.msra.mxu0 %v1000
    %2348 = vmatpush.bf16.msra.mxu0 %v997
    %2349 = vmatpush.bf16.msra.mxu0 %v994
    %2350 = vmatpush.bf16.msra.mxu0 %v991
    %2351 = vmatpush.bf16.msra.mxu0 %v988
    %2352 = vmatpush.bf16.msra.mxu0 %v985
    %2353 = vmatmul.bf16.gmra.mxu0 %v2344
    %v2354 = vpop.f32.mrf.mxu0
    %v2355 = vadd.f32 0.0, %v2354
    %v2356 = vpop.f32.mrf.mxu0
    %2357 = vdwg.mxu0
    %2358 = vmatpush.bf16.msra.mxu0 %v1007
    %2359 = vmatpush.bf16.msra.mxu0 %v1004
    %2360 = vmatpush.bf16.msra.mxu0 %v1001
    %2361 = vmatpush.bf16.msra.mxu0 %v998
    %2362 = vmatpush.bf16.msra.mxu0 %v995
    %2363 = vmatpush.bf16.msra.mxu0 %v992
    %2364 = vmatpush.bf16.msra.mxu0 %v989
    %2365 = vmatpush.bf16.msra.mxu0 %v986
    %2366 = vmatmul.bf16.gmra.mxu0 %v2344
    %v2367 = vpop.f32.mrf.mxu0
    %v2368 = vadd.f32 0.0, %v2367
    %v2369 = vpop.f32.mrf.mxu0
    %2370 = vdwg.mxu0
    %2371 = vmatpush.bf16.msra.mxu0 %v1008
    %2372 = vmatpush.bf16.msra.mxu0 %v1005
    %2373 = vmatpush.bf16.msra.mxu0 %v1002
    %2374 = vmatpush.bf16.msra.mxu0 %v999
    %2375 = vmatpush.bf16.msra.mxu0 %v996
    %2376 = vmatpush.bf16.msra.mxu0 %v993
    %2377 = vmatpush.bf16.msra.mxu0 %v990
    %2378 = vmatpush.bf16.msra.mxu0 %v987
    %2379 = vmatmul.bf16.gmra.mxu0 %v2344
    %v2380 = vpop.f32.mrf.mxu0
    %v2381 = vadd.f32 0.0, %v2380
    %v2382 = vpop.f32.mrf.mxu0
    %2383 = vdwg.mxu0
    %v2384 = vadd.f32 %v533, %v2355
    %v2385 = vxor.u32 %v2384, 2147483648
    %v2386 = vmul.f32 %v2385, 1.442695
    %v2387 = vpow.pop %v2386
    %v2388 = vadd.f32 %v2387, 1.0
    %v2389 = vrcp.pop %v2388
    %v2390 = vmul.f32 %v2388, %v2389
    %v2391 = vsub.f32 1.0, %v2390
    %v2392 = vmul.f32 %v2389, %v2391
    %v2393 = vadd.f32 %v2389, %v2392
    %vm2394 = vweird.f32 %v2388
    %vm2395 = vweird.f32 %v2389
    %vm2396 = vmor %vm2394, %vm2395
    %v2397 = vsel %vm2396, %v2389, %v2393
    %v2398 = vand.u32 2147483647, %v2388
    %vm2399 = vcmp.eq.f32.partialorder %v2398, 8.507059e+37
    %v2400 = vand.u32 %v2388, 2147483648
    %v2401 = vor.u32 1.1754944e-38, %v2400
    %v2402 = vsel %vm2399, %v2401, %v2397
    %v2403 = vmul.f32 1.0, %v2402
    %v2404 = vadd.f32 %v562, %v2368
    %v2405 = vxor.u32 %v2404, 2147483648
    %v2406 = vmul.f32 %v2405, 1.442695
    %v2407 = vpow.pop %v2406
    %v2408 = vadd.f32 %v2407, 1.0
    %v2409 = vrcp.pop %v2408
    %v2410 = vmul.f32 %v2408, %v2409
    %v2411 = vsub.f32 1.0, %v2410
    %v2412 = vmul.f32 %v2409, %v2411
    %v2413 = vadd.f32 %v2409, %v2412
    %vm2414 = vweird.f32 %v2408
    %vm2415 = vweird.f32 %v2409
    %vm2416 = vmor %vm2414, %vm2415
    %v2417 = vsel %vm2416, %v2409, %v2413
    %v2418 = vand.u32 2147483647, %v2408
    %vm2419 = vcmp.eq.f32.partialorder %v2418, 8.507059e+37
    %v2420 = vand.u32 %v2408, 2147483648
    %v2421 = vor.u32 1.1754944e-38, %v2420
    %v2422 = vsel %vm2419, %v2421, %v2417
    %v2423 = vmul.f32 1.0, %v2422
    %v2424 = vadd.f32 %v2381, %v680
    %v2425 = vmul.f32 %v2403, %v2424
    %v2426 = vadd.f32 %v591, %v2425
    %v2427 = vtanh.pop %v2426
    %v2428 = vsub.f32 1.0, %v2423
    %v2429 = vmul.f32 %v2428, %v2427
    %v2430 = vmul.f32 %v2423, %v2255
    %v2431 = vadd.f32 %v2429, %v2430
    %v2432 = vsub.f32 %v2343, %v2252
    %v2433 = vmul.f32 %v1128, %v2432
    %v2434 = vadd.f32 %v2252, %v2433
    %v2435 = vsub.f32 %v2431, %v2255
    %v2436 = vmul.f32 %v1123, %v2435
    %v2437 = vadd.f32 %v2255, %v2436
    %v2438 = vld [vmem:[%s8] sm:$0xff]
    %v2439 = vld [vmem:[%s8 + $0x8] sm:$0xff]
    %v2440 = vld [vmem:[%s8 + $0x10] sm:$0xff]
    %v2441 = vld [vmem:[%s8 + $0x18] sm:$0xff]
    %v2442 = vld [vmem:[%s8 + $0x20] sm:$0xff]
    %v2443 = vld [vmem:[%s8 + $0x28] sm:$0xff]
    %v2444 = vld [vmem:[%s8 + $0x30] sm:$0xff]
    %v2445 = vld [vmem:[%s8 + $0x38] sm:$0xff]
    %v2446 = vld [vmem:[%s8 + $0x40] sm:$0xff]
    %v2447 = vld [vmem:[%s8 + $0x48] sm:$0xff]
    %v2448 = vld [vmem:[%s8 + $0x50] sm:$0xff]
    %v2449 = vld [vmem:[%s8 + $0x58] sm:$0xff]
    %v2450 = vld [vmem:[%s8 + $0x60] sm:$0xff]
    %v2451 = vld [vmem:[%s8 + $0x68] sm:$0xff]
    %v2452 = vld [vmem:[%s8 + $0x70] sm:$0xff]
    %v2453 = vld [vmem:[%s8 + $0x78] sm:$0xff]
    %v2454 = vld [vmem:[%s9] sm:$0xff]
    %v2455 = vld [vmem:[%s9 + $0x8] sm:$0xff]
    %v2456 = vld [vmem:[%s9 + $0x10] sm:$0xff]
    %v2457 = vld [vmem:[%s9 + $0x18] sm:$0xff]
    %v2458 = vld [vmem:[%s9 + $0x20] sm:$0xff]
    %v2459 = vld [vmem:[%s9 + $0x28] sm:$0xff]
    %v2460 = vld [vmem:[%s9 + $0x30] sm:$0xff]
    %v2461 = vld [vmem:[%s9 + $0x38] sm:$0xff]
    %v2462 = vld [vmem:[%s9 + $0x40] sm:$0xff]
    %v2463 = vld [vmem:[%s9 + $0x48] sm:$0xff]
    %v2464 = vld [vmem:[%s9 + $0x50] sm:$0xff]
    %v2465 = vld [vmem:[%s9 + $0x58] sm:$0xff]
    %v2466 = vld [vmem:[%s9 + $0x60] sm:$0xff]
    %v2467 = vld [vmem:[%s9 + $0x68] sm:$0xff]
    %v2468 = vld [vmem:[%s9 + $0x70] sm:$0xff]
    %v2469 = vld [vmem:[%s9 + $0x78] sm:$0xff]
    %2470 = vmatpush.msra.mxu0 %v2469
    %2471 = vmatpush.msra.mxu0 %v2468
    %2472 = vmatpush.msra.mxu0 %v2467
    %2473 = vmatpush.msra.mxu0 %v2466
    %2474 = vmatpush.msra.mxu0 %v2465
    %2475 = vmatpush.msra.mxu0 %v2464
    %2476 = vmatpush.msra.mxu0 %v2463
    %2477 = vmatpush.msra.mxu0 %v2462
    %2478 = vmatpush.msra.mxu0 %v2461
    %2479 = vmatpush.msra.mxu0 %v2460
    %2480 = vmatpush.msra.mxu0 %v2459
    %2481 = vmatpush.msra.mxu0 %v2458
    %2482 = vmatpush.msra.mxu0 %v2457
    %2483 = vmatpush.msra.mxu0 %v2456
    %2484 = vmatpush.msra.mxu0 %v2455
    %2485 = vmatpush.msra.mxu0 %v2454
    %2486 = vmatmul.f32.gmra.mxu0 %v2437
    %v2487 = vpop.f32.mrf.mxu0
    %v2488 = vadd.f32 0.0, %v2487
    %2489 = vdwg.mxu0
    %2490 = vmatpush.msra.mxu0 %v2453
    %2491 = vmatpush.msra.mxu0 %v2452
    %2492 = vmatpush.msra.mxu0 %v2451
    %2493 = vmatpush.msra.mxu0 %v2450
    %2494 = vmatpush.msra.mxu0 %v2449
    %2495 = vmatpush.msra.mxu0 %v2448
    %2496 = vmatpush.msra.mxu0 %v2447
    %2497 = vmatpush.msra.mxu0 %v2446
    %2498 = vmatpush.msra.mxu0 %v2445
    %2499 = vmatpush.msra.mxu0 %v2444
    %2500 = vmatpush.msra.mxu0 %v2443
    %2501 = vmatpush.msra.mxu0 %v2442
    %2502 = vmatpush.msra.mxu0 %v2441
    %2503 = vmatpush.msra.mxu0 %v2440
    %2504 = vmatpush.msra.mxu0 %v2439
    %2505 = vmatpush.msra.mxu0 %v2438
    %2506 = vmatmul.f32.gmra.mxu0 %v2434
    %v2507 = vpop.f32.mrf.mxu0
    %v2508 = vadd.f32 %v2488, %v2507
    %2509 = vdwg.mxu0
    %v2510 = vld [vmem:[%s10] sm:$0x1]
    %v2512 = vperm.slane %v2510, 0
    %v2514 = vadd.f32 %v2508, %v2512
    %vm2515 = vcmask 39936
    %v2516 = vsel %vm2515, %v2514, -inf
    %2517 = vmax.xlane.f32.xlu0 %v2516
    %v2518 = vpop.xlane.xlu0 %2517
    %v2519 = vsub.f32 %v2514, %v2518
    %v2520 = vmul.f32 %v2519, 1.442695
    %v2521 = vpow.pop %v2520
    %v2522 = vsel %vm2515, %v2521, 0.0
    %2523 = vadd.xlane.f32.xlu0 %v2522
    %v2524 = vpop.xlane.xlu0 %2523
    %v2525 = vlog2.pop %v2524
    %v2526 = vmul.f32 %v2525, 0.6931472
    %v2527 = vadd.f32 %v2518, %v2526
    %v2528 = vsub.f32 %v2514, %v2527
    %2529 = vst.msk [vmem:[#allocation7] sm:$0xff] %vm2515, %v2528
    // Predicated region
    $region54: #{tpu_custom_call.1} parent=1 // pred_check
      _
    $region55: #{tpu_custom_call.1} parent=1 // pred_check_branch
      %2531 = sbr.rel (0) target = $region57
    $region56: #{tpu_custom_call.1} parent=1 // pred_region
      %2533 = vsyncadd [#allocation4], 0
      %s2535 = sshll.u32 [#allocation7], 4
      %s2536 = int_to_ptr.vmem [resolvable:$true] %s2535
      %s2537 = sshll.u32 %s11, 4
      %s2538 = int_to_ptr.hbm [resolvable:$true] %s2537
      %2540 = dma.vmem_to_hbm [thread:$0]  %s2536, 128, %s2538, [#allocation4]
    $region57: #{tpu_custom_call.1} parent=1 // pred_fallthru
      _
    // Predicated region
    $region58: #{tpu_custom_call.1} parent=1 // pred_check
      _
    $region59: #{tpu_custom_call.1} parent=1 // pred_check_branch
      %2542 = sbr.rel (0) target = $region61
    $region60: #{tpu_custom_call.1} parent=1 // pred_region
      %2544 = dma.done [#allocation4], 128
    $region61: #{tpu_custom_call.1} parent=1 // pred_fallthru
      _
    %2545 = vsyncpa [#allocation3], 1
    %2546 = vsyncpa [#allocation6], 1
    %2547 = vsyncpa [#allocation4], 1

</llo_original>
